<compile_context>
chip_gen: v5e
topology: v5e:2x2
jax: 0.10.0
libtpu: 0.0.40
codegen_flags: <defaults>
</compile_context>

<pallas_src>
import functools

import jax
import jax.numpy as jnp
import numpy as np
from jax import lax
from jax.experimental import pallas as pl
from jax.experimental.pallas import tpu as pltpu

EPS = 1e-5


# ------------------------------ small helpers -------------------------------

def _cdiv(a, b):
    return -(-a // b)


def _round_up(a, m):
    return _cdiv(a, m) * m


def _chip_vmem_bytes():
    """Best-effort physical-VMEM query; None if the API is unavailable."""
    try:
        info = pltpu.get_tpu_info()
    except Exception:
        return None
    for attr in ("vmem_capacity_bytes", "vmem_bytes", "vmem_size_bytes"):
        v = getattr(info, attr, None)
        if v is None:
            continue
        try:
            v = int(v)
        except (TypeError, ValueError):
            continue
        if v > 0:
            return v
    return None


def _chip_defaults():
    """Generation-specific tile caps / scoped-VMEM budget.

    v5e/v6e: 128 MiB physical VMEM -> bigger tiles and a 96 MiB budget (fewer
    ~0.35us grid steps, smaller 3x3 halo fraction, better MXU M-fill).
    v7x (or unknown): 64 MiB per TensorCore -> keep 48 MiB / smaller tiles so
    both megacore TCs can each run a tile (grid axes are "parallel").
    """
    vmem = _chip_vmem_bytes()
    if vmem is not None and vmem >= 100 * (1 << 20):
        return dict(vmem_limit=96 * (1 << 20), tm_cap=1024, th_cap=16)
    return dict(vmem_limit=48 * (1 << 20), tm_cap=512, th_cap=8)


_CHIP_CFG = _chip_defaults()


def _tile_rows(total, cap, multiple=1):
    """Tile size <= cap (full extent only if it already fits); multiple of
    `multiple` when tiled so BlockSpec second-minor divisibility holds.
    Non-dividing totals are handled by a cdiv grid + masked tail, never by
    falling back to the full extent."""
    if total <= cap:
        return total
    t = (cap // multiple) * multiple
    return max(t, multiple)


# ----------------------------- Pallas kernels ------------------------------

def _channel_stats_kernel(x_ref, ps_ref, pq_ref, *, m_total, has_tail):
    # Single fused pass: per-tile channel sum and sum-of-squares.
    x = x_ref[...].astype(jnp.float32)
    if has_tail:
        tm = x_ref.shape[0]
        rows = lax.broadcasted_iota(jnp.int32, (tm, 1), 0) + pl.program_id(0) * tm
        x = jnp.where(rows < m_total, x, 0.0)
    ps_ref[...] = jnp.sum(x, axis=0).reshape(1, 1, -1)
    pq_ref[...] = jnp.sum(x * x, axis=0).reshape(1, 1, -1)


def _bn_relu_pw_stats_kernel(x_ref, scale_ref, shift_ref, w_ref, b_ref,
                             o_ref, ps_ref, pq_ref, *, compute_dtype,
                             m_total, has_tail):
    # x: (TM, Cin); scale/shift: (1, Cin); w: (Cin, Cout) pre-cast to
    # compute_dtype; b: (1, Cout) f32.
    x = x_ref[...].astype(jnp.float32)
    y = jnp.maximum(x * scale_ref[...] + shift_ref[...], 0.0)
    o = jnp.dot(y.astype(compute_dtype), w_ref[...],
                preferred_element_type=jnp.float32) + b_ref[...]
    o_c = o.astype(o_ref.dtype)
    o_ref[...] = o_c
    # Fused per-tile channel stats for the next BatchNorm (no extra HBM pass).
    # Stats are taken from the stored (possibly bf16-rounded) activation so
    # they match what the next layer actually reads.
    os = o_c.astype(jnp.float32)
    if has_tail:
        tm = x_ref.shape[0]
        rows = lax.broadcasted_iota(jnp.int32, (tm, 1), 0) + pl.program_id(0) * tm
        os = jnp.where(rows < m_total, os, 0.0)
    ps_ref[...] = jnp.sum(os, axis=0).reshape(1, 1, -1)
    pq_ref[...] = jnp.sum(os * os, axis=0).reshape(1, 1, -1)


def _bn_relu_pw_res_kernel(x_ref, scale_ref, shift_ref, w_ref, b_ref, res_ref,
                           o_ref, *, compute_dtype):
    # Same as above (no stats), plus fused residual add (res: (TM, Cout)).
    x = x_ref[...].astype(jnp.float32)
    y = jnp.maximum(x * scale_ref[...] + shift_ref[...], 0.0)
    o = jnp.dot(y.astype(compute_dtype), w_ref[...],
                preferred_element_type=jnp.float32) + b_ref[...]
    o_ref[...] = (o + res_ref[...].astype(jnp.float32)).astype(o_ref.dtype)


def _bn_relu_conv3_kernel(xc_ref, xa_ref, xb_ref, scale_ref, shift_ref,
                          w_ref, b_ref, o_ref, ps_ref, pq_ref,
                          pad_ref, acc_ref, *, compute_dtype, h_total,
                          has_tail):
    # xc: (1, TH, W, C) centre row tile; xa/xb: (1, 1, W, C) halo rows
    # (index clamped at image borders, masked to zero here);
    # w: (3, 3, C, Cout) pre-cast to compute_dtype; b: (1, Cout) f32;
    # pad scratch: (TH+2, Wp, C) with Wp = round_up(W+2, 8);
    # acc scratch: (TH*W, Cout) f32.
    TH, W, C = xc_ref.shape[1], xc_ref.shape[2], xc_ref.shape[3]
    Cout = o_ref.shape[3]
    Wp = pad_ref.shape[1]
    t = pl.program_id(1)
    n_t = pl.num_programs(1)

    scale = scale_ref[...]            # (1, C)
    shift = shift_ref[...]

    def bn_relu(v):
        return jnp.maximum(v.astype(jnp.float32) * scale + shift, 0.0)

    yc = bn_relu(xc_ref[0])                                   # (TH, W, C)
    ya = bn_relu(xa_ref[...].reshape(1, W, C))                # row above
    yb = bn_relu(xb_ref[...].reshape(1, W, C))                # row below
    ya = jnp.where(t > 0, ya, 0.0)                            # top image edge
    yb = jnp.where(t < n_t - 1, yb, 0.0)                      # bottom edge
    if has_tail:
        # Zero garbage rows of a partial tail tile (also provides the correct
        # zero "below" neighbour for the last valid image row).
        rows = lax.broadcasted_iota(jnp.int32, (TH, 1, 1), 0) + t * TH
        yc = jnp.where(rows < h_total, yc, 0.0)

    # Assemble the zero-padded activation tile.  Only the border columns /
    # halo rows are written with zeros (not the whole scratch).
    pad_ref[1:TH + 1, 1:W + 1, :] = yc
    pad_ref[0:1, 1:W + 1, :] = ya
    pad_ref[TH + 1:TH + 2, 1:W + 1, :] = yb
    pad_ref[:, 0:1, :] = jnp.zeros((TH + 2, 1, C), jnp.float32)
    pad_ref[:, W + 1:Wp, :] = jnp.zeros((TH + 2, Wp - W - 1, C), jnp.float32)

    p = pad_ref[...]                                # (TH+2, Wp, C)
    w = w_ref[...]                                  # already compute_dtype

    # TODO(synk): for small C a single K=9C im2col dot would fill the MXU
    # better; not done to avoid non-128-aligned minor-dim concatenation.
    # dw (sublane shift) hoisted out of the dh loop: 3 shifted views, dh is a
    # free major-axis slice.  Accumulation lives in an f32 VMEM scratch.
    first = True
    for dw in range(3):
        q = p[:, dw:dw + W, :]                      # (TH+2, W, C)
        for dh in range(3):
            lhs = q[dh:dh + TH].reshape(TH * W, C).astype(compute_dtype)
            part = jnp.dot(lhs, w[dh, dw], preferred_element_type=jnp.float32)
            if first:
                acc_ref[...] = part
                first = False
            else:
                acc_ref[...] += part

    acc = (acc_ref[...] + b_ref[...]).reshape(TH, W, Cout)   # bias once
    o_c = acc.astype(o_ref.dtype)
    o_ref[...] = o_c.reshape(1, TH, W, Cout)

    os = o_c.astype(jnp.float32)
    if has_tail:
        rows = lax.broadcasted_iota(jnp.int32, (TH, 1, 1), 0) + t * TH
        os = jnp.where(rows < h_total, os, 0.0)
    ps_ref[...] = jnp.sum(os, axis=(0, 1)).reshape(1, 1, 1, Cout)
    pq_ref[...] = jnp.sum(os * os, axis=(0, 1)).reshape(1, 1, 1, Cout)


# ------------------------------ JAX wrappers --------------------------------

def channel_stats(x2d, *, tm_cap, vmem_limit):
    """Single fused Pallas pass: per-channel sum and sum-of-squares of (M, C)."""
    M, C = x2d.shape
    TM = _tile_rows(M, tm_cap, 8)
    n_tiles = _cdiv(M, TM)
    has_tail = (M % TM) != 0

    ps, pq = pl.pallas_call(
        functools.partial(_channel_stats_kernel, m_total=M, has_tail=has_tail),
        out_shape=(jax.ShapeDtypeStruct((n_tiles, 1, C), jnp.float32),
                   jax.ShapeDtypeStruct((n_tiles, 1, C), jnp.float32)),
        grid=(n_tiles,),
        in_specs=[pl.BlockSpec((TM, C), lambda i: (i, 0))],
        out_specs=(pl.BlockSpec((1, 1, C), lambda i: (i, 0, 0)),
                   pl.BlockSpec((1, 1, C), lambda i: (i, 0, 0))),
        compiler_params=pltpu.CompilerParams(
            dimension_semantics=("parallel",),
            vmem_limit_bytes=vmem_limit),
        cost_estimate=pl.CostEstimate(
            flops=3 * M * C, transcendentals=0,
            bytes_accessed=x2d.dtype.itemsize * M * C),
    )(x2d)
    return jnp.sum(ps, axis=(0, 1)), jnp.sum(pq, axis=(0, 1))


def fused_block_1x1(x_nhwc, scale, shift, w_hwio, bias, residual_nhwc=None, *,
                    compute_dtype=jnp.float32, out_dtype=jnp.float32,
                    tm_cap=512, vmem_limit=None):
    """ResBlock with a 1x1 conv: BN(scale/shift) -> ReLU -> conv (+ residual).

    Returns `out` when residual_nhwc is given (block3), otherwise
    `(out, channel_sum, channel_sumsq)` of the output so the caller can fold
    the next BatchNorm without re-reading the activations from HBM (block1).
    """
    if vmem_limit is None:
        vmem_limit = _CHIP_CFG["vmem_limit"]
    N, H, W, Cin = x_nhwc.shape
    Cout = w_hwio.shape[-1]
    M = N * H * W
    TM = _tile_rows(M, tm_cap, 8)
    n_tiles = _cdiv(M, TM)
    has_tail = (M % TM) != 0

    x2d = x_nhwc.reshape(M, Cin)
    # Weight pre-cast outside the kernel: no per-grid-step cast, and bf16
    # weights halve the weight HBM traffic / VMEM footprint.
    w2d = w_hwio.reshape(Cin, Cout).astype(compute_dtype)
    b2d = bias.reshape(1, Cout).astype(jnp.float32)
    sc2 = scale.reshape(1, Cin).astype(jnp.float32)
    sh2 = shift.reshape(1, Cin).astype(jnp.float32)

    # TODO(synk): w2d/b2d/sc2/sh2 are grid-invariant; pipeline_mode=
    # pl.Buffered(1) would single-buffer them and reclaim VMEM on v7x.
    in_specs = [
        pl.BlockSpec((TM, Cin), lambda i: (i, 0)),
        pl.BlockSpec((1, Cin), lambda i: (0, 0)),
        pl.BlockSpec((1, Cin), lambda i: (0, 0)),
        pl.BlockSpec((Cin, Cout), lambda i: (0, 0)),
        pl.BlockSpec((1, Cout), lambda i: (0, 0)),
    ]
    args = [x2d, sc2, sh2, w2d, b2d]

    flops = 2 * M * Cin * Cout
    bytes_accessed = (x2d.dtype.itemsize * M * Cin
                      + w2d.dtype.itemsize * Cin * Cout
                      + np.dtype(out_dtype).itemsize * M * Cout)

    if residual_nhwc is not None:
        in_specs.append(pl.BlockSpec((TM, Cout), lambda i: (i, 0)))
        args.append(residual_nhwc.reshape(M, Cout))
        bytes_accessed += residual_nhwc.dtype.itemsize * M * Cout
        out = pl.pallas_call(
            functools.partial(_bn_relu_pw_res_kernel,
                              compute_dtype=compute_dtype),
            out_shape=jax.ShapeDtypeStruct((M, Cout), out_dtype),
            grid=(n_tiles,),
            in_specs=in_specs,
            out_specs=pl.BlockSpec((TM, Cout), lambda i: (i, 0)),
            compiler_params=pltpu.CompilerParams(
                dimension_semantics=("parallel",),
                vmem_limit_bytes=vmem_limit),
            cost_estimate=pl.CostEstimate(flops=flops, transcendentals=0,
                                          bytes_accessed=bytes_accessed),
        )(*args)
        return out.reshape(N, H, W, Cout)

    # TODO(synk): when Cout < 128 a lane-dense packed output (M//k, k*Cout)
    # would avoid masked partial stores (biggest lever for the mid<128 stages).
    out, psum, psq = pl.pallas_call(
        functools.partial(_bn_relu_pw_stats_kernel,
                          compute_dtype=compute_dtype,
                          m_total=M, has_tail=has_tail),
        out_shape=(
            jax.ShapeDtypeStruct((M, Cout), out_dtype),
            jax.ShapeDtypeStruct((n_tiles, 1, Cout), jnp.float32),
            jax.ShapeDtypeStruct((n_tiles, 1, Cout), jnp.float32),
        ),
        grid=(n_tiles,),
        in_specs=in_specs,
        out_specs=(
            pl.BlockSpec((TM, Cout), lambda i: (i, 0)),
            pl.BlockSpec((1, 1, Cout), lambda i: (i, 0, 0)),
            pl.BlockSpec((1, 1, Cout), lambda i: (i, 0, 0)),
        ),
        compiler_params=pltpu.CompilerParams(
            dimension_semantics=("parallel",),
            vmem_limit_bytes=vmem_limit),
        cost_estimate=pl.CostEstimate(flops=flops, transcendentals=0,
                                      bytes_accessed=bytes_accessed),
    )(*args)
    ch_sum = jnp.sum(psum, axis=(0, 1))
    ch_sumsq = jnp.sum(psq, axis=(0, 1))
    return out.reshape(N, H, W, Cout), ch_sum, ch_sumsq


def fused_block_3x3(x_nhwc, scale, shift, w_hwio, bias, *,
                    compute_dtype=jnp.float32, out_dtype=jnp.float32,
                    th_cap=8, vmem_limit=None):
    """ResBlock with a 3x3 conv (pad=1, stride=1): BN -> ReLU -> conv3x3.

    Tiled over (batch, H-row tiles); the 1-row halo comes from two extra
    clamped row views of the input (masked at the image borders).  Also
    returns fused channel sum / sum-of-squares of the output for the next BN.
    """
    if vmem_limit is None:
        vmem_limit = _CHIP_CFG["vmem_limit"]
    N, H, W, C = x_nhwc.shape
    Cout = w_hwio.shape[-1]
    TH = _tile_rows(H, th_cap, 1)
    n_ht = _cdiv(H, TH)
    has_tail = (H % TH) != 0
    Wp = _round_up(W + 2, 8)          # sublane-aligned pad scratch

    sc2 = scale.reshape(1, C).astype(jnp.float32)
    sh2 = shift.reshape(1, C).astype(jnp.float32)
    b2d = bias.reshape(1, Cout).astype(jnp.float32)
    w_c = w_hwio.astype(compute_dtype)   # pre-cast outside the kernel

    flops = 2 * N * H * W * 9 * C * Cout
    bytes_accessed = (x_nhwc.dtype.itemsize * N * (H + 2 * n_ht) * W * C
                      + w_c.dtype.itemsize * 9 * C * Cout
                      + np.dtype(out_dtype).itemsize * N * H * W * Cout)

    out, psum, psq = pl.pallas_call(
        functools.partial(_bn_relu_conv3_kernel, compute_dtype=compute_dtype,
                          h_total=H, has_tail=has_tail),
        out_shape=(
            jax.ShapeDtypeStruct((N, H, W, Cout), out_dtype),
            jax.ShapeDtypeStruct((N, n_ht, 1, Cout), jnp.float32),
            jax.ShapeDtypeStruct((N, n_ht, 1, Cout), jnp.float32),
        ),
        grid=(N, n_ht),
        in_specs=[
            # centre rows of this tile
            pl.BlockSpec((1, TH, W, C), lambda n, t: (n, t, 0, 0)),
            # halo row above / below (clamped; masked in-kernel at edges)
            pl.BlockSpec((1, 1, W, C),
                         lambda n, t: (n, jnp.maximum(t * TH - 1, 0), 0, 0)),
            pl.BlockSpec((1, 1, W, C),
                         lambda n, t: (n, jnp.minimum(t * TH + TH, H - 1), 0, 0)),
            pl.BlockSpec((1, C), lambda n, t: (0, 0)),
            pl.BlockSpec((1, C), lambda n, t: (0, 0)),
            pl.BlockSpec((3, 3, C, Cout), lambda n, t: (0, 0, 0, 0)),
            pl.BlockSpec((1, Cout), lambda n, t: (0, 0)),
        ],
        out_specs=(
            pl.BlockSpec((1, TH, W, Cout), lambda n, t: (n, t, 0, 0)),
            pl.BlockSpec((1, 1, 1, Cout), lambda n, t: (n, t, 0, 0)),
            pl.BlockSpec((1, 1, 1, Cout), lambda n, t: (n, t, 0, 0)),
        ),
        scratch_shapes=[pltpu.VMEM((TH + 2, Wp, C), jnp.float32),
                        pltpu.VMEM((TH * W, Cout), jnp.float32)],
        compiler_params=pltpu.CompilerParams(
            dimension_semantics=("parallel", "parallel"),
            vmem_limit_bytes=vmem_limit),
        cost_estimate=pl.CostEstimate(flops=flops, transcendentals=0,
                                      bytes_accessed=bytes_accessed),
    )(x_nhwc, x_nhwc, x_nhwc, sc2, sh2, w_c, b2d)

    ch_sum = jnp.sum(psum, axis=(0, 1, 2))
    ch_sumsq = jnp.sum(psq, axis=(0, 1, 2))
    return out, ch_sum, ch_sumsq


def _fold_bn(mean, var, gamma, beta):
    """Fold BatchNorm2d (training-mode batch stats) into scale/shift."""
    scale = gamma * lax.rsqrt(var + EPS)
    shift = beta - mean * scale
    return scale.astype(jnp.float32), shift.astype(jnp.float32)


def bottleneck_forward(x_nchw, p, *, compute_dtype=jnp.float32,
                       tm_cap=None, th_cap=None, vmem_limit=None):
    """Bottleneck.forward: block1(1x1) -> block2(3x3) -> block3(1x1) + identity."""
    tm_cap = _CHIP_CFG["tm_cap"] if tm_cap is None else tm_cap
    th_cap = _CHIP_CFG["th_cap"] if th_cap is None else th_cap
    vmem_limit = _CHIP_CFG["vmem_limit"] if vmem_limit is None else vmem_limit

    x = jnp.transpose(x_nchw, (0, 2, 3, 1)).astype(jnp.float32)   # NCHW -> NHWC
    N, H, W, Cin = x.shape
    cnt = float(N * H * W)
    # bf16 intermediates halve activation HBM traffic on every generation
    # (v5e included: its MXU takes bf16 operands; BN/ReLU math stays f32).
    act_dtype = compute_dtype

    # BN1 stats: one fused Pallas pass (sum + sumsq) instead of mean+var reads.
    x_sum, x_sq = channel_stats(x.reshape(N * H * W, Cin),
                                tm_cap=tm_cap, vmem_limit=vmem_limit)
    m1 = x_sum / cnt
    v1 = jnp.maximum(x_sq / cnt - m1 * m1, 0.0)
    s1, t1 = _fold_bn(m1, v1, p['g1'], p['b1'])
    h1, h1_sum, h1_sq = fused_block_1x1(
        x, s1, t1, p['w1'], p['c1'],
        compute_dtype=compute_dtype, out_dtype=act_dtype,
        tm_cap=tm_cap, vmem_limit=vmem_limit)

    # BN2 stats come fused out of block1's kernel (no extra HBM pass over h1).
    m2 = h1_sum / cnt
    v2 = jnp.maximum(h1_sq / cnt - m2 * m2, 0.0)
    s2, t2 = _fold_bn(m2, v2, p['g2'], p['b2'])
    h2, h2_sum, h2_sq = fused_block_3x3(
        h1, s2, t2, p['w2'], p['c2'],
        compute_dtype=compute_dtype, out_dtype=act_dtype,
        th_cap=th_cap, vmem_limit=vmem_limit)

    # BN3 stats come fused out of block2's kernel.
    m3 = h2_sum / cnt
    v3 = jnp.maximum(h2_sq / cnt - m3 * m3, 0.0)
    s3, t3 = _fold_bn(m3, v3, p['g3'], p['b3'])
    out = fused_block_1x1(
        h2, s3, t3, p['w3'], p['c3'], residual_nhwc=x,
        compute_dtype=compute_dtype, out_dtype=jnp.float32,
        tm_cap=tm_cap, vmem_limit=vmem_limit)

    return jnp.transpose(out, (0, 3, 1, 2))                       # NHWC -> NCHW


# ------------------------------ pure-JAX ref --------------------------------

def ref_bottleneck(x_nchw, p):
    x = jnp.transpose(x_nchw, (0, 2, 3, 1)).astype(jnp.float32)

    def bn_relu(h, g, b):
        m = jnp.mean(h, axis=(0, 1, 2))
        v = jnp.var(h, axis=(0, 1, 2))
        return jnp.maximum((h - m) * lax.rsqrt(v + EPS) * g + b, 0.0)

    def conv(h, w, c, pad):
        return lax.conv_general_dilated(
            h, w, (1, 1), pad,
            dimension_numbers=('NHWC', 'HWIO', 'NHWC')) + c

    h = conv(bn_relu(x, p['g1'], p['b1']), p['w1'], p['c1'], 'VALID')
    h = conv(bn_relu(h, p['g2'], p['b2']), p['w2'], p['c2'], [(1, 1), (1, 1)])
    h = conv(bn_relu(h, p['g3'], p['b3']), p['w3'], p['c3'], 'VALID')
    return jnp.transpose(h + x, (0, 3, 1, 2))


# ---------------------------------- main ------------------------------------

if __name__ == "__main__":
    key = jax.random.PRNGKey(0)
    ks = jax.random.split(key, 13)

    N, C, H, W = 2, 32, 16, 16      # in_chans == out_chans (residual add)
    mid = C // 4                    # Bottleneck expansion path

    x = jax.random.normal(ks[0], (N, C, H, W), jnp.float32)

    params = dict(
        # block1: BN(C) + Conv1x1(C -> mid)
        g1=1.0 + 0.1 * jax.random.normal(ks[1], (C,), jnp.float32),
        b1=0.1 * jax.random.normal(ks[2], (C,), jnp.float32),
        w1=0.3 * jax.random.normal(ks[3], (1, 1, C, mid), jnp.float32),
        c1=0.05 * jax.random.normal(ks[4], (mid,), jnp.float32),
        # block2: BN(mid) + Conv3x3(mid -> mid, pad=1)
        g2=1.0 + 0.1 * jax.random.normal(ks[5], (mid,), jnp.float32),
        b2=0.1 * jax.random.normal(ks[6], (mid,), jnp.float32),
        w2=0.3 * jax.random.normal(ks[7], (3, 3, mid, mid), jnp.float32),
        c2=0.05 * jax.random.normal(ks[8], (mid,), jnp.float32),
        # block3: BN(mid) + Conv1x1(mid -> C)
        g3=1.0 + 0.1 * jax.random.normal(ks[9], (mid,), jnp.float32),
        b3=0.1 * jax.random.normal(ks[10], (mid,), jnp.float32),
        w3=0.3 * jax.random.normal(ks[11], (1, 1, mid, C), jnp.float32),
        c3=0.05 * jax.random.normal(ks[12], (C,), jnp.float32),
    )

    ref = jax.block_until_ready(ref_bottleneck(x, params))

    # 1) f32, tile caps that divide the small test shapes: multi-tile grids,
    #    halo masking and fused stats -- strict check.
    fwd_f32 = jax.jit(functools.partial(bottleneck_forward,
                                        compute_dtype=jnp.float32,
                                        tm_cap=128, th_cap=8))
    out = jax.block_until_ready(fwd_f32(x, params))
    assert out.shape == x.shape, (out.shape, x.shape)
    max_err = float(jnp.max(jnp.abs(out - ref)))
    assert jnp.allclose(out, ref, rtol=1e-3, atol=1e-3), max_err

    # 2) f32, tile caps that do NOT divide M / H: exercises the cdiv grid +
    #    masked-tail robustness path -- strict check.
    fwd_tail = jax.jit(functools.partial(bottleneck_forward,
                                         compute_dtype=jnp.float32,
                                         tm_cap=192, th_cap=5))
    out_tail = jax.block_until_ready(fwd_tail(x, params))
    max_err_tail = float(jnp.max(jnp.abs(out_tail - ref)))
    assert jnp.allclose(out_tail, ref, rtol=1e-3, atol=1e-3), max_err_tail

    # 3) bf16 MXU operands + bf16 intermediate activations (all generations,
    #    v5e included); loose tolerance accounts for bf16 rounding only.
    fwd_bf16 = jax.jit(functools.partial(bottleneck_forward,
                                         compute_dtype=jnp.bfloat16,
                                         tm_cap=128, th_cap=8))
    out_bf16 = jax.block_until_ready(fwd_bf16(x, params))
    max_err_bf16 = float(jnp.max(jnp.abs(out_bf16 - ref)))
    assert jnp.allclose(out_bf16, ref, rtol=2e-1, atol=2e-1), max_err_bf16

    print("KERNEL_OK")
</pallas_src>

<mosaic_0001>
module attributes {stable_mosaic.version = 11 : i64} {
  func.func @_channel_stats_kernel(%arg0: i32, %arg1: memref<128x32xf32, #tpu.memory_space<vmem>>, %arg2: memref<1x1x32xf32, #tpu.memory_space<vmem>>, %arg3: memref<1x1x32xf32, #tpu.memory_space<vmem>>) attributes {dimension_semantics = [#tpu.dimension_semantics<parallel>], iteration_bounds = array<i64: 4>, scalar_prefetch = 0 : i64, scratch_operands = 0 : i64, tpu.core_type = #tpu.core_type<tc>, window_params = [{transform_indices = @transform_0, window_bounds = array<i64: 128, 32>}, {transform_indices = @transform_1, window_bounds = array<i64: 1, 1, 32>}, {transform_indices = @transform_2, window_bounds = array<i64: 1, 1, 32>}]} {
    %c0 = arith.constant 0 : index
    %c0_0 = arith.constant 0 : index
    %0 = vector.load %arg1[%c0, %c0_0] : memref<128x32xf32, #tpu.memory_space<vmem>>, vector<128x32xf32>
    %cst = arith.constant dense<0.000000e+00> : vector<32xf32>
    %1 = vector.multi_reduction <add>, %0, %cst [0] : vector<128x32xf32> to vector<32xf32>
    %2 = vector.shape_cast %1 : vector<32xf32> to vector<1x1x32xf32>
    %c0_1 = arith.constant 0 : index
    %c0_2 = arith.constant 0 : index
    %c0_3 = arith.constant 0 : index
    %3 = vector.load %arg2[%c0_1, %c0_2, %c0_3] : memref<1x1x32xf32, #tpu.memory_space<vmem>>, vector<1x1x32xf32>
    tpu.vector_store %arg2[%c0_1, %c0_2, %c0_3], %2 {strides = array<i32>} : memref<1x1x32xf32, #tpu.memory_space<vmem>>, vector<1x1x32xf32>,
    %4 = arith.mulf %0, %0 : vector<128x32xf32>
    %cst_4 = arith.constant dense<0.000000e+00> : vector<32xf32>
    %5 = vector.multi_reduction <add>, %4, %cst_4 [0] : vector<128x32xf32> to vector<32xf32>
    %6 = vector.shape_cast %5 : vector<32xf32> to vector<1x1x32xf32>
    %c0_5 = arith.constant 0 : index
    %c0_6 = arith.constant 0 : index
    %c0_7 = arith.constant 0 : index
    %7 = vector.load %arg3[%c0_5, %c0_6, %c0_7] : memref<1x1x32xf32, #tpu.memory_space<vmem>>, vector<1x1x32xf32>
    tpu.vector_store %arg3[%c0_5, %c0_6, %c0_7], %6 {strides = array<i32>} : memref<1x1x32xf32, #tpu.memory_space<vmem>>, vector<1x1x32xf32>,
    return
  }
  func.func @transform_0(%arg0: i32) -> (i32, i32) {
    %c0_i32 = arith.constant 0 : i32
    %c0_i32_0 = arith.constant 0 : i32
    return %arg0, %c0_i32 : i32, i32
  }
  func.func @transform_1(%arg0: i32) -> (i32, i32, i32) {
    %c0_i32 = arith.constant 0 : i32
    %c0_i32_0 = arith.constant 0 : i32
    %c0_i32_1 = arith.constant 0 : i32
    return %arg0, %c0_i32, %c0_i32_0 : i32, i32, i32
  }
  func.func @transform_2(%arg0: i32) -> (i32, i32, i32) {
    %c0_i32 = arith.constant 0 : i32
    %c0_i32_0 = arith.constant 0 : i32
    %c0_i32_1 = arith.constant 0 : i32
    return %arg0, %c0_i32, %c0_i32_0 : i32, i32, i32
  }
}

module attributes {stable_mosaic.version = 11 : i64} {
  func.func @_bn_relu_pw_stats_kernel(%arg0: i32, %arg1: memref<128x32xf32, #tpu.memory_space<vmem>>, %arg2: memref<1x32xf32, #tpu.memory_space<vmem>>, %arg3: memref<1x32xf32, #tpu.memory_space<vmem>>, %arg4: memref<32x8xf32, #tpu.memory_space<vmem>>, %arg5: memref<1x8xf32, #tpu.memory_space<vmem>>, %arg6: memref<128x8xf32, #tpu.memory_space<vmem>>, %arg7: memref<1x1x8xf32, #tpu.memory_space<vmem>>, %arg8: memref<1x1x8xf32, #tpu.memory_space<vmem>>) attributes {dimension_semantics = [#tpu.dimension_semantics<parallel>], iteration_bounds = array<i64: 4>, scalar_prefetch = 0 : i64, scratch_operands = 0 : i64, tpu.core_type = #tpu.core_type<tc>, window_params = [{transform_indices = @transform_0, window_bounds = array<i64: 128, 32>}, {pipeline_mode = #tpu.pipeline_mode<synchronous>, transform_indices = @transform_1, window_bounds = array<i64: 1, 32>}, {pipeline_mode = #tpu.pipeline_mode<synchronous>, transform_indices = @transform_2, window_bounds = array<i64: 1, 32>}, {pipeline_mode = #tpu.pipeline_mode<synchronous>, transform_indices = @transform_3, window_bounds = array<i64: 32, 8>}, {pipeline_mode = #tpu.pipeline_mode<synchronous>, transform_indices = @transform_4, window_bounds = array<i64: 1, 8>}, {transform_indices = @transform_5, window_bounds = array<i64: 128, 8>}, {transform_indices = @transform_6, window_bounds = array<i64: 1, 1, 8>}, {transform_indices = @transform_7, window_bounds = array<i64: 1, 1, 8>}]} {
    %c0 = arith.constant 0 : index
    %c0_0 = arith.constant 0 : index
    %0 = vector.load %arg1[%c0, %c0_0] : memref<128x32xf32, #tpu.memory_space<vmem>>, vector<128x32xf32>
    %c0_1 = arith.constant 0 : index
    %c0_2 = arith.constant 0 : index
    %1 = vector.load %arg2[%c0_1, %c0_2] : memref<1x32xf32, #tpu.memory_space<vmem>>, vector<1x32xf32>
    %2 = vector.broadcast %1 : vector<1x32xf32> to vector<128x32xf32>
    %3 = arith.mulf %0, %2 : vector<128x32xf32>
    %c0_3 = arith.constant 0 : index
    %c0_4 = arith.constant 0 : index
    %4 = vector.load %arg3[%c0_3, %c0_4] : memref<1x32xf32, #tpu.memory_space<vmem>>, vector<1x32xf32>
    %5 = vector.broadcast %4 : vector<1x32xf32> to vector<128x32xf32>
    %6 = arith.addf %3, %5 : vector<128x32xf32>
    %cst = arith.constant 0.000000e+00 : f32
    %7 = vector.broadcast %cst : f32 to vector<128x32xf32>
    %8 = arith.maximumf %6, %7 : vector<128x32xf32>
    %c0_5 = arith.constant 0 : index
    %c0_6 = arith.constant 0 : index
    %9 = vector.load %arg4[%c0_5, %c0_6] : memref<32x8xf32, #tpu.memory_space<vmem>>, vector<32x8xf32>
    %cst_7 = arith.constant dense<0.000000e+00> : vector<128x8xf32>
    %10 = tpu.matmul %8, %9, %cst_7 {dimension_numbers = #tpu.dot_dimension_numbers<[1], [0], [0], [1], [0, 0, 1, 1], [], []>} : vector<128x32xf32>, vector<32x8xf32>, vector<128x8xf32> -> vector<128x8xf32>
    %c0_8 = arith.constant 0 : index
    %c0_9 = arith.constant 0 : index
    %11 = vector.load %arg5[%c0_8, %c0_9] : memref<1x8xf32, #tpu.memory_space<vmem>>, vector<1x8xf32>
    %12 = vector.broadcast %11 : vector<1x8xf32> to vector<128x8xf32>
    %13 = arith.addf %10, %12 : vector<128x8xf32>
    %c0_10 = arith.constant 0 : index
    %c0_11 = arith.constant 0 : index
    %14 = vector.load %arg6[%c0_10, %c0_11] : memref<128x8xf32, #tpu.memory_space<vmem>>, vector<128x8xf32>
    tpu.vector_store %arg6[%c0_10, %c0_11], %13 {strides = array<i32>} : memref<128x8xf32, #tpu.memory_space<vmem>>, vector<128x8xf32>,
    %cst_12 = arith.constant dense<0.000000e+00> : vector<8xf32>
    %15 = vector.multi_reduction <add>, %13, %cst_12 [0] : vector<128x8xf32> to vector<8xf32>
    %16 = vector.shape_cast %15 : vector<8xf32> to vector<1x1x8xf32>
    %c0_13 = arith.constant 0 : index
    %c0_14 = arith.constant 0 : index
    %c0_15 = arith.constant 0 : index
    %17 = vector.load %arg7[%c0_13, %c0_14, %c0_15] : memref<1x1x8xf32, #tpu.memory_space<vmem>>, vector<1x1x8xf32>
    tpu.vector_store %arg7[%c0_13, %c0_14, %c0_15], %16 {strides = array<i32>} : memref<1x1x8xf32, #tpu.memory_space<vmem>>, vector<1x1x8xf32>,
    %18 = arith.mulf %13, %13 : vector<128x8xf32>
    %cst_16 = arith.constant dense<0.000000e+00> : vector<8xf32>
    %19 = vector.multi_reduction <add>, %18, %cst_16 [0] : vector<128x8xf32> to vector<8xf32>
    %20 = vector.shape_cast %19 : vector<8xf32> to vector<1x1x8xf32>
    %c0_17 = arith.constant 0 : index
    %c0_18 = arith.constant 0 : index
    %c0_19 = arith.constant 0 : index
    %21 = vector.load %arg8[%c0_17, %c0_18, %c0_19] : memref<1x1x8xf32, #tpu.memory_space<vmem>>, vector<1x1x8xf32>
    tpu.vector_store %arg8[%c0_17, %c0_18, %c0_19], %20 {strides = array<i32>} : memref<1x1x8xf32, #tpu.memory_space<vmem>>, vector<1x1x8xf32>,
    return
  }
  func.func @transform_0(%arg0: i32) -> (i32, i32) {
    %c0_i32 = arith.constant 0 : i32
    %c0_i32_0 = arith.constant 0 : i32
    return %arg0, %c0_i32 : i32, i32
  }
  func.func @transform_1(%arg0: i32) -> (i32, i32) {
    %c0_i32 = arith.constant 0 : i32
    %c0_i32_0 = arith.constant 0 : i32
    %c0_i32_1 = arith.constant 0 : i32
    return %c0_i32, %c0_i32_0 : i32, i32
  }
  func.func @transform_2(%arg0: i32) -> (i32, i32) {
    %c0_i32 = arith.constant 0 : i32
    %c0_i32_0 = arith.constant 0 : i32
    %c0_i32_1 = arith.constant 0 : i32
    return %c0_i32, %c0_i32_0 : i32, i32
  }
  func.func @transform_3(%arg0: i32) -> (i32, i32) {
    %c0_i32 = arith.constant 0 : i32
    %c0_i32_0 = arith.constant 0 : i32
    %c0_i32_1 = arith.constant 0 : i32
    return %c0_i32, %c0_i32_0 : i32, i32
  }
  func.func @transform_4(%arg0: i32) -> (i32, i32) {
    %c0_i32 = arith.constant 0 : i32
    %c0_i32_0 = arith.constant 0 : i32
    %c0_i32_1 = arith.constant 0 : i32
    return %c0_i32, %c0_i32_0 : i32, i32
  }
  func.func @transform_5(%arg0: i32) -> (i32, i32) {
    %c0_i32 = arith.constant 0 : i32
    %c0_i32_0 = arith.constant 0 : i32
    return %arg0, %c0_i32 : i32, i32
  }
  func.func @transform_6(%arg0: i32) -> (i32, i32, i32) {
    %c0_i32 = arith.constant 0 : i32
    %c0_i32_0 = arith.constant 0 : i32
    %c0_i32_1 = arith.constant 0 : i32
    return %arg0, %c0_i32, %c0_i32_0 : i32, i32, i32
  }
  func.func @transform_7(%arg0: i32) -> (i32, i32, i32) {
    %c0_i32 = arith.constant 0 : i32
    %c0_i32_0 = arith.constant 0 : i32
    %c0_i32_1 = arith.constant 0 : i32
    return %arg0, %c0_i32, %c0_i32_0 : i32, i32, i32
  }
}

module attributes {stable_mosaic.version = 11 : i64} {
  func.func @_bn_relu_pw_res_kernel(%arg0: i32, %arg1: memref<128x8xf32, #tpu.memory_space<vmem>>, %arg2: memref<1x8xf32, #tpu.memory_space<vmem>>, %arg3: memref<1x8xf32, #tpu.memory_space<vmem>>, %arg4: memref<8x32xf32, #tpu.memory_space<vmem>>, %arg5: memref<1x32xf32, #tpu.memory_space<vmem>>, %arg6: memref<128x32xf32, #tpu.memory_space<vmem>>, %arg7: memref<128x32xf32, #tpu.memory_space<vmem>>) attributes {dimension_semantics = [#tpu.dimension_semantics<parallel>], iteration_bounds = array<i64: 4>, scalar_prefetch = 0 : i64, scratch_operands = 0 : i64, tpu.core_type = #tpu.core_type<tc>, window_params = [{transform_indices = @transform_0, window_bounds = array<i64: 128, 8>}, {pipeline_mode = #tpu.pipeline_mode<synchronous>, transform_indices = @transform_1, window_bounds = array<i64: 1, 8>}, {pipeline_mode = #tpu.pipeline_mode<synchronous>, transform_indices = @transform_2, window_bounds = array<i64: 1, 8>}, {pipeline_mode = #tpu.pipeline_mode<synchronous>, transform_indices = @transform_3, window_bounds = array<i64: 8, 32>}, {pipeline_mode = #tpu.pipeline_mode<synchronous>, transform_indices = @transform_4, window_bounds = array<i64: 1, 32>}, {transform_indices = @transform_5, window_bounds = array<i64: 128, 32>}, {transform_indices = @transform_6, window_bounds = array<i64: 128, 32>}]} {
    %c0 = arith.constant 0 : index
    %c0_0 = arith.constant 0 : index
    %0 = vector.load %arg1[%c0, %c0_0] : memref<128x8xf32, #tpu.memory_space<vmem>>, vector<128x8xf32>
    %c0_1 = arith.constant 0 : index
    %c0_2 = arith.constant 0 : index
    %1 = vector.load %arg2[%c0_1, %c0_2] : memref<1x8xf32, #tpu.memory_space<vmem>>, vector<1x8xf32>
    %2 = vector.broadcast %1 : vector<1x8xf32> to vector<128x8xf32>
    %3 = arith.mulf %0, %2 : vector<128x8xf32>
    %c0_3 = arith.constant 0 : index
    %c0_4 = arith.constant 0 : index
    %4 = vector.load %arg3[%c0_3, %c0_4] : memref<1x8xf32, #tpu.memory_space<vmem>>, vector<1x8xf32>
    %5 = vector.broadcast %4 : vector<1x8xf32> to vector<128x8xf32>
    %6 = arith.addf %3, %5 : vector<128x8xf32>
    %cst = arith.constant 0.000000e+00 : f32
    %7 = vector.broadcast %cst : f32 to vector<128x8xf32>
    %8 = arith.maximumf %6, %7 : vector<128x8xf32>
    %c0_5 = arith.constant 0 : index
    %c0_6 = arith.constant 0 : index
    %9 = vector.load %arg4[%c0_5, %c0_6] : memref<8x32xf32, #tpu.memory_space<vmem>>, vector<8x32xf32>
    %cst_7 = arith.constant dense<0.000000e+00> : vector<128x32xf32>
    %10 = tpu.matmul %8, %9, %cst_7 {dimension_numbers = #tpu.dot_dimension_numbers<[1], [0], [0], [1], [0, 0, 1, 1], [], []>} : vector<128x8xf32>, vector<8x32xf32>, vector<128x32xf32> -> vector<128x32xf32>
    %c0_8 = arith.constant 0 : index
    %c0_9 = arith.constant 0 : index
    %11 = vector.load %arg5[%c0_8, %c0_9] : memref<1x32xf32, #tpu.memory_space<vmem>>, vector<1x32xf32>
    %12 = vector.broadcast %11 : vector<1x32xf32> to vector<128x32xf32>
    %13 = arith.addf %10, %12 : vector<128x32xf32>
    %c0_10 = arith.constant 0 : index
    %c0_11 = arith.constant 0 : index
    %14 = vector.load %arg6[%c0_10, %c0_11] : memref<128x32xf32, #tpu.memory_space<vmem>>, vector<128x32xf32>
    %15 = arith.addf %13, %14 : vector<128x32xf32>
    %c0_12 = arith.constant 0 : index
    %c0_13 = arith.constant 0 : index
    %16 = vector.load %arg7[%c0_12, %c0_13] : memref<128x32xf32, #tpu.memory_space<vmem>>, vector<128x32xf32>
    tpu.vector_store %arg7[%c0_12, %c0_13], %15 {strides = array<i32>} : memref<128x32xf32, #tpu.memory_space<vmem>>, vector<128x32xf32>,
    return
  }
  func.func @transform_0(%arg0: i32) -> (i32, i32) {
    %c0_i32 = arith.constant 0 : i32
    %c0_i32_0 = arith.constant 0 : i32
    return %arg0, %c0_i32 : i32, i32
  }
  func.func @transform_1(%arg0: i32) -> (i32, i32) {
    %c0_i32 = arith.constant 0 : i32
    %c0_i32_0 = arith.constant 0 : i32
    %c0_i32_1 = arith.constant 0 : i32
    return %c0_i32, %c0_i32_0 : i32, i32
  }
  func.func @transform_2(%arg0: i32) -> (i32, i32) {
    %c0_i32 = arith.constant 0 : i32
    %c0_i32_0 = arith.constant 0 : i32
    %c0_i32_1 = arith.constant 0 : i32
    return %c0_i32, %c0_i32_0 : i32, i32
  }
  func.func @transform_3(%arg0: i32) -> (i32, i32) {
    %c0_i32 = arith.constant 0 : i32
    %c0_i32_0 = arith.constant 0 : i32
    %c0_i32_1 = arith.constant 0 : i32
    return %c0_i32, %c0_i32_0 : i32, i32
  }
  func.func @transform_4(%arg0: i32) -> (i32, i32) {
    %c0_i32 = arith.constant 0 : i32
    %c0_i32_0 = arith.constant 0 : i32
    %c0_i32_1 = arith.constant 0 : i32
    return %c0_i32, %c0_i32_0 : i32, i32
  }
  func.func @transform_5(%arg0: i32) -> (i32, i32) {
    %c0_i32 = arith.constant 0 : i32
    %c0_i32_0 = arith.constant 0 : i32
    return %arg0, %c0_i32 : i32, i32
  }
  func.func @transform_6(%arg0: i32) -> (i32, i32) {
    %c0_i32 = arith.constant 0 : i32
    %c0_i32_0 = arith.constant 0 : i32
    return %arg0, %c0_i32 : i32, i32
  }
}

module attributes {stable_mosaic.version = 11 : i64} {
  func.func @_bn_relu_conv3_kernel(%arg0: i32, %arg1: i32, %arg2: memref<1x8x16x8xf32, #tpu.memory_space<vmem>>, %arg3: memref<1x1x16x8xf32, #tpu.memory_space<vmem>>, %arg4: memref<1x1x16x8xf32, #tpu.memory_space<vmem>>, %arg5: memref<1x8xf32, #tpu.memory_space<vmem>>, %arg6: memref<1x8xf32, #tpu.memory_space<vmem>>, %arg7: memref<3x3x8x8xf32, #tpu.memory_space<vmem>>, %arg8: memref<1x8xf32, #tpu.memory_space<vmem>>, %arg9: memref<1x8x16x8xf32, #tpu.memory_space<vmem>>, %arg10: memref<1x1x1x8xf32, #tpu.memory_space<vmem>>, %arg11: memref<1x1x1x8xf32, #tpu.memory_space<vmem>>, %arg12: memref<10x24x8xf32, #tpu.memory_space<vmem>>, %arg13: memref<128x8xf32, #tpu.memory_space<vmem>>) attributes {dimension_semantics = [#tpu.dimension_semantics<parallel>, #tpu.dimension_semantics<parallel>], iteration_bounds = array<i64: 2, 2>, scalar_prefetch = 0 : i64, scratch_operands = 2 : i64, tpu.core_type = #tpu.core_type<tc>, window_params = [{transform_indices = @transform_0, window_bounds = array<i64: 1, 8, 16, 8>}, {transform_indices = @transform_1, window_bounds = array<i64: 1, 1, 16, 8>}, {transform_indices = @transform_2, window_bounds = array<i64: 1, 1, 16, 8>}, {pipeline_mode = #tpu.pipeline_mode<synchronous>, transform_indices = @transform_3, window_bounds = array<i64: 1, 8>}, {pipeline_mode = #tpu.pipeline_mode<synchronous>, transform_indices = @transform_4, window_bounds = array<i64: 1, 8>}, {pipeline_mode = #tpu.pipeline_mode<synchronous>, transform_indices = @transform_5, window_bounds = array<i64: 3, 3, 8, 8>}, {pipeline_mode = #tpu.pipeline_mode<synchronous>, transform_indices = @transform_6, window_bounds = array<i64: 1, 8>}, {transform_indices = @transform_7, window_bounds = array<i64: 1, 8, 16, 8>}, {transform_indices = @transform_8, window_bounds = array<i64: 1, 1, 1, 8>}, {transform_indices = @transform_9, window_bounds = array<i64: 1, 1, 1, 8>}]} {
    %c0 = arith.constant 0 : index
    %c0_0 = arith.constant 0 : index
    %0 = vector.load %arg5[%c0, %c0_0] : memref<1x8xf32, #tpu.memory_space<vmem>>, vector<1x8xf32>
    %c0_1 = arith.constant 0 : index
    %c0_2 = arith.constant 0 : index
    %1 = vector.load %arg6[%c0_1, %c0_2] : memref<1x8xf32, #tpu.memory_space<vmem>>, vector<1x8xf32>
    %c0_3 = arith.constant 0 : index
    %c0_4 = arith.constant 0 : index
    %c0_5 = arith.constant 0 : index
    %c0_6 = arith.constant 0 : index
    %2 = vector.load %arg2[%c0_3, %c0_4, %c0_5, %c0_6] : memref<1x8x16x8xf32, #tpu.memory_space<vmem>>, vector<1x8x16x8xf32>
    %3 = vector.shape_cast %2 : vector<1x8x16x8xf32> to vector<8x16x8xf32>
    %4 = vector.shape_cast %0 : vector<1x8xf32> to vector<1x1x8xf32>
    %5 = vector.broadcast %4 : vector<1x1x8xf32> to vector<8x16x8xf32>
    %6 = arith.mulf %3, %5 : vector<8x16x8xf32>
    %7 = vector.shape_cast %1 : vector<1x8xf32> to vector<1x1x8xf32>
    %8 = vector.broadcast %7 : vector<1x1x8xf32> to vector<8x16x8xf32>
    %9 = arith.addf %6, %8 : vector<8x16x8xf32>
    %cst = arith.constant 0.000000e+00 : f32
    %10 = vector.broadcast %cst : f32 to vector<8x16x8xf32>
    %11 = arith.maximumf %9, %10 : vector<8x16x8xf32>
    %c0_7 = arith.constant 0 : index
    %c0_8 = arith.constant 0 : index
    %c0_9 = arith.constant 0 : index
    %c0_10 = arith.constant 0 : index
    %12 = vector.load %arg3[%c0_7, %c0_8, %c0_9, %c0_10] : memref<1x1x16x8xf32, #tpu.memory_space<vmem>>, vector<1x1x16x8xf32>
    %13 = vector.shape_cast %12 : vector<1x1x16x8xf32> to vector<1x16x8xf32>
    %14 = vector.shape_cast %0 : vector<1x8xf32> to vector<1x1x8xf32>
    %15 = vector.broadcast %14 : vector<1x1x8xf32> to vector<1x16x8xf32>
    %16 = arith.mulf %13, %15 : vector<1x16x8xf32>
    %17 = vector.shape_cast %1 : vector<1x8xf32> to vector<1x1x8xf32>
    %18 = vector.broadcast %17 : vector<1x1x8xf32> to vector<1x16x8xf32>
    %19 = arith.addf %16, %18 : vector<1x16x8xf32>
    %cst_11 = arith.constant 0.000000e+00 : f32
    %20 = vector.broadcast %cst_11 : f32 to vector<1x16x8xf32>
    %21 = arith.maximumf %19, %20 : vector<1x16x8xf32>
    %c0_12 = arith.constant 0 : index
    %c0_13 = arith.constant 0 : index
    %c0_14 = arith.constant 0 : index
    %c0_15 = arith.constant 0 : index
    %22 = vector.load %arg4[%c0_12, %c0_13, %c0_14, %c0_15] : memref<1x1x16x8xf32, #tpu.memory_space<vmem>>, vector<1x1x16x8xf32>
    %23 = vector.shape_cast %22 : vector<1x1x16x8xf32> to vector<1x16x8xf32>
    %24 = vector.shape_cast %0 : vector<1x8xf32> to vector<1x1x8xf32>
    %25 = vector.broadcast %24 : vector<1x1x8xf32> to vector<1x16x8xf32>
    %26 = arith.mulf %23, %25 : vector<1x16x8xf32>
    %27 = vector.shape_cast %1 : vector<1x8xf32> to vector<1x1x8xf32>
    %28 = vector.broadcast %27 : vector<1x1x8xf32> to vector<1x16x8xf32>
    %29 = arith.addf %26, %28 : vector<1x16x8xf32>
    %cst_16 = arith.constant 0.000000e+00 : f32
    %30 = vector.broadcast %cst_16 : f32 to vector<1x16x8xf32>
    %31 = arith.maximumf %29, %30 : vector<1x16x8xf32>
    %c0_i32 = arith.constant 0 : i32
    %32 = arith.cmpi sgt, %arg1, %c0_i32 : i32
    %cst_17 = arith.constant 0.000000e+00 : f32
    %33 = vector.broadcast %cst_17 : f32 to vector<1x16x8xf32>
    %34 = arith.select %32, %21, %33 : vector<1x16x8xf32>
    %c1_i32 = arith.constant 1 : i32
    %35 = arith.cmpi slt, %arg1, %c1_i32 : i32
    %cst_18 = arith.constant 0.000000e+00 : f32
    %36 = vector.broadcast %cst_18 : f32 to vector<1x16x8xf32>
    %37 = arith.select %35, %31, %36 : vector<1x16x8xf32>
    %c1 = arith.constant 1 : index
    %c1_19 = arith.constant 1 : index
    %c0_20 = arith.constant 0 : index
    %38 = vector.load %arg12[%c1, %c1_19, %c0_20] : memref<10x24x8xf32, #tpu.memory_space<vmem>>, vector<8x16x8xf32>
    tpu.vector_store %arg12[%c1, %c1_19, %c0_20], %11 {strides = array<i32>} : memref<10x24x8xf32, #tpu.memory_space<vmem>>, vector<8x16x8xf32>,
    %c0_21 = arith.constant 0 : index
    %c1_22 = arith.constant 1 : index
    %c0_23 = arith.constant 0 : index
    %39 = vector.load %arg12[%c0_21, %c1_22, %c0_23] : memref<10x24x8xf32, #tpu.memory_space<vmem>>, vector<1x16x8xf32>
    tpu.vector_store %arg12[%c0_21, %c1_22, %c0_23], %34 {strides = array<i32>} : memref<10x24x8xf32, #tpu.memory_space<vmem>>, vector<1x16x8xf32>,
    %c9 = arith.constant 9 : index
    %c1_24 = arith.constant 1 : index
    %c0_25 = arith.constant 0 : index
    %40 = vector.load %arg12[%c9, %c1_24, %c0_25] : memref<10x24x8xf32, #tpu.memory_space<vmem>>, vector<1x16x8xf32>
    tpu.vector_store %arg12[%c9, %c1_24, %c0_25], %37 {strides = array<i32>} : memref<10x24x8xf32, #tpu.memory_space<vmem>>, vector<1x16x8xf32>,
    %cst_26 = arith.constant 0.000000e+00 : f32
    %41 = vector.broadcast %cst_26 : f32 to vector<10x1x8xf32>
    %c0_27 = arith.constant 0 : index
    %c0_28 = arith.constant 0 : index
    %c0_29 = arith.constant 0 : index
    %42 = vector.load %arg12[%c0_27, %c0_28, %c0_29] : memref<10x24x8xf32, #tpu.memory_space<vmem>>, vector<10x1x8xf32>
    tpu.vector_store %arg12[%c0_27, %c0_28, %c0_29], %41 {strides = array<i32>} : memref<10x24x8xf32, #tpu.memory_space<vmem>>, vector<10x1x8xf32>,
    %cst_30 = arith.constant 0.000000e+00 : f32
    %43 = vector.broadcast %cst_30 : f32 to vector<10x7x8xf32>
    %c0_31 = arith.constant 0 : index
    %c17 = arith.constant 17 : index
    %c0_32 = arith.constant 0 : index
    %44 = vector.load %arg12[%c0_31, %c17, %c0_32] : memref<10x24x8xf32, #tpu.memory_space<vmem>>, vector<10x7x8xf32>
    tpu.vector_store %arg12[%c0_31, %c17, %c0_32], %43 {strides = array<i32>} : memref<10x24x8xf32, #tpu.memory_space<vmem>>, vector<10x7x8xf32>,
    %c0_33 = arith.constant 0 : index
    %c0_34 = arith.constant 0 : index
    %c0_35 = arith.constant 0 : index
    %45 = vector.load %arg12[%c0_33, %c0_34, %c0_35] : memref<10x24x8xf32, #tpu.memory_space<vmem>>, vector<10x24x8xf32>
    %c0_36 = arith.constant 0 : index
    %c0_37 = arith.constant 0 : index
    %c0_38 = arith.constant 0 : index
    %c0_39 = arith.constant 0 : index
    %46 = vector.load %arg7[%c0_36, %c0_37, %c0_38, %c0_39] : memref<3x3x8x8xf32, #tpu.memory_space<vmem>>, vector<3x3x8x8xf32>
    %47 = vector.extract_strided_slice %45 {offsets = [0, 0, 0], sizes = [10, 16, 8], strides = [1, 1, 1]} : vector<10x24x8xf32> to vector<10x16x8xf32>
    %48 = vector.extract_strided_slice %47 {offsets = [0, 0, 0], sizes = [8, 16, 8], strides = [1, 1, 1]} : vector<10x16x8xf32> to vector<8x16x8xf32>
    %49 = vector.shape_cast %48 : vector<8x16x8xf32> to vector<128x8xf32>
    %50 = vector.extract_strided_slice %46 {offsets = [0, 0, 0, 0], sizes = [1, 1, 8, 8], strides = [1, 1, 1, 1]} : vector<3x3x8x8xf32> to vector<1x1x8x8xf32>
    %51 = vector.shape_cast %50 : vector<1x1x8x8xf32> to vector<8x8xf32>
    %cst_40 = arith.constant dense<0.000000e+00> : vector<128x8xf32>
    %52 = tpu.matmul %49, %51, %cst_40 {dimension_numbers = #tpu.dot_dimension_numbers<[1], [0], [0], [1], [0, 0, 1, 1], [], []>} : vector<128x8xf32>, vector<8x8xf32>, vector<128x8xf32> -> vector<128x8xf32>
    %c0_41 = arith.constant 0 : index
    %c0_42 = arith.constant 0 : index
    %53 = vector.load %arg13[%c0_41, %c0_42] : memref<128x8xf32, #tpu.memory_space<vmem>>, vector<128x8xf32>
    tpu.vector_store %arg13[%c0_41, %c0_42], %52 {strides = array<i32>} : memref<128x8xf32, #tpu.memory_space<vmem>>, vector<128x8xf32>,
    %54 = vector.extract_strided_slice %47 {offsets = [1, 0, 0], sizes = [8, 16, 8], strides = [1, 1, 1]} : vector<10x16x8xf32> to vector<8x16x8xf32>
    %55 = vector.shape_cast %54 : vector<8x16x8xf32> to vector<128x8xf32>
    %56 = vector.extract_strided_slice %46 {offsets = [1, 0, 0, 0], sizes = [1, 1, 8, 8], strides = [1, 1, 1, 1]} : vector<3x3x8x8xf32> to vector<1x1x8x8xf32>
    %57 = vector.shape_cast %56 : vector<1x1x8x8xf32> to vector<8x8xf32>
    %cst_43 = arith.constant dense<0.000000e+00> : vector<128x8xf32>
    %58 = tpu.matmul %55, %57, %cst_43 {dimension_numbers = #tpu.dot_dimension_numbers<[1], [0], [0], [1], [0, 0, 1, 1], [], []>} : vector<128x8xf32>, vector<8x8xf32>, vector<128x8xf32> -> vector<128x8xf32>
    %c0_44 = arith.constant 0 : index
    %c0_45 = arith.constant 0 : index
    %59 = vector.load %arg13[%c0_44, %c0_45] : memref<128x8xf32, #tpu.memory_space<vmem>>, vector<128x8xf32>
    %60 = arith.addf %59, %58 : vector<128x8xf32>
    %c0_46 = arith.constant 0 : index
    %c0_47 = arith.constant 0 : index
    %61 = vector.load %arg13[%c0_46, %c0_47] : memref<128x8xf32, #tpu.memory_space<vmem>>, vector<128x8xf32>
    tpu.vector_store %arg13[%c0_46, %c0_47], %60 {strides = array<i32>} : memref<128x8xf32, #tpu.memory_space<vmem>>, vector<128x8xf32>,
    %62 = vector.extract_strided_slice %47 {offsets = [2, 0, 0], sizes = [8, 16, 8], strides = [1, 1, 1]} : vector<10x16x8xf32> to vector<8x16x8xf32>
    %63 = vector.shape_cast %62 : vector<8x16x8xf32> to vector<128x8xf32>
    %64 = vector.extract_strided_slice %46 {offsets = [2, 0, 0, 0], sizes = [1, 1, 8, 8], strides = [1, 1, 1, 1]} : vector<3x3x8x8xf32> to vector<1x1x8x8xf32>
    %65 = vector.shape_cast %64 : vector<1x1x8x8xf32> to vector<8x8xf32>
    %cst_48 = arith.constant dense<0.000000e+00> : vector<128x8xf32>
    %66 = tpu.matmul %63, %65, %cst_48 {dimension_numbers = #tpu.dot_dimension_numbers<[1], [0], [0], [1], [0, 0, 1, 1], [], []>} : vector<128x8xf32>, vector<8x8xf32>, vector<128x8xf32> -> vector<128x8xf32>
    %c0_49 = arith.constant 0 : index
    %c0_50 = arith.constant 0 : index
    %67 = vector.load %arg13[%c0_49, %c0_50] : memref<128x8xf32, #tpu.memory_space<vmem>>, vector<128x8xf32>
    %68 = arith.addf %67, %66 : vector<128x8xf32>
    %c0_51 = arith.constant 0 : index
    %c0_52 = arith.constant 0 : index
    %69 = vector.load %arg13[%c0_51, %c0_52] : memref<128x8xf32, #tpu.memory_space<vmem>>, vector<128x8xf32>
    tpu.vector_store %arg13[%c0_51, %c0_52], %68 {strides = array<i32>} : memref<128x8xf32, #tpu.memory_space<vmem>>, vector<128x8xf32>,
    %70 = vector.extract_strided_slice %45 {offsets = [0, 1, 0], sizes = [10, 16, 8], strides = [1, 1, 1]} : vector<10x24x8xf32> to vector<10x16x8xf32>
    %71 = vector.extract_strided_slice %70 {offsets = [0, 0, 0], sizes = [8, 16, 8], strides = [1, 1, 1]} : vector<10x16x8xf32> to vector<8x16x8xf32>
    %72 = vector.shape_cast %71 : vector<8x16x8xf32> to vector<128x8xf32>
    %73 = vector.extract_strided_slice %46 {offsets = [0, 1, 0, 0], sizes = [1, 1, 8, 8], strides = [1, 1, 1, 1]} : vector<3x3x8x8xf32> to vector<1x1x8x8xf32>
    %74 = vector.shape_cast %73 : vector<1x1x8x8xf32> to vector<8x8xf32>
    %cst_53 = arith.constant dense<0.000000e+00> : vector<128x8xf32>
    %75 = tpu.matmul %72, %74, %cst_53 {dimension_numbers = #tpu.dot_dimension_numbers<[1], [0], [0], [1], [0, 0, 1, 1], [], []>} : vector<128x8xf32>, vector<8x8xf32>, vector<128x8xf32> -> vector<128x8xf32>
    %c0_54 = arith.constant 0 : index
    %c0_55 = arith.constant 0 : index
    %76 = vector.load %arg13[%c0_54, %c0_55] : memref<128x8xf32, #tpu.memory_space<vmem>>, vector<128x8xf32>
    %77 = arith.addf %76, %75 : vector<128x8xf32>
    %c0_56 = arith.constant 0 : index
    %c0_57 = arith.constant 0 : index
    %78 = vector.load %arg13[%c0_56, %c0_57] : memref<128x8xf32, #tpu.memory_space<vmem>>, vector<128x8xf32>
    tpu.vector_store %arg13[%c0_56, %c0_57], %77 {strides = array<i32>} : memref<128x8xf32, #tpu.memory_space<vmem>>, vector<128x8xf32>,
    %79 = vector.extract_strided_slice %70 {offsets = [1, 0, 0], sizes = [8, 16, 8], strides = [1, 1, 1]} : vector<10x16x8xf32> to vector<8x16x8xf32>
    %80 = vector.shape_cast %79 : vector<8x16x8xf32> to vector<128x8xf32>
    %81 = vector.extract_strided_slice %46 {offsets = [1, 1, 0, 0], sizes = [1, 1, 8, 8], strides = [1, 1, 1, 1]} : vector<3x3x8x8xf32> to vector<1x1x8x8xf32>
    %82 = vector.shape_cast %81 : vector<1x1x8x8xf32> to vector<8x8xf32>
    %cst_58 = arith.constant dense<0.000000e+00> : vector<128x8xf32>
    %83 = tpu.matmul %80, %82, %cst_58 {dimension_numbers = #tpu.dot_dimension_numbers<[1], [0], [0], [1], [0, 0, 1, 1], [], []>} : vector<128x8xf32>, vector<8x8xf32>, vector<128x8xf32> -> vector<128x8xf32>
    %c0_59 = arith.constant 0 : index
    %c0_60 = arith.constant 0 : index
    %84 = vector.load %arg13[%c0_59, %c0_60] : memref<128x8xf32, #tpu.memory_space<vmem>>, vector<128x8xf32>
    %85 = arith.addf %84, %83 : vector<128x8xf32>
    %c0_61 = arith.constant 0 : index
    %c0_62 = arith.constant 0 : index
    %86 = vector.load %arg13[%c0_61, %c0_62] : memref<128x8xf32, #tpu.memory_space<vmem>>, vector<128x8xf32>
    tpu.vector_store %arg13[%c0_61, %c0_62], %85 {strides = array<i32>} : memref<128x8xf32, #tpu.memory_space<vmem>>, vector<128x8xf32>,
    %87 = vector.extract_strided_slice %70 {offsets = [2, 0, 0], sizes = [8, 16, 8], strides = [1, 1, 1]} : vector<10x16x8xf32> to vector<8x16x8xf32>
    %88 = vector.shape_cast %87 : vector<8x16x8xf32> to vector<128x8xf32>
    %89 = vector.extract_strided_slice %46 {offsets = [2, 1, 0, 0], sizes = [1, 1, 8, 8], strides = [1, 1, 1, 1]} : vector<3x3x8x8xf32> to vector<1x1x8x8xf32>
    %90 = vector.shape_cast %89 : vector<1x1x8x8xf32> to vector<8x8xf32>
    %cst_63 = arith.constant dense<0.000000e+00> : vector<128x8xf32>
    %91 = tpu.matmul %88, %90, %cst_63 {dimension_numbers = #tpu.dot_dimension_numbers<[1], [0], [0], [1], [0, 0, 1, 1], [], []>} : vector<128x8xf32>, vector<8x8xf32>, vector<128x8xf32> -> vector<128x8xf32>
    %c0_64 = arith.constant 0 : index
    %c0_65 = arith.constant 0 : index
    %92 = vector.load %arg13[%c0_64, %c0_65] : memref<128x8xf32, #tpu.memory_space<vmem>>, vector<128x8xf32>
    %93 = arith.addf %92, %91 : vector<128x8xf32>
    %c0_66 = arith.constant 0 : index
    %c0_67 = arith.constant 0 : index
    %94 = vector.load %arg13[%c0_66, %c0_67] : memref<128x8xf32, #tpu.memory_space<vmem>>, vector<128x8xf32>
    tpu.vector_store %arg13[%c0_66, %c0_67], %93 {strides = array<i32>} : memref<128x8xf32, #tpu.memory_space<vmem>>, vector<128x8xf32>,
    %95 = vector.extract_strided_slice %45 {offsets = [0, 2, 0], sizes = [10, 16, 8], strides = [1, 1, 1]} : vector<10x24x8xf32> to vector<10x16x8xf32>
    %96 = vector.extract_strided_slice %95 {offsets = [0, 0, 0], sizes = [8, 16, 8], strides = [1, 1, 1]} : vector<10x16x8xf32> to vector<8x16x8xf32>
    %97 = vector.shape_cast %96 : vector<8x16x8xf32> to vector<128x8xf32>
    %98 = vector.extract_strided_slice %46 {offsets = [0, 2, 0, 0], sizes = [1, 1, 8, 8], strides = [1, 1, 1, 1]} : vector<3x3x8x8xf32> to vector<1x1x8x8xf32>
    %99 = vector.shape_cast %98 : vector<1x1x8x8xf32> to vector<8x8xf32>
    %cst_68 = arith.constant dense<0.000000e+00> : vector<128x8xf32>
    %100 = tpu.matmul %97, %99, %cst_68 {dimension_numbers = #tpu.dot_dimension_numbers<[1], [0], [0], [1], [0, 0, 1, 1], [], []>} : vector<128x8xf32>, vector<8x8xf32>, vector<128x8xf32> -> vector<128x8xf32>
    %c0_69 = arith.constant 0 : index
    %c0_70 = arith.constant 0 : index
    %101 = vector.load %arg13[%c0_69, %c0_70] : memref<128x8xf32, #tpu.memory_space<vmem>>, vector<128x8xf32>
    %102 = arith.addf %101, %100 : vector<128x8xf32>
    %c0_71 = arith.constant 0 : index
    %c0_72 = arith.constant 0 : index
    %103 = vector.load %arg13[%c0_71, %c0_72] : memref<128x8xf32, #tpu.memory_space<vmem>>, vector<128x8xf32>
    tpu.vector_store %arg13[%c0_71, %c0_72], %102 {strides = array<i32>} : memref<128x8xf32, #tpu.memory_space<vmem>>, vector<128x8xf32>,
    %104 = vector.extract_strided_slice %95 {offsets = [1, 0, 0], sizes = [8, 16, 8], strides = [1, 1, 1]} : vector<10x16x8xf32> to vector<8x16x8xf32>
    %105 = vector.shape_cast %104 : vector<8x16x8xf32> to vector<128x8xf32>
    %106 = vector.extract_strided_slice %46 {offsets = [1, 2, 0, 0], sizes = [1, 1, 8, 8], strides = [1, 1, 1, 1]} : vector<3x3x8x8xf32> to vector<1x1x8x8xf32>
    %107 = vector.shape_cast %106 : vector<1x1x8x8xf32> to vector<8x8xf32>
    %cst_73 = arith.constant dense<0.000000e+00> : vector<128x8xf32>
    %108 = tpu.matmul %105, %107, %cst_73 {dimension_numbers = #tpu.dot_dimension_numbers<[1], [0], [0], [1], [0, 0, 1, 1], [], []>} : vector<128x8xf32>, vector<8x8xf32>, vector<128x8xf32> -> vector<128x8xf32>
    %c0_74 = arith.constant 0 : index
    %c0_75 = arith.constant 0 : index
    %109 = vector.load %arg13[%c0_74, %c0_75] : memref<128x8xf32, #tpu.memory_space<vmem>>, vector<128x8xf32>
    %110 = arith.addf %109, %108 : vector<128x8xf32>
    %c0_76 = arith.constant 0 : index
    %c0_77 = arith.constant 0 : index
    %111 = vector.load %arg13[%c0_76, %c0_77] : memref<128x8xf32, #tpu.memory_space<vmem>>, vector<128x8xf32>
    tpu.vector_store %arg13[%c0_76, %c0_77], %110 {strides = array<i32>} : memref<128x8xf32, #tpu.memory_space<vmem>>, vector<128x8xf32>,
    %112 = vector.extract_strided_slice %95 {offsets = [2, 0, 0], sizes = [8, 16, 8], strides = [1, 1, 1]} : vector<10x16x8xf32> to vector<8x16x8xf32>
    %113 = vector.shape_cast %112 : vector<8x16x8xf32> to vector<128x8xf32>
    %114 = vector.extract_strided_slice %46 {offsets = [2, 2, 0, 0], sizes = [1, 1, 8, 8], strides = [1, 1, 1, 1]} : vector<3x3x8x8xf32> to vector<1x1x8x8xf32>
    %115 = vector.shape_cast %114 : vector<1x1x8x8xf32> to vector<8x8xf32>
    %cst_78 = arith.constant dense<0.000000e+00> : vector<128x8xf32>
    %116 = tpu.matmul %113, %115, %cst_78 {dimension_numbers = #tpu.dot_dimension_numbers<[1], [0], [0], [1], [0, 0, 1, 1], [], []>} : vector<128x8xf32>, vector<8x8xf32>, vector<128x8xf32> -> vector<128x8xf32>
    %c0_79 = arith.constant 0 : index
    %c0_80 = arith.constant 0 : index
    %117 = vector.load %arg13[%c0_79, %c0_80] : memref<128x8xf32, #tpu.memory_space<vmem>>, vector<128x8xf32>
    %118 = arith.addf %117, %116 : vector<128x8xf32>
    %c0_81 = arith.constant 0 : index
    %c0_82 = arith.constant 0 : index
    %119 = vector.load %arg13[%c0_81, %c0_82] : memref<128x8xf32, #tpu.memory_space<vmem>>, vector<128x8xf32>
    tpu.vector_store %arg13[%c0_81, %c0_82], %118 {strides = array<i32>} : memref<128x8xf32, #tpu.memory_space<vmem>>, vector<128x8xf32>,
    %c0_83 = arith.constant 0 : index
    %c0_84 = arith.constant 0 : index
    %120 = vector.load %arg13[%c0_83, %c0_84] : memref<128x8xf32, #tpu.memory_space<vmem>>, vector<128x8xf32>
    %c0_85 = arith.constant 0 : index
    %c0_86 = arith.constant 0 : index
    %121 = vector.load %arg8[%c0_85, %c0_86] : memref<1x8xf32, #tpu.memory_space<vmem>>, vector<1x8xf32>
    %122 = vector.broadcast %121 : vector<1x8xf32> to vector<128x8xf32>
    %123 = arith.addf %120, %122 : vector<128x8xf32>
    %124 = vector.shape_cast %123 : vector<128x8xf32> to vector<8x16x8xf32>
    %125 = vector.shape_cast %124 : vector<8x16x8xf32> to vector<1x8x16x8xf32>
    %c0_87 = arith.constant 0 : index
    %c0_88 = arith.constant 0 : index
    %c0_89 = arith.constant 0 : index
    %c0_90 = arith.constant 0 : index
    %126 = vector.load %arg9[%c0_87, %c0_88, %c0_89, %c0_90] : memref<1x8x16x8xf32, #tpu.memory_space<vmem>>, vector<1x8x16x8xf32>
    tpu.vector_store %arg9[%c0_87, %c0_88, %c0_89, %c0_90], %125 {strides = array<i32>} : memref<1x8x16x8xf32, #tpu.memory_space<vmem>>, vector<1x8x16x8xf32>,
    %cst_91 = arith.constant dense<0.000000e+00> : vector<8xf32>
    %127 = vector.multi_reduction <add>, %124, %cst_91 [0, 1] : vector<8x16x8xf32> to vector<8xf32>
    %128 = vector.shape_cast %127 : vector<8xf32> to vector<1x1x1x8xf32>
    %c0_92 = arith.constant 0 : index
    %c0_93 = arith.constant 0 : index
    %c0_94 = arith.constant 0 : index
    %c0_95 = arith.constant 0 : index
    %129 = vector.load %arg10[%c0_92, %c0_93, %c0_94, %c0_95] : memref<1x1x1x8xf32, #tpu.memory_space<vmem>>, vector<1x1x1x8xf32>
    tpu.vector_store %arg10[%c0_92, %c0_93, %c0_94, %c0_95], %128 {strides = array<i32>} : memref<1x1x1x8xf32, #tpu.memory_space<vmem>>, vector<1x1x1x8xf32>,
    %130 = arith.mulf %124, %124 : vector<8x16x8xf32>
    %cst_96 = arith.constant dense<0.000000e+00> : vector<8xf32>
    %131 = vector.multi_reduction <add>, %130, %cst_96 [0, 1] : vector<8x16x8xf32> to vector<8xf32>
    %132 = vector.shape_cast %131 : vector<8xf32> to vector<1x1x1x8xf32>
    %c0_97 = arith.constant 0 : index
    %c0_98 = arith.constant 0 : index
    %c0_99 = arith.constant 0 : index
    %c0_100 = arith.constant 0 : index
    %133 = vector.load %arg11[%c0_97, %c0_98, %c0_99, %c0_100] : memref<1x1x1x8xf32, #tpu.memory_space<vmem>>, vector<1x1x1x8xf32>
    tpu.vector_store %arg11[%c0_97, %c0_98, %c0_99, %c0_100], %132 {strides = array<i32>} : memref<1x1x1x8xf32, #tpu.memory_space<vmem>>, vector<1x1x1x8xf32>,
    return
  }
  func.func @transform_0(%arg0: i32, %arg1: i32) -> (i32, i32, i32, i32) {
    %c0_i32 = arith.constant 0 : i32
    %c0_i32_0 = arith.constant 0 : i32
    %c0_i32_1 = arith.constant 0 : i32
    return %arg0, %arg1, %c0_i32, %c0_i32_0 : i32, i32, i32, i32
  }
  func.func @transform_1(%arg0: i32, %arg1: i32) -> (i32, i32, i32, i32) {
    %c8_i32 = arith.constant 8 : i32
    %0 = arith.muli %arg1, %c8_i32 : i32
    %c1_i32 = arith.constant 1 : i32
    %1 = arith.subi %0, %c1_i32 : i32
    %c0_i32 = arith.constant 0 : i32
    %2 = arith.maxsi %1, %c0_i32 : i32
    %c0_i32_0 = arith.constant 0 : i32
    %c0_i32_1 = arith.constant 0 : i32
    %c0_i32_2 = arith.constant 0 : i32
    return %arg0, %2, %c0_i32_0, %c0_i32_1 : i32, i32, i32, i32
  }
  func.func @transform_2(%arg0: i32, %arg1: i32) -> (i32, i32, i32, i32) {
    %c8_i32 = arith.constant 8 : i32
    %0 = arith.muli %arg1, %c8_i32 : i32
    %c8_i32_0 = arith.constant 8 : i32
    %1 = arith.addi %0, %c8_i32_0 : i32
    %c15_i32 = arith.constant 15 : i32
    %2 = arith.minsi %1, %c15_i32 : i32
    %c0_i32 = arith.constant 0 : i32
    %c0_i32_1 = arith.constant 0 : i32
    %c0_i32_2 = arith.constant 0 : i32
    return %arg0, %2, %c0_i32, %c0_i32_1 : i32, i32, i32, i32
  }
  func.func @transform_3(%arg0: i32, %arg1: i32) -> (i32, i32) {
    %c0_i32 = arith.constant 0 : i32
    %c0_i32_0 = arith.constant 0 : i32
    %c0_i32_1 = arith.constant 0 : i32
    return %c0_i32, %c0_i32_0 : i32, i32
  }
  func.func @transform_4(%arg0: i32, %arg1: i32) -> (i32, i32) {
    %c0_i32 = arith.constant 0 : i32
    %c0_i32_0 = arith.constant 0 : i32
    %c0_i32_1 = arith.constant 0 : i32
    return %c0_i32, %c0_i32_0 : i32, i32
  }
  func.func @transform_5(%arg0: i32, %arg1: i32) -> (i32, i32, i32, i32) {
    %c0_i32 = arith.constant 0 : i32
    %c0_i32_0 = arith.constant 0 : i32
    %c0_i32_1 = arith.constant 0 : i32
    %c0_i32_2 = arith.constant 0 : i32
    %c0_i32_3 = arith.constant 0 : i32
    return %c0_i32, %c0_i32_0, %c0_i32_1, %c0_i32_2 : i32, i32, i32, i32
  }
  func.func @transform_6(%arg0: i32, %arg1: i32) -> (i32, i32) {
    %c0_i32 = arith.constant 0 : i32
    %c0_i32_0 = arith.constant 0 : i32
    %c0_i32_1 = arith.constant 0 : i32
    return %c0_i32, %c0_i32_0 : i32, i32
  }
  func.func @transform_7(%arg0: i32, %arg1: i32) -> (i32, i32, i32, i32) {
    %c0_i32 = arith.constant 0 : i32
    %c0_i32_0 = arith.constant 0 : i32
    %c0_i32_1 = arith.constant 0 : i32
    return %arg0, %arg1, %c0_i32, %c0_i32_0 : i32, i32, i32, i32
  }
  func.func @transform_8(%arg0: i32, %arg1: i32) -> (i32, i32, i32, i32) {
    %c0_i32 = arith.constant 0 : i32
    %c0_i32_0 = arith.constant 0 : i32
    %c0_i32_1 = arith.constant 0 : i32
    return %arg0, %arg1, %c0_i32, %c0_i32_0 : i32, i32, i32, i32
  }
  func.func @transform_9(%arg0: i32, %arg1: i32) -> (i32, i32, i32, i32) {
    %c0_i32 = arith.constant 0 : i32
    %c0_i32_0 = arith.constant 0 : i32
    %c0_i32_1 = arith.constant 0 : i32
    return %arg0, %arg1, %c0_i32, %c0_i32_0 : i32, i32, i32, i32
  }
}

</mosaic_0001>

<llo_original>
// kernel: bottleneck_forward.4
$region0: #{bottleneck_forward.4}
  #allocation0 [shape = 'u32[]', space=smem, size = 0x4, offset = 0x4, fixed_abs, tag = 'smem constant byte address 0x4 - core index']
  #allocation1 [shape = 'u32[72,128]{1,0:T(1,128)}', space=vmem, size = 0x9000, scoped, tag = 'internal scratch']
  %s0 = inlined_call_operand.hbm [shape: f32[512,32], index: 0, kind: input, shape index: {}]
  %s1 = inlined_call_operand.vmem [shape: f32[4,1,32], index: 1, kind: output, shape index: {0}]
  %s2 = inlined_call_operand.vmem [shape: f32[4,1,32], index: 2, kind: output, shape index: {1}]
  %3 = xla_tuple %s1, %s2
  %s4 = sld [smem:[#allocation0]]
  $region49: #{bottleneck_forward.4} parent=0
    _
  %s6 = ssub.s32 1, %s4
  %s7 = scalar_select 0, %s6, %s4
  $region1: #{bottleneck_forward.4} parent=0
    #allocation2 [shape = 'u8[131072]{0}', space=vmem, size = 0x20000, scoped, tag = 'input window, operand 0']
    #allocation3 [shape = 's32[2]{0}', space=sflag, size = 0x8, scoped, tag = 'scoped memory for bottleneck_forward.4']
    %8 = vsyncpa [#allocation3], 0
    %s9 = scalar_lea.sflag [#allocation3], 1
    %10 = vsyncpa %s9, 0
    loop: start=0, step=1, limit=6
    $region2: #{bottleneck_forward.4} parent=1 // loop_pre_header
      _
    $region3: #{bottleneck_forward.4} parent=1 // loop_header
      %s12 = sphi 0, %s16
      %p13 = scmp.ge.s32.totalorder %s12, 6
      %s22 = sphi 0, %s24
      %s25 = sphi 0, %s22
      %s26 = sphi 0, %s25
      %s42 = sphi 0, %s26
      %s48 = sphi 0, %s50
      %s51 = sphi 0, %s48
      %s52 = sphi 0, %s51
      %s68 = sphi 0, %s52
      %s74 = sphi 0, %s76
      %s77 = sphi 0, %s74
      %s78 = sphi 0, %s77
      %s94 = sphi 0, %s78
    $region4: #{bottleneck_forward.4} parent=1 // loop_header_branch
      %15 = sbr.rel (%p13) target = $region8
    $region5: #{bottleneck_forward.4} parent=1 // loop_body
      %s17 = ssub.s32 %s12, 1
      %s18 = ssub.s32 %s12, 2
      %s19 = sadd.s32 %s12, 1
      %s20 = ssub.s32 %s12, %s19
      %p21 = scmp.eq.s32.totalorder %s20, 0
      %s23 = sadd.s32 %s22, 1
      %s24 = scalar_select %p21, %s22, %s23
      %p27 = pneg %p21
      %p28 = scmp.eq.s32.totalorder %s12, 3
      %p29 = por %p27, %p28
      %p30 = scmp.ne.s32.totalorder %s22, %s25
      %p31 = scmp.eq.s32.totalorder %s12, 0
      %p32 = por %p30, %p31
      %p33 = scmp.ne.s32.totalorder %s22, %s25
      %p34 = scmp.eq.s32.totalorder %s17, 3
      %p35 = por %p33, %p34
      %p36 = scmp.ne.s32.totalorder %s25, %s26
      %p37 = scmp.eq.s32.totalorder %s17, 0
      %p38 = por %p36, %p37
      %p39 = scmp.ne.s32.totalorder %s25, %s26
      %p40 = scmp.eq.s32.totalorder %s18, 3
      %p41 = por %p39, %p40
      %p43 = scmp.ne.s32.totalorder %s26, %s42
      %p44 = scmp.eq.s32.totalorder %s18, 0
      %p45 = por %p43, %p44
      %s46 = ssub.s32 %s12, %s19
      %p47 = scmp.eq.s32.totalorder %s46, 0
      %s49 = sadd.s32 %s48, 1
      %s50 = scalar_select %p47, %s48, %s49
      %p53 = pneg %p47
      %p54 = scmp.eq.s32.totalorder %s12, 3
      %p55 = por %p53, %p54
      %p56 = scmp.ne.s32.totalorder %s48, %s51
      %p57 = scmp.eq.s32.totalorder %s12, 0
      %p58 = por %p56, %p57
      %p59 = scmp.ne.s32.totalorder %s48, %s51
      %p60 = scmp.eq.s32.totalorder %s17, 3
      %p61 = por %p59, %p60
      %p62 = scmp.ne.s32.totalorder %s51, %s52
      %p63 = scmp.eq.s32.totalorder %s17, 0
      %p64 = por %p62, %p63
      %p65 = scmp.ne.s32.totalorder %s51, %s52
      %p66 = scmp.eq.s32.totalorder %s18, 3
      %p67 = por %p65, %p66
      %p69 = scmp.ne.s32.totalorder %s52, %s68
      %p70 = scmp.eq.s32.totalorder %s18, 0
      %p71 = por %p69, %p70
      %s72 = ssub.s32 %s12, %s19
      %p73 = scmp.eq.s32.totalorder %s72, 0
      %s75 = sadd.s32 %s74, 1
      %s76 = scalar_select %p73, %s74, %s75
      %p79 = pneg %p73
      %p80 = scmp.eq.s32.totalorder %s12, 3
      %p81 = por %p79, %p80
      %p82 = scmp.ne.s32.totalorder %s74, %s77
      %p83 = scmp.eq.s32.totalorder %s12, 0
      %p84 = por %p82, %p83
      %p85 = scmp.ne.s32.totalorder %s74, %s77
      %p86 = scmp.eq.s32.totalorder %s17, 3
      %p87 = por %p85, %p86
      %p88 = scmp.ne.s32.totalorder %s77, %s78
      %p89 = scmp.eq.s32.totalorder %s17, 0
      %p90 = por %p88, %p89
      %p91 = scmp.ne.s32.totalorder %s77, %s78
      %p92 = scmp.eq.s32.totalorder %s18, 3
      %p93 = por %p91, %p92
      %p95 = scmp.ne.s32.totalorder %s78, %s94
      %p96 = scmp.eq.s32.totalorder %s18, 0
      %p97 = por %p95, %p96
      %p98 = scmp.le.s32.totalorder 1, %s12
      %p99 = scmp.lt.s32.totalorder %s12, 5
      %p100 = pnand %p98, %p99
      %p101 = pneg %p100
      // Predicated region
      $region9: #{bottleneck_forward.4} parent=5 // pred_check
        _
      $region10: #{bottleneck_forward.4} parent=5 // pred_check_branch
        %103 = sbr.rel (%p100) target = $region12
      $region11: #{bottleneck_forward.4} parent=5 // pred_region
        %s104 = ssub.s32 %s12, 1
      $region12: #{bottleneck_forward.4} parent=5 // pred_fallthru
        _
      %p105 = scmp.lt.s32.totalorder %s12, 4
      // Predicated region
      $region13: #{bottleneck_forward.4} parent=5 // pred_check
        %p106 = pneg %p105
      $region14: #{bottleneck_forward.4} parent=5 // pred_check_branch
        %108 = sbr.rel (%p106) target = $region16
      $region15: #{bottleneck_forward.4} parent=5 // pred_region
        // Predicated region
        $region17: #{bottleneck_forward.4} parent=15 // pred_check
          %p109 = pneg %p32
        $region18: #{bottleneck_forward.4} parent=15 // pred_check_branch
          %111 = sbr.rel (%p109) target = $region20
        $region19: #{bottleneck_forward.4} parent=15 // pred_region
          %s112 = sand.u32 %s22, 1
          %s113 = scalar_lea.sflag [#allocation3], %s112
          %s114 = sand.u32 %s22, 1
          %s115 = smul.addr %s114, 128
          %s116 = scalar_lea.vmem [#allocation2], %s115
          %s117 = smul.u32 16, %s12
          %119 = vsyncadd %s113, 0
          %s120 = smul.addr %s117, 8
          %s121 = scalar_lea.hbm %s0, %s120
          %s122 = sshll.u32 %s121, 4
          %s123 = int_to_ptr.hbm [resolvable:$true] %s122
          %s124 = sshll.u32 %s116, 4
          %s125 = int_to_ptr.vmem [resolvable:$true] %s124
          %130 = dma.hbm_to_vmem [thread:$0]  %s123, 2048, %s125, %s113, 128, 128, 8
        $region20: #{bottleneck_forward.4} parent=15 // pred_fallthru
          _
      $region16: #{bottleneck_forward.4} parent=5 // pred_fallthru
        _
      %p131 = scmp.le.s32.totalorder 1, %s12
      %p132 = scmp.lt.s32.totalorder %s12, 5
      %p133 = pnand %p131, %p132
      %p134 = pneg %p133
      // Predicated region
      $region21: #{bottleneck_forward.4} parent=5 // pred_check
        _
      $region22: #{bottleneck_forward.4} parent=5 // pred_check_branch
        %136 = sbr.rel (%p133) target = $region24
      $region23: #{bottleneck_forward.4} parent=5 // pred_region
        %s137 = ssub.s32 %s12, 1
        %s138 = sand.u32 %s25, 1
        %s139 = scalar_lea.sflag [#allocation3], %s138
        %s140 = sand.u32 %s25, 1
        %s141 = smul.addr %s140, 128
        %s142 = scalar_lea.vmem [#allocation2], %s141
        // Predicated region
        $region25: #{bottleneck_forward.4} parent=23 // pred_check
          %p143 = pneg %p38
        $region26: #{bottleneck_forward.4} parent=23 // pred_check_branch
          %145 = sbr.rel (%p143) target = $region28
        $region27: #{bottleneck_forward.4} parent=23 // pred_region
          %147 = dma.done %s139, 2048
        $region28: #{bottleneck_forward.4} parent=23 // pred_fallthru
          _
        %s148 = sand.u32 %s25, 1
        %s149 = scalar_lea.sflag [#allocation3], %s148
        %s150 = sand.u32 %s25, 1
        %s151 = smul.addr %s150, 128
        %s152 = scalar_lea.vmem [#allocation2], %s151
        %p153 = pneg %p38
        %p154 = pneg %p35
        %p155 = pneg %p64
        %p156 = pneg %p61
        %p157 = scmp.lt.s32.totalorder %s17, 3
        %s158 = scalar_select %p157, %s17, 3
        %s159 = scalar_lea.vmem %s1, %s158
        %p160 = pneg %p90
        %p161 = pneg %p87
        %p162 = scmp.lt.s32.totalorder %s17, 3
        %s163 = scalar_select %p162, %s17, 3
        %s164 = scalar_lea.vmem %s2, %s163
        %s165 = smul.u32 16, %s17
        %p166 = scmp.lt.s32.totalorder %s17, 3
        %s167 = scalar_select %p166, %s17, 3
        %s168 = scalar_lea.vmem %s1, %s167
        %p169 = scmp.lt.s32.totalorder %s17, 3
        %s170 = scalar_select %p169, %s17, 3
        %s171 = scalar_lea.vmem %s2, %s170
        %v172 = vld [vmem:[%s142] sm:$0xff]
        %v173 = vld [vmem:[%s142 + $0x8] sm:$0xff]
        %v174 = vld [vmem:[%s142 + $0x10] sm:$0xff]
        %v175 = vld [vmem:[%s142 + $0x18] sm:$0xff]
        %v176 = vld [vmem:[%s142 + $0x20] sm:$0xff]
        %v177 = vld [vmem:[%s142 + $0x28] sm:$0xff]
        %v178 = vld [vmem:[%s142 + $0x30] sm:$0xff]
        %v179 = vld [vmem:[%s142 + $0x38] sm:$0xff]
        %v180 = vld [vmem:[%s142 + $0x40] sm:$0xff]
        %v181 = vld [vmem:[%s142 + $0x48] sm:$0xff]
        %v182 = vld [vmem:[%s142 + $0x50] sm:$0xff]
        %v183 = vld [vmem:[%s142 + $0x58] sm:$0xff]
        %v184 = vld [vmem:[%s142 + $0x60] sm:$0xff]
        %v185 = vld [vmem:[%s142 + $0x68] sm:$0xff]
        %v186 = vld [vmem:[%s142 + $0x70] sm:$0xff]
        %v187 = vld [vmem:[%s142 + $0x78] sm:$0xff]
        %vm188 = vcmask 261120
        %v189 = vsel %vm188, %v172, 0.0
        %v190 = vsel %vm188, %v173, 0.0
        %v191 = vadd.f32 %v189, %v190
        %v192 = vsel %vm188, %v174, 0.0
        %v193 = vadd.f32 %v191, %v192
        %v194 = vsel %vm188, %v175, 0.0
        %v195 = vadd.f32 %v193, %v194
        %v196 = vsel %vm188, %v176, 0.0
        %v197 = vadd.f32 %v195, %v196
        %v198 = vsel %vm188, %v177, 0.0
        %v199 = vadd.f32 %v197, %v198
        %v200 = vsel %vm188, %v178, 0.0
        %v201 = vadd.f32 %v199, %v200
        %v202 = vsel %vm188, %v179, 0.0
        %v203 = vadd.f32 %v201, %v202
        %v204 = vsel %vm188, %v180, 0.0
        %v205 = vadd.f32 %v203, %v204
        %v206 = vsel %vm188, %v181, 0.0
        %v207 = vadd.f32 %v205, %v206
        %v208 = vsel %vm188, %v182, 0.0
        %v209 = vadd.f32 %v207, %v208
        %v210 = vsel %vm188, %v183, 0.0
        %v211 = vadd.f32 %v209, %v210
        %v212 = vsel %vm188, %v184, 0.0
        %v213 = vadd.f32 %v211, %v212
        %v214 = vsel %vm188, %v185, 0.0
        %v215 = vadd.f32 %v213, %v214
        %v216 = vsel %vm188, %v186, 0.0
        %v217 = vadd.f32 %v215, %v216
        %v218 = vsel %vm188, %v187, 0.0
        %v219 = vadd.f32 %v217, %v218
        %v220 = vrot.slane %v219, 4
        %v221 = vadd.f32 %v219, %v220
        %v222 = vrot.slane %v221, 2
        %v223 = vadd.f32 %v221, %v222
        %v224 = vrot.slane %v223, 1
        %v225 = vadd.f32 %v223, %v224
        %vm226 = vcmask 253952
        %227 = vst.msk [vmem:[%s168] sm:$0x1] %vm226, %v225
        %v228 = vmul.f32 %v172, %v172
        %v229 = vmul.f32 %v173, %v173
        %v230 = vmul.f32 %v174, %v174
        %v231 = vmul.f32 %v175, %v175
        %v232 = vmul.f32 %v176, %v176
        %v233 = vmul.f32 %v177, %v177
        %v234 = vmul.f32 %v178, %v178
        %v235 = vmul.f32 %v179, %v179
        %v236 = vmul.f32 %v180, %v180
        %v237 = vmul.f32 %v181, %v181
        %v238 = vmul.f32 %v182, %v182
        %v239 = vmul.f32 %v183, %v183
        %v240 = vmul.f32 %v184, %v184
        %v241 = vmul.f32 %v185, %v185
        %v242 = vmul.f32 %v186, %v186
        %v243 = vmul.f32 %v187, %v187
        %v244 = vsel %vm188, %v228, 0.0
        %v245 = vsel %vm188, %v229, 0.0
        %v246 = vadd.f32 %v244, %v245
        %v247 = vsel %vm188, %v230, 0.0
        %v248 = vadd.f32 %v246, %v247
        %v249 = vsel %vm188, %v231, 0.0
        %v250 = vadd.f32 %v248, %v249
        %v251 = vsel %vm188, %v232, 0.0
        %v252 = vadd.f32 %v250, %v251
        %v253 = vsel %vm188, %v233, 0.0
        %v254 = vadd.f32 %v252, %v253
        %v255 = vsel %vm188, %v234, 0.0
        %v256 = vadd.f32 %v254, %v255
        %v257 = vsel %vm188, %v235, 0.0
        %v258 = vadd.f32 %v256, %v257
        %v259 = vsel %vm188, %v236, 0.0
        %v260 = vadd.f32 %v258, %v259
        %v261 = vsel %vm188, %v237, 0.0
        %v262 = vadd.f32 %v260, %v261
        %v263 = vsel %vm188, %v238, 0.0
        %v264 = vadd.f32 %v262, %v263
        %v265 = vsel %vm188, %v239, 0.0
        %v266 = vadd.f32 %v264, %v265
        %v267 = vsel %vm188, %v240, 0.0
        %v268 = vadd.f32 %v266, %v267
        %v269 = vsel %vm188, %v241, 0.0
        %v270 = vadd.f32 %v268, %v269
        %v271 = vsel %vm188, %v242, 0.0
        %v272 = vadd.f32 %v270, %v271
        %v273 = vsel %vm188, %v243, 0.0
        %v274 = vadd.f32 %v272, %v273
        %v275 = vrot.slane %v274, 4
        %v276 = vadd.f32 %v274, %v275
        %v277 = vrot.slane %v276, 2
        %v278 = vadd.f32 %v276, %v277
        %v279 = vrot.slane %v278, 1
        %v280 = vadd.f32 %v278, %v279
        %281 = vst.msk [vmem:[%s171] sm:$0x1] %vm226, %v280
        %p282 = scmp.lt.s32.totalorder %s17, 3
        %s283 = scalar_select %p282, %s17, 3
        %s284 = scalar_lea.vmem %s1, %s283
        %p285 = scmp.lt.s32.totalorder %s17, 3
        %s286 = scalar_select %p285, %s17, 3
        %s287 = scalar_lea.vmem %s2, %s286
        // Predicated region
        $region29: #{bottleneck_forward.4} parent=23 // pred_check
          %p288 = pneg %p61
        $region30: #{bottleneck_forward.4} parent=23 // pred_check_branch
          %290 = sbr.rel (%p288) target = $region32
        $region31: #{bottleneck_forward.4} parent=23 // pred_region
          _
        $region32: #{bottleneck_forward.4} parent=23 // pred_fallthru
          _
        // Predicated region
        $region33: #{bottleneck_forward.4} parent=23 // pred_check
          %p291 = pneg %p87
        $region34: #{bottleneck_forward.4} parent=23 // pred_check_branch
          %293 = sbr.rel (%p291) target = $region36
        $region35: #{bottleneck_forward.4} parent=23 // pred_region
          _
        $region36: #{bottleneck_forward.4} parent=23 // pred_fallthru
          _
      $region24: #{bottleneck_forward.4} parent=5 // pred_fallthru
        _
      %p294 = scmp.le.s32.totalorder 2, %s12
      // Predicated region
      $region37: #{bottleneck_forward.4} parent=5 // pred_check
        %p295 = pneg %p294
      $region38: #{bottleneck_forward.4} parent=5 // pred_check_branch
        %297 = sbr.rel (%p295) target = $region40
      $region39: #{bottleneck_forward.4} parent=5 // pred_region
        %s298 = ssub.s32 %s12, 2
        // Predicated region
        $region41: #{bottleneck_forward.4} parent=39 // pred_check
          %p299 = pneg %p67
        $region42: #{bottleneck_forward.4} parent=39 // pred_check_branch
          %301 = sbr.rel (%p299) target = $region44
        $region43: #{bottleneck_forward.4} parent=39 // pred_region
          %p302 = scmp.lt.s32.totalorder %s18, 3
          %s303 = scalar_select %p302, %s18, 3
          %s304 = scalar_lea.vmem %s1, %s303
        $region44: #{bottleneck_forward.4} parent=39 // pred_fallthru
          _
        // Predicated region
        $region45: #{bottleneck_forward.4} parent=39 // pred_check
          %p305 = pneg %p93
        $region46: #{bottleneck_forward.4} parent=39 // pred_check_branch
          %307 = sbr.rel (%p305) target = $region48
        $region47: #{bottleneck_forward.4} parent=39 // pred_region
          %p308 = scmp.lt.s32.totalorder %s18, 3
          %s309 = scalar_select %p308, %s18, 3
          %s310 = scalar_lea.vmem %s2, %s309
        $region48: #{bottleneck_forward.4} parent=39 // pred_fallthru
          _
      $region40: #{bottleneck_forward.4} parent=5 // pred_fallthru
        _
    $region6: #{bottleneck_forward.4} parent=1 // loop_footer
      %s16 = sadd.s32 1, %s12
    $region7: #{bottleneck_forward.4} parent=1 // loop_footer_branch
      %11 = sbr.rel target = $region3
    $region8: #{bottleneck_forward.4} parent=1 // loop_exit
      _
    %311 = vsyncpa [#allocation3], 1
    %s312 = scalar_lea.sflag [#allocation3], 1
    %313 = vsyncpa %s312, 1

// kernel: bottleneck_forward.5
$region0: #{bottleneck_forward.5}
  #allocation0 [shape = 'u32[]', space=smem, size = 0x4, offset = 0x4, fixed_abs, tag = 'smem constant byte address 0x4 - core index']
  #allocation1 [shape = 'u32[72,128]{1,0:T(1,128)}', space=vmem, size = 0x9000, scoped, tag = 'internal scratch']
  %s0 = inlined_call_operand.hbm [shape: f32[512,32], index: 0, kind: input, shape index: {}]
  %s1 = inlined_call_operand.vmem [shape: f32[1,32], index: 1, kind: input, shape index: {}]
  %s2 = inlined_call_operand.vmem [shape: f32[1,32], index: 2, kind: input, shape index: {}]
  %s3 = inlined_call_operand.vmem [shape: f32[32,8], index: 3, kind: input, shape index: {}]
  %s4 = inlined_call_operand.vmem [shape: f32[1,8], index: 4, kind: input, shape index: {}]
  %s5 = inlined_call_operand.vmem [shape: f32[512,8], index: 5, kind: output, shape index: {0}]
  %s6 = inlined_call_operand.vmem [shape: f32[4,1,8], index: 6, kind: output, shape index: {1}]
  %s7 = inlined_call_operand.vmem [shape: f32[4,1,8], index: 7, kind: output, shape index: {2}]
  %8 = xla_tuple %s5, %s6, %s7
  %s9 = sld [smem:[#allocation0]]
  $region73: #{bottleneck_forward.5} parent=0
    _
  %s11 = ssub.s32 1, %s9
  %s12 = scalar_select 0, %s11, %s9
  $region1: #{bottleneck_forward.5} parent=0
    #allocation2 [shape = 'u8[131072]{0}', space=vmem, size = 0x20000, scoped, tag = 'input window, operand 0']
    #allocation3 [shape = 's32[2]{0}', space=sflag, size = 0x8, scoped, tag = 'scoped memory for bottleneck_forward.5']
    %13 = vsyncpa [#allocation3], 0
    %s14 = scalar_lea.sflag [#allocation3], 1
    %15 = vsyncpa %s14, 0
    loop: start=0, step=1, limit=6
    $region2: #{bottleneck_forward.5} parent=1 // loop_pre_header
      _
    $region3: #{bottleneck_forward.5} parent=1 // loop_header
      %s17 = sphi 0, %s21
      %p18 = scmp.ge.s32.totalorder %s17, 6
      %s27 = sphi 0, %s29
      %s30 = sphi 0, %s27
      %s31 = sphi 0, %s30
      %s47 = sphi 0, %s31
      %s51 = sphi 0, %s51
      %s53 = sphi 0, %s51
      %s54 = sphi 0, %s53
      %s68 = sphi 0, %s54
      %s72 = sphi 0, %s72
      %s74 = sphi 0, %s72
      %s75 = sphi 0, %s74
      %s89 = sphi 0, %s75
      %s93 = sphi 0, %s93
      %s95 = sphi 0, %s93
      %s96 = sphi 0, %s95
      %s110 = sphi 0, %s96
      %s114 = sphi 0, %s114
      %s116 = sphi 0, %s114
      %s117 = sphi 0, %s116
      %s131 = sphi 0, %s117
      %s137 = sphi 0, %s139
      %s140 = sphi 0, %s137
      %s141 = sphi 0, %s140
      %s157 = sphi 0, %s141
      %s163 = sphi 0, %s165
      %s166 = sphi 0, %s163
      %s167 = sphi 0, %s166
      %s183 = sphi 0, %s167
      %s189 = sphi 0, %s191
      %s192 = sphi 0, %s189
      %s193 = sphi 0, %s192
      %s209 = sphi 0, %s193
    $region4: #{bottleneck_forward.5} parent=1 // loop_header_branch
      %20 = sbr.rel (%p18) target = $region8
    $region5: #{bottleneck_forward.5} parent=1 // loop_body
      %s22 = ssub.s32 %s17, 1
      %s23 = ssub.s32 %s17, 2
      %s24 = sadd.s32 %s17, 1
      %s25 = ssub.s32 %s17, %s24
      %p26 = scmp.eq.s32.totalorder %s25, 0
      %s28 = sadd.s32 %s27, 1
      %s29 = scalar_select %p26, %s27, %s28
      %p32 = pneg %p26
      %p33 = scmp.eq.s32.totalorder %s17, 3
      %p34 = por %p32, %p33
      %p35 = scmp.ne.s32.totalorder %s27, %s30
      %p36 = scmp.eq.s32.totalorder %s17, 0
      %p37 = por %p35, %p36
      %p38 = scmp.ne.s32.totalorder %s27, %s30
      %p39 = scmp.eq.s32.totalorder %s22, 3
      %p40 = por %p38, %p39
      %p41 = scmp.ne.s32.totalorder %s30, %s31
      %p42 = scmp.eq.s32.totalorder %s22, 0
      %p43 = por %p41, %p42
      %p44 = scmp.ne.s32.totalorder %s30, %s31
      %p45 = scmp.eq.s32.totalorder %s23, 3
      %p46 = por %p44, %p45
      %p48 = scmp.ne.s32.totalorder %s31, %s47
      %p49 = scmp.eq.s32.totalorder %s23, 0
      %p50 = por %p48, %p49
      %s52 = sadd.s32 %s51, 1
      %p55 = scmp.eq.s32.totalorder %s17, 3
      %p56 = scmp.ne.s32.totalorder %s51, %s53
      %p57 = scmp.eq.s32.totalorder %s17, 0
      %p58 = por %p56, %p57
      %p59 = scmp.ne.s32.totalorder %s51, %s53
      %p60 = scmp.eq.s32.totalorder %s22, 3
      %p61 = por %p59, %p60
      %p62 = scmp.ne.s32.totalorder %s53, %s54
      %p63 = scmp.eq.s32.totalorder %s22, 0
      %p64 = por %p62, %p63
      %p65 = scmp.ne.s32.totalorder %s53, %s54
      %p66 = scmp.eq.s32.totalorder %s23, 3
      %p67 = por %p65, %p66
      %p69 = scmp.ne.s32.totalorder %s54, %s68
      %p70 = scmp.eq.s32.totalorder %s23, 0
      %p71 = por %p69, %p70
      %s73 = sadd.s32 %s72, 1
      %p76 = scmp.eq.s32.totalorder %s17, 3
      %p77 = scmp.ne.s32.totalorder %s72, %s74
      %p78 = scmp.eq.s32.totalorder %s17, 0
      %p79 = por %p77, %p78
      %p80 = scmp.ne.s32.totalorder %s72, %s74
      %p81 = scmp.eq.s32.totalorder %s22, 3
      %p82 = por %p80, %p81
      %p83 = scmp.ne.s32.totalorder %s74, %s75
      %p84 = scmp.eq.s32.totalorder %s22, 0
      %p85 = por %p83, %p84
      %p86 = scmp.ne.s32.totalorder %s74, %s75
      %p87 = scmp.eq.s32.totalorder %s23, 3
      %p88 = por %p86, %p87
      %p90 = scmp.ne.s32.totalorder %s75, %s89
      %p91 = scmp.eq.s32.totalorder %s23, 0
      %p92 = por %p90, %p91
      %s94 = sadd.s32 %s93, 1
      %p97 = scmp.eq.s32.totalorder %s17, 3
      %p98 = scmp.ne.s32.totalorder %s93, %s95
      %p99 = scmp.eq.s32.totalorder %s17, 0
      %p100 = por %p98, %p99
      %p101 = scmp.ne.s32.totalorder %s93, %s95
      %p102 = scmp.eq.s32.totalorder %s22, 3
      %p103 = por %p101, %p102
      %p104 = scmp.ne.s32.totalorder %s95, %s96
      %p105 = scmp.eq.s32.totalorder %s22, 0
      %p106 = por %p104, %p105
      %p107 = scmp.ne.s32.totalorder %s95, %s96
      %p108 = scmp.eq.s32.totalorder %s23, 3
      %p109 = por %p107, %p108
      %p111 = scmp.ne.s32.totalorder %s96, %s110
      %p112 = scmp.eq.s32.totalorder %s23, 0
      %p113 = por %p111, %p112
      %s115 = sadd.s32 %s114, 1
      %p118 = scmp.eq.s32.totalorder %s17, 3
      %p119 = scmp.ne.s32.totalorder %s114, %s116
      %p120 = scmp.eq.s32.totalorder %s17, 0
      %p121 = por %p119, %p120
      %p122 = scmp.ne.s32.totalorder %s114, %s116
      %p123 = scmp.eq.s32.totalorder %s22, 3
      %p124 = por %p122, %p123
      %p125 = scmp.ne.s32.totalorder %s116, %s117
      %p126 = scmp.eq.s32.totalorder %s22, 0
      %p127 = por %p125, %p126
      %p128 = scmp.ne.s32.totalorder %s116, %s117
      %p129 = scmp.eq.s32.totalorder %s23, 3
      %p130 = por %p128, %p129
      %p132 = scmp.ne.s32.totalorder %s117, %s131
      %p133 = scmp.eq.s32.totalorder %s23, 0
      %p134 = por %p132, %p133
      %s135 = ssub.s32 %s17, %s24
      %p136 = scmp.eq.s32.totalorder %s135, 0
      %s138 = sadd.s32 %s137, 1
      %s139 = scalar_select %p136, %s137, %s138
      %p142 = pneg %p136
      %p143 = scmp.eq.s32.totalorder %s17, 3
      %p144 = por %p142, %p143
      %p145 = scmp.ne.s32.totalorder %s137, %s140
      %p146 = scmp.eq.s32.totalorder %s17, 0
      %p147 = por %p145, %p146
      %p148 = scmp.ne.s32.totalorder %s137, %s140
      %p149 = scmp.eq.s32.totalorder %s22, 3
      %p150 = por %p148, %p149
      %p151 = scmp.ne.s32.totalorder %s140, %s141
      %p152 = scmp.eq.s32.totalorder %s22, 0
      %p153 = por %p151, %p152
      %p154 = scmp.ne.s32.totalorder %s140, %s141
      %p155 = scmp.eq.s32.totalorder %s23, 3
      %p156 = por %p154, %p155
      %p158 = scmp.ne.s32.totalorder %s141, %s157
      %p159 = scmp.eq.s32.totalorder %s23, 0
      %p160 = por %p158, %p159
      %s161 = ssub.s32 %s17, %s24
      %p162 = scmp.eq.s32.totalorder %s161, 0
      %s164 = sadd.s32 %s163, 1
      %s165 = scalar_select %p162, %s163, %s164
      %p168 = pneg %p162
      %p169 = scmp.eq.s32.totalorder %s17, 3
      %p170 = por %p168, %p169
      %p171 = scmp.ne.s32.totalorder %s163, %s166
      %p172 = scmp.eq.s32.totalorder %s17, 0
      %p173 = por %p171, %p172
      %p174 = scmp.ne.s32.totalorder %s163, %s166
      %p175 = scmp.eq.s32.totalorder %s22, 3
      %p176 = por %p174, %p175
      %p177 = scmp.ne.s32.totalorder %s166, %s167
      %p178 = scmp.eq.s32.totalorder %s22, 0
      %p179 = por %p177, %p178
      %p180 = scmp.ne.s32.totalorder %s166, %s167
      %p181 = scmp.eq.s32.totalorder %s23, 3
      %p182 = por %p180, %p181
      %p184 = scmp.ne.s32.totalorder %s167, %s183
      %p185 = scmp.eq.s32.totalorder %s23, 0
      %p186 = por %p184, %p185
      %s187 = ssub.s32 %s17, %s24
      %p188 = scmp.eq.s32.totalorder %s187, 0
      %s190 = sadd.s32 %s189, 1
      %s191 = scalar_select %p188, %s189, %s190
      %p194 = pneg %p188
      %p195 = scmp.eq.s32.totalorder %s17, 3
      %p196 = por %p194, %p195
      %p197 = scmp.ne.s32.totalorder %s189, %s192
      %p198 = scmp.eq.s32.totalorder %s17, 0
      %p199 = por %p197, %p198
      %p200 = scmp.ne.s32.totalorder %s189, %s192
      %p201 = scmp.eq.s32.totalorder %s22, 3
      %p202 = por %p200, %p201
      %p203 = scmp.ne.s32.totalorder %s192, %s193
      %p204 = scmp.eq.s32.totalorder %s22, 0
      %p205 = por %p203, %p204
      %p206 = scmp.ne.s32.totalorder %s192, %s193
      %p207 = scmp.eq.s32.totalorder %s23, 3
      %p208 = por %p206, %p207
      %p210 = scmp.ne.s32.totalorder %s193, %s209
      %p211 = scmp.eq.s32.totalorder %s23, 0
      %p212 = por %p210, %p211
      %p213 = scmp.le.s32.totalorder 1, %s17
      %p214 = scmp.lt.s32.totalorder %s17, 5
      %p215 = pnand %p213, %p214
      %p216 = pneg %p215
      // Predicated region
      $region9: #{bottleneck_forward.5} parent=5 // pred_check
        _
      $region10: #{bottleneck_forward.5} parent=5 // pred_check_branch
        %218 = sbr.rel (%p215) target = $region12
      $region11: #{bottleneck_forward.5} parent=5 // pred_region
        %s219 = ssub.s32 %s17, 1
        // Predicated region
        $region13: #{bottleneck_forward.5} parent=11 // pred_check
          %p220 = pneg %p64
        $region14: #{bottleneck_forward.5} parent=11 // pred_check_branch
          %222 = sbr.rel (%p220) target = $region16
        $region15: #{bottleneck_forward.5} parent=11 // pred_region
          _
        $region16: #{bottleneck_forward.5} parent=11 // pred_fallthru
          _
        // Predicated region
        $region17: #{bottleneck_forward.5} parent=11 // pred_check
          %p223 = pneg %p85
        $region18: #{bottleneck_forward.5} parent=11 // pred_check_branch
          %225 = sbr.rel (%p223) target = $region20
        $region19: #{bottleneck_forward.5} parent=11 // pred_region
          _
        $region20: #{bottleneck_forward.5} parent=11 // pred_fallthru
          _
        // Predicated region
        $region21: #{bottleneck_forward.5} parent=11 // pred_check
          %p226 = pneg %p106
        $region22: #{bottleneck_forward.5} parent=11 // pred_check_branch
          %228 = sbr.rel (%p226) target = $region24
        $region23: #{bottleneck_forward.5} parent=11 // pred_region
          _
        $region24: #{bottleneck_forward.5} parent=11 // pred_fallthru
          _
        // Predicated region
        $region25: #{bottleneck_forward.5} parent=11 // pred_check
          %p229 = pneg %p127
        $region26: #{bottleneck_forward.5} parent=11 // pred_check_branch
          %231 = sbr.rel (%p229) target = $region28
        $region27: #{bottleneck_forward.5} parent=11 // pred_region
          _
        $region28: #{bottleneck_forward.5} parent=11 // pred_fallthru
          _
      $region12: #{bottleneck_forward.5} parent=5 // pred_fallthru
        _
      %p232 = scmp.lt.s32.totalorder %s17, 4
      // Predicated region
      $region29: #{bottleneck_forward.5} parent=5 // pred_check
        %p233 = pneg %p232
      $region30: #{bottleneck_forward.5} parent=5 // pred_check_branch
        %235 = sbr.rel (%p233) target = $region32
      $region31: #{bottleneck_forward.5} parent=5 // pred_region
        // Predicated region
        $region33: #{bottleneck_forward.5} parent=31 // pred_check
          %p236 = pneg %p37
        $region34: #{bottleneck_forward.5} parent=31 // pred_check_branch
          %238 = sbr.rel (%p236) target = $region36
        $region35: #{bottleneck_forward.5} parent=31 // pred_region
          %s239 = sand.u32 %s27, 1
          %s240 = scalar_lea.sflag [#allocation3], %s239
          %s241 = sand.u32 %s27, 1
          %s242 = smul.addr %s241, 128
          %s243 = scalar_lea.vmem [#allocation2], %s242
          %s244 = smul.u32 16, %s17
          %246 = vsyncadd %s240, 0
          %s247 = smul.addr %s244, 8
          %s248 = scalar_lea.hbm %s0, %s247
          %s249 = sshll.u32 %s248, 4
          %s250 = int_to_ptr.hbm [resolvable:$true] %s249
          %s251 = sshll.u32 %s243, 4
          %s252 = int_to_ptr.vmem [resolvable:$true] %s251
          %257 = dma.hbm_to_vmem [thread:$0]  %s250, 2048, %s252, %s240, 128, 128, 8
        $region36: #{bottleneck_forward.5} parent=31 // pred_fallthru
          _
      $region32: #{bottleneck_forward.5} parent=5 // pred_fallthru
        _
      %p258 = scmp.le.s32.totalorder 1, %s17
      %p259 = scmp.lt.s32.totalorder %s17, 5
      %p260 = pnand %p258, %p259
      %p261 = pneg %p260
      // Predicated region
      $region37: #{bottleneck_forward.5} parent=5 // pred_check
        _
      $region38: #{bottleneck_forward.5} parent=5 // pred_check_branch
        %263 = sbr.rel (%p260) target = $region40
      $region39: #{bottleneck_forward.5} parent=5 // pred_region
        %s264 = ssub.s32 %s17, 1
        %s265 = sand.u32 %s30, 1
        %s266 = scalar_lea.sflag [#allocation3], %s265
        %s267 = sand.u32 %s30, 1
        %s268 = smul.addr %s267, 128
        %s269 = scalar_lea.vmem [#allocation2], %s268
        // Predicated region
        $region41: #{bottleneck_forward.5} parent=39 // pred_check
          %p270 = pneg %p43
        $region42: #{bottleneck_forward.5} parent=39 // pred_check_branch
          %272 = sbr.rel (%p270) target = $region44
        $region43: #{bottleneck_forward.5} parent=39 // pred_region
          %274 = dma.done %s266, 2048
        $region44: #{bottleneck_forward.5} parent=39 // pred_fallthru
          _
        %s275 = sand.u32 %s30, 1
        %s276 = scalar_lea.sflag [#allocation3], %s275
        %s277 = sand.u32 %s30, 1
        %s278 = smul.addr %s277, 128
        %s279 = scalar_lea.vmem [#allocation2], %s278
        %p280 = pneg %p43
        %p281 = pneg %p40
        %p282 = pneg %p64
        %p283 = pneg %p61
        %p284 = pneg %p85
        %p285 = pneg %p82
        %p286 = pneg %p106
        %p287 = pneg %p103
        %p288 = pneg %p127
        %p289 = pneg %p124
        %p290 = pneg %p153
        %p291 = pneg %p150
        %s292 = smul.u32 16, %s22
        %p293 = scmp.lt.s32.totalorder %s292, 63
        %s294 = scalar_select %p293, %s292, 63
        %s295 = smul.addr %s294, 8
        %s296 = scalar_lea.vmem %s5, %s295
        %p297 = pneg %p179
        %p298 = pneg %p176
        %p299 = scmp.lt.s32.totalorder %s22, 3
        %s300 = scalar_select %p299, %s22, 3
        %s301 = scalar_lea.vmem %s6, %s300
        %p302 = pneg %p205
        %p303 = pneg %p202
        %p304 = scmp.lt.s32.totalorder %s22, 3
        %s305 = scalar_select %p304, %s22, 3
        %s306 = scalar_lea.vmem %s7, %s305
        %s307 = smul.u32 16, %s22
        %s308 = smul.u32 16, %s22
        %p309 = scmp.lt.s32.totalorder %s308, 63
        %s310 = scalar_select %p309, %s308, 63
        %s311 = smul.addr %s310, 8
        %s312 = scalar_lea.vmem %s5, %s311
        %s313 = smul.u32 16, %s22
        %p314 = scmp.lt.s32.totalorder %s22, 3
        %s315 = scalar_select %p314, %s22, 3
        %s316 = scalar_lea.vmem %s6, %s315
        %p317 = scmp.lt.s32.totalorder %s22, 3
        %s318 = scalar_select %p317, %s22, 3
        %s319 = scalar_lea.vmem %s7, %s318
        %v320 = vld [vmem:[%s269] sm:$0xff]
        %v321 = vld [vmem:[%s269 + $0x8] sm:$0xff]
        %v322 = vld [vmem:[%s269 + $0x10] sm:$0xff]
        %v323 = vld [vmem:[%s269 + $0x18] sm:$0xff]
        %v324 = vld [vmem:[%s269 + $0x20] sm:$0xff]
        %v325 = vld [vmem:[%s269 + $0x28] sm:$0xff]
        %v326 = vld [vmem:[%s269 + $0x30] sm:$0xff]
        %v327 = vld [vmem:[%s269 + $0x38] sm:$0xff]
        %v328 = vld [vmem:[%s269 + $0x40] sm:$0xff]
        %v329 = vld [vmem:[%s269 + $0x48] sm:$0xff]
        %v330 = vld [vmem:[%s269 + $0x50] sm:$0xff]
        %v331 = vld [vmem:[%s269 + $0x58] sm:$0xff]
        %v332 = vld [vmem:[%s269 + $0x60] sm:$0xff]
        %v333 = vld [vmem:[%s269 + $0x68] sm:$0xff]
        %v334 = vld [vmem:[%s269 + $0x70] sm:$0xff]
        %v335 = vld [vmem:[%s269 + $0x78] sm:$0xff]
        %v336 = vld [vmem:[%s1] sm:$0x1]
        %v338 = vperm.slane %v336, 0
        %v340 = vmul.f32 %v320, %v338
        %v341 = vmul.f32 %v321, %v338
        %v342 = vmul.f32 %v322, %v338
        %v343 = vmul.f32 %v323, %v338
        %v344 = vmul.f32 %v324, %v338
        %v345 = vmul.f32 %v325, %v338
        %v346 = vmul.f32 %v326, %v338
        %v347 = vmul.f32 %v327, %v338
        %v348 = vmul.f32 %v328, %v338
        %v349 = vmul.f32 %v329, %v338
        %v350 = vmul.f32 %v330, %v338
        %v351 = vmul.f32 %v331, %v338
        %v352 = vmul.f32 %v332, %v338
        %v353 = vmul.f32 %v333, %v338
        %v354 = vmul.f32 %v334, %v338
        %v355 = vmul.f32 %v335, %v338
        %v356 = vld [vmem:[%s2] sm:$0x1]
        %v358 = vperm.slane %v356, 0
        %v360 = vadd.f32 %v340, %v358
        %v361 = vadd.f32 %v341, %v358
        %v362 = vadd.f32 %v342, %v358
        %v363 = vadd.f32 %v343, %v358
        %v364 = vadd.f32 %v344, %v358
        %v365 = vadd.f32 %v345, %v358
        %v366 = vadd.f32 %v346, %v358
        %v367 = vadd.f32 %v347, %v358
        %v368 = vadd.f32 %v348, %v358
        %v369 = vadd.f32 %v349, %v358
        %v370 = vadd.f32 %v350, %v358
        %v371 = vadd.f32 %v351, %v358
        %v372 = vadd.f32 %v352, %v358
        %v373 = vadd.f32 %v353, %v358
        %v374 = vadd.f32 %v354, %v358
        %v375 = vadd.f32 %v355, %v358
        %v376 = vmax.f32 %v360, 0.0
        %v377 = vmax.f32 %v361, 0.0
        %v378 = vmax.f32 %v362, 0.0
        %v379 = vmax.f32 %v363, 0.0
        %v380 = vmax.f32 %v364, 0.0
        %v381 = vmax.f32 %v365, 0.0
        %v382 = vmax.f32 %v366, 0.0
        %v383 = vmax.f32 %v367, 0.0
        %v384 = vmax.f32 %v368, 0.0
        %v385 = vmax.f32 %v369, 0.0
        %v386 = vmax.f32 %v370, 0.0
        %v387 = vmax.f32 %v371, 0.0
        %v388 = vmax.f32 %v372, 0.0
        %v389 = vmax.f32 %v373, 0.0
        %v390 = vmax.f32 %v374, 0.0
        %v391 = vmax.f32 %v375, 0.0
        %v392 = vld [vmem:[%s3] sm:$0xff]
        %v393 = vld [vmem:[%s3 + $0x8] sm:$0xff]
        %v394 = vld [vmem:[%s3 + $0x10] sm:$0xff]
        %v395 = vld [vmem:[%s3 + $0x18] sm:$0xff]
        %v396 = vld [vmem:[%s4] sm:$0x1]
        %v398 = vperm.slane %v396, 0
        %vm400 = vcmask 261120
        %v402 = vsel %vm400, %v376, 0
        %v405 = vsel %vm400, %v377, 0
        %v408 = vsel %vm400, %v378, 0
        %v411 = vsel %vm400, %v379, 0
        %v414 = vsel %vm400, %v380, 0
        %v417 = vsel %vm400, %v381, 0
        %v420 = vsel %vm400, %v382, 0
        %v423 = vsel %vm400, %v383, 0
        %v426 = vsel %vm400, %v384, 0
        %v429 = vsel %vm400, %v385, 0
        %v432 = vsel %vm400, %v386, 0
        %v435 = vsel %vm400, %v387, 0
        %v438 = vsel %vm400, %v388, 0
        %v441 = vsel %vm400, %v389, 0
        %v444 = vsel %vm400, %v390, 0
        %v447 = vsel %vm400, %v391, 0
        %449 = vmatpush.msra.mxu0 0.0
        %450 = vmatpush.msra.mxu0 0.0
        %451 = vmatpush.msra.mxu0 0.0
        %452 = vmatpush.msra.mxu0 0.0
        %453 = vmatpush.msra.mxu0 0.0
        %454 = vmatpush.msra.mxu0 0.0
        %455 = vmatpush.msra.mxu0 0.0
        %456 = vmatpush.msra.mxu0 0.0
        %457 = vmatpush.msra.mxu0 0.0
        %458 = vmatpush.msra.mxu0 0.0
        %459 = vmatpush.msra.mxu0 0.0
        %460 = vmatpush.msra.mxu0 0.0
        %461 = vmatpush.msra.mxu0 %v395
        %462 = vmatpush.msra.mxu0 %v394
        %463 = vmatpush.msra.mxu0 %v393
        %464 = vmatpush.msra.mxu0 %v392
        %465 = vmatmul.f32.gmra.mxu0 %v402
        %v466 = vpop.f32.mrf.mxu0
        %v467 = vadd.f32 %v398, %v466
        %468 = vmatmul.f32.gmra.mxu0 %v405
        %v469 = vpop.f32.mrf.mxu0
        %v470 = vadd.f32 %v398, %v469
        %471 = vmatmul.f32.gmra.mxu0 %v408
        %v472 = vpop.f32.mrf.mxu0
        %v473 = vadd.f32 %v398, %v472
        %474 = vmatmul.f32.gmra.mxu0 %v411
        %v475 = vpop.f32.mrf.mxu0
        %v476 = vadd.f32 %v398, %v475
        %477 = vmatmul.f32.gmra.mxu0 %v414
        %v478 = vpop.f32.mrf.mxu0
        %v479 = vadd.f32 %v398, %v478
        %480 = vmatmul.f32.gmra.mxu0 %v417
        %v481 = vpop.f32.mrf.mxu0
        %v482 = vadd.f32 %v398, %v481
        %483 = vmatmul.f32.gmra.mxu0 %v420
        %v484 = vpop.f32.mrf.mxu0
        %v485 = vadd.f32 %v398, %v484
        %486 = vmatmul.f32.gmra.mxu0 %v423
        %v487 = vpop.f32.mrf.mxu0
        %v488 = vadd.f32 %v398, %v487
        %489 = vmatmul.f32.gmra.mxu0 %v426
        %v490 = vpop.f32.mrf.mxu0
        %v491 = vadd.f32 %v398, %v490
        %492 = vmatmul.f32.gmra.mxu0 %v429
        %v493 = vpop.f32.mrf.mxu0
        %v494 = vadd.f32 %v398, %v493
        %495 = vmatmul.f32.gmra.mxu0 %v432
        %v496 = vpop.f32.mrf.mxu0
        %v497 = vadd.f32 %v398, %v496
        %498 = vmatmul.f32.gmra.mxu0 %v435
        %v499 = vpop.f32.mrf.mxu0
        %v500 = vadd.f32 %v398, %v499
        %501 = vmatmul.f32.gmra.mxu0 %v438
        %v502 = vpop.f32.mrf.mxu0
        %v503 = vadd.f32 %v398, %v502
        %504 = vmatmul.f32.gmra.mxu0 %v441
        %v505 = vpop.f32.mrf.mxu0
        %v506 = vadd.f32 %v398, %v505
        %507 = vmatmul.f32.gmra.mxu0 %v444
        %v508 = vpop.f32.mrf.mxu0
        %v509 = vadd.f32 %v398, %v508
        %510 = vmatmul.f32.gmra.mxu0 %v447
        %v511 = vpop.f32.mrf.mxu0
        %v512 = vadd.f32 %v398, %v511
        %513 = vdwg.mxu0
        %vm514 = vcmask 64512
        %515 = vst.msk [vmem:[%s312] sm:$0xff] %vm514, %v467
        %516 = vst.msk [vmem:[%s312 + $0x8] sm:$0xff] %vm514, %v470
        %517 = vst.msk [vmem:[%s312 + $0x10] sm:$0xff] %vm514, %v473
        %518 = vst.msk [vmem:[%s312 + $0x18] sm:$0xff] %vm514, %v476
        %519 = vst.msk [vmem:[%s312 + $0x20] sm:$0xff] %vm514, %v479
        %520 = vst.msk [vmem:[%s312 + $0x28] sm:$0xff] %vm514, %v482
        %521 = vst.msk [vmem:[%s312 + $0x30] sm:$0xff] %vm514, %v485
        %522 = vst.msk [vmem:[%s312 + $0x38] sm:$0xff] %vm514, %v488
        %523 = vst.msk [vmem:[%s312 + $0x40] sm:$0xff] %vm514, %v491
        %524 = vst.msk [vmem:[%s312 + $0x48] sm:$0xff] %vm514, %v494
        %525 = vst.msk [vmem:[%s312 + $0x50] sm:$0xff] %vm514, %v497
        %526 = vst.msk [vmem:[%s312 + $0x58] sm:$0xff] %vm514, %v500
        %527 = vst.msk [vmem:[%s312 + $0x60] sm:$0xff] %vm514, %v503
        %528 = vst.msk [vmem:[%s312 + $0x68] sm:$0xff] %vm514, %v506
        %529 = vst.msk [vmem:[%s312 + $0x70] sm:$0xff] %vm514, %v509
        %530 = vst.msk [vmem:[%s312 + $0x78] sm:$0xff] %vm514, %v512
        %v531 = vsel %vm514, %v467, 0.0
        %v532 = vsel %vm514, %v470, 0.0
        %v533 = vadd.f32 %v531, %v532
        %v534 = vsel %vm514, %v473, 0.0
        %v535 = vadd.f32 %v533, %v534
        %v536 = vsel %vm514, %v476, 0.0
        %v537 = vadd.f32 %v535, %v536
        %v538 = vsel %vm514, %v479, 0.0
        %v539 = vadd.f32 %v537, %v538
        %v540 = vsel %vm514, %v482, 0.0
        %v541 = vadd.f32 %v539, %v540
        %v542 = vsel %vm514, %v485, 0.0
        %v543 = vadd.f32 %v541, %v542
        %v544 = vsel %vm514, %v488, 0.0
        %v545 = vadd.f32 %v543, %v544
        %v546 = vsel %vm514, %v491, 0.0
        %v547 = vadd.f32 %v545, %v546
        %v548 = vsel %vm514, %v494, 0.0
        %v549 = vadd.f32 %v547, %v548
        %v550 = vsel %vm514, %v497, 0.0
        %v551 = vadd.f32 %v549, %v550
        %v552 = vsel %vm514, %v500, 0.0
        %v553 = vadd.f32 %v551, %v552
        %v554 = vsel %vm514, %v503, 0.0
        %v555 = vadd.f32 %v553, %v554
        %v556 = vsel %vm514, %v506, 0.0
        %v557 = vadd.f32 %v555, %v556
        %v558 = vsel %vm514, %v509, 0.0
        %v559 = vadd.f32 %v557, %v558
        %v560 = vsel %vm514, %v512, 0.0
        %v561 = vadd.f32 %v559, %v560
        %v562 = vrot.slane %v561, 4
        %v563 = vadd.f32 %v561, %v562
        %v564 = vrot.slane %v563, 2
        %v565 = vadd.f32 %v563, %v564
        %v566 = vrot.slane %v565, 1
        %v567 = vadd.f32 %v565, %v566
        %vm568 = vcmask 57344
        %569 = vst.msk [vmem:[%s316] sm:$0x1] %vm568, %v567
        %v570 = vmul.f32 %v467, %v467
        %v571 = vmul.f32 %v470, %v470
        %v572 = vmul.f32 %v473, %v473
        %v573 = vmul.f32 %v476, %v476
        %v574 = vmul.f32 %v479, %v479
        %v575 = vmul.f32 %v482, %v482
        %v576 = vmul.f32 %v485, %v485
        %v577 = vmul.f32 %v488, %v488
        %v578 = vmul.f32 %v491, %v491
        %v579 = vmul.f32 %v494, %v494
        %v580 = vmul.f32 %v497, %v497
        %v581 = vmul.f32 %v500, %v500
        %v582 = vmul.f32 %v503, %v503
        %v583 = vmul.f32 %v506, %v506
        %v584 = vmul.f32 %v509, %v509
        %v585 = vmul.f32 %v512, %v512
        %v586 = vsel %vm514, %v570, 0.0
        %v587 = vsel %vm514, %v571, 0.0
        %v588 = vadd.f32 %v586, %v587
        %v589 = vsel %vm514, %v572, 0.0
        %v590 = vadd.f32 %v588, %v589
        %v591 = vsel %vm514, %v573, 0.0
        %v592 = vadd.f32 %v590, %v591
        %v593 = vsel %vm514, %v574, 0.0
        %v594 = vadd.f32 %v592, %v593
        %v595 = vsel %vm514, %v575, 0.0
        %v596 = vadd.f32 %v594, %v595
        %v597 = vsel %vm514, %v576, 0.0
        %v598 = vadd.f32 %v596, %v597
        %v599 = vsel %vm514, %v577, 0.0
        %v600 = vadd.f32 %v598, %v599
        %v601 = vsel %vm514, %v578, 0.0
        %v602 = vadd.f32 %v600, %v601
        %v603 = vsel %vm514, %v579, 0.0
        %v604 = vadd.f32 %v602, %v603
        %v605 = vsel %vm514, %v580, 0.0
        %v606 = vadd.f32 %v604, %v605
        %v607 = vsel %vm514, %v581, 0.0
        %v608 = vadd.f32 %v606, %v607
        %v609 = vsel %vm514, %v582, 0.0
        %v610 = vadd.f32 %v608, %v609
        %v611 = vsel %vm514, %v583, 0.0
        %v612 = vadd.f32 %v610, %v611
        %v613 = vsel %vm514, %v584, 0.0
        %v614 = vadd.f32 %v612, %v613
        %v615 = vsel %vm514, %v585, 0.0
        %v616 = vadd.f32 %v614, %v615
        %v617 = vrot.slane %v616, 4
        %v618 = vadd.f32 %v616, %v617
        %v619 = vrot.slane %v618, 2
        %v620 = vadd.f32 %v618, %v619
        %v621 = vrot.slane %v620, 1
        %v622 = vadd.f32 %v620, %v621
        %623 = vst.msk [vmem:[%s319] sm:$0x1] %vm568, %v622
        %s624 = smul.u32 16, %s22
        %p625 = scmp.lt.s32.totalorder %s624, 63
        %s626 = scalar_select %p625, %s624, 63
        %s627 = smul.addr %s626, 8
        %s628 = scalar_lea.vmem %s5, %s627
        %p629 = scmp.lt.s32.totalorder %s22, 3
        %s630 = scalar_select %p629, %s22, 3
        %s631 = scalar_lea.vmem %s6, %s630
        %p632 = scmp.lt.s32.totalorder %s22, 3
        %s633 = scalar_select %p632, %s22, 3
        %s634 = scalar_lea.vmem %s7, %s633
        // Predicated region
        $region45: #{bottleneck_forward.5} parent=39 // pred_check
          %p635 = pneg %p150
        $region46: #{bottleneck_forward.5} parent=39 // pred_check_branch
          %637 = sbr.rel (%p635) target = $region48
        $region47: #{bottleneck_forward.5} parent=39 // pred_region
          %s638 = smul.u32 16, %s22
        $region48: #{bottleneck_forward.5} parent=39 // pred_fallthru
          _
        // Predicated region
        $region49: #{bottleneck_forward.5} parent=39 // pred_check
          %p639 = pneg %p176
        $region50: #{bottleneck_forward.5} parent=39 // pred_check_branch
          %641 = sbr.rel (%p639) target = $region52
        $region51: #{bottleneck_forward.5} parent=39 // pred_region
          _
        $region52: #{bottleneck_forward.5} parent=39 // pred_fallthru
          _
        // Predicated region
        $region53: #{bottleneck_forward.5} parent=39 // pred_check
          %p642 = pneg %p202
        $region54: #{bottleneck_forward.5} parent=39 // pred_check_branch
          %644 = sbr.rel (%p642) target = $region56
        $region55: #{bottleneck_forward.5} parent=39 // pred_region
          _
        $region56: #{bottleneck_forward.5} parent=39 // pred_fallthru
          _
      $region40: #{bottleneck_forward.5} parent=5 // pred_fallthru
        _
      %p645 = scmp.le.s32.totalorder 2, %s17
      // Predicated region
      $region57: #{bottleneck_forward.5} parent=5 // pred_check
        %p646 = pneg %p645
      $region58: #{bottleneck_forward.5} parent=5 // pred_check_branch
        %648 = sbr.rel (%p646) target = $region60
      $region59: #{bottleneck_forward.5} parent=5 // pred_region
        %s649 = ssub.s32 %s17, 2
        // Predicated region
        $region61: #{bottleneck_forward.5} parent=59 // pred_check
          %p650 = pneg %p156
        $region62: #{bottleneck_forward.5} parent=59 // pred_check_branch
          %652 = sbr.rel (%p650) target = $region64
        $region63: #{bottleneck_forward.5} parent=59 // pred_region
          %s653 = smul.u32 16, %s23
          %p654 = scmp.lt.s32.totalorder %s653, 63
          %s655 = scalar_select %p654, %s653, 63
          %s656 = smul.addr %s655, 8
          %s657 = scalar_lea.vmem %s5, %s656
        $region64: #{bottleneck_forward.5} parent=59 // pred_fallthru
          _
        // Predicated region
        $region65: #{bottleneck_forward.5} parent=59 // pred_check
          %p658 = pneg %p182
        $region66: #{bottleneck_forward.5} parent=59 // pred_check_branch
          %660 = sbr.rel (%p658) target = $region68
        $region67: #{bottleneck_forward.5} parent=59 // pred_region
          %p661 = scmp.lt.s32.totalorder %s23, 3
          %s662 = scalar_select %p661, %s23, 3
          %s663 = scalar_lea.vmem %s6, %s662
        $region68: #{bottleneck_forward.5} parent=59 // pred_fallthru
          _
        // Predicated region
        $region69: #{bottleneck_forward.5} parent=59 // pred_check
          %p664 = pneg %p208
        $region70: #{bottleneck_forward.5} parent=59 // pred_check_branch
          %666 = sbr.rel (%p664) target = $region72
        $region71: #{bottleneck_forward.5} parent=59 // pred_region
          %p667 = scmp.lt.s32.totalorder %s23, 3
          %s668 = scalar_select %p667, %s23, 3
          %s669 = scalar_lea.vmem %s7, %s668
        $region72: #{bottleneck_forward.5} parent=59 // pred_fallthru
          _
      $region60: #{bottleneck_forward.5} parent=5 // pred_fallthru
        _
    $region6: #{bottleneck_forward.5} parent=1 // loop_footer
      %s21 = sadd.s32 1, %s17
    $region7: #{bottleneck_forward.5} parent=1 // loop_footer_branch
      %16 = sbr.rel target = $region3
    $region8: #{bottleneck_forward.5} parent=1 // loop_exit
      _
    %670 = vsyncpa [#allocation3], 1
    %s671 = scalar_lea.sflag [#allocation3], 1
    %672 = vsyncpa %s671, 1

// kernel: bottleneck_forward.7
$region0: #{bottleneck_forward.7}
  #allocation0 [shape = 'u32[]', space=smem, size = 0x4, offset = 0x4, fixed_abs, tag = 'smem constant byte address 0x4 - core index']
  #allocation1 [shape = 'u32[72,128]{1,0:T(1,128)}', space=vmem, size = 0x9000, scoped, tag = 'internal scratch']
  %s0 = inlined_call_operand.vmem [shape: f32[512,8], index: 0, kind: input, shape index: {}]
  %s1 = inlined_call_operand.vmem [shape: f32[1,8], index: 1, kind: input, shape index: {}]
  %s2 = inlined_call_operand.vmem [shape: f32[1,8], index: 2, kind: input, shape index: {}]
  %s3 = inlined_call_operand.vmem [shape: f32[8,32], index: 3, kind: input, shape index: {}]
  %s4 = inlined_call_operand.vmem [shape: f32[1,32], index: 4, kind: input, shape index: {}]
  %s5 = inlined_call_operand.hbm [shape: f32[512,32], index: 5, kind: input, shape index: {}]
  %s6 = inlined_call_operand.hbm [shape: f32[512,32], index: 6, kind: output, shape index: {}]
  %s7 = sld [smem:[#allocation0]]
  $region61: #{bottleneck_forward.7} parent=0
    _
  %s9 = ssub.s32 1, %s7
  %s10 = scalar_select 0, %s9, %s7
  $region1: #{bottleneck_forward.7} parent=0
    #allocation2 [shape = 'u8[131072]{0}', space=vmem, size = 0x20000, scoped, tag = 'input window, operand 5']
    #allocation3 [shape = 's32[2]{0}', space=sflag, size = 0x8, scoped, tag = 'scoped memory for bottleneck_forward.7']
    #allocation4 [shape = 's32[2]{0}', space=sflag, size = 0x8, scoped, tag = 'scoped memory for bottleneck_forward.7']
    #allocation5 [shape = 'u8[131072]{0}', space=vmem, size = 0x20000, scoped, tag = 'output window, operand 0']
    %11 = vsyncpa [#allocation3], 0
    %s12 = scalar_lea.sflag [#allocation3], 1
    %13 = vsyncpa %s12, 0
    %14 = vsyncpa [#allocation4], 0
    %s15 = scalar_lea.sflag [#allocation4], 1
    %16 = vsyncpa %s15, 0
    loop: start=0, step=1, limit=6
    $region2: #{bottleneck_forward.7} parent=1 // loop_pre_header
      _
    $region3: #{bottleneck_forward.7} parent=1 // loop_header
      %s18 = sphi 0, %s22
      %p19 = scmp.ge.s32.totalorder %s18, 6
      %s28 = sphi 0, %s30
      %s31 = sphi 0, %s28
      %s32 = sphi 0, %s31
      %s48 = sphi 0, %s32
      %s52 = sphi 0, %s52
      %s54 = sphi 0, %s52
      %s55 = sphi 0, %s54
      %s69 = sphi 0, %s55
      %s73 = sphi 0, %s73
      %s75 = sphi 0, %s73
      %s76 = sphi 0, %s75
      %s90 = sphi 0, %s76
      %s94 = sphi 0, %s94
      %s96 = sphi 0, %s94
      %s97 = sphi 0, %s96
      %s111 = sphi 0, %s97
      %s115 = sphi 0, %s115
      %s117 = sphi 0, %s115
      %s118 = sphi 0, %s117
      %s132 = sphi 0, %s118
      %s138 = sphi 0, %s140
      %s141 = sphi 0, %s138
      %s142 = sphi 0, %s141
      %s158 = sphi 0, %s142
      %s164 = sphi 0, %s166
      %s167 = sphi 0, %s164
      %s168 = sphi 0, %s167
      %s184 = sphi 0, %s168
    $region4: #{bottleneck_forward.7} parent=1 // loop_header_branch
      %21 = sbr.rel (%p19) target = $region8
    $region5: #{bottleneck_forward.7} parent=1 // loop_body
      %s23 = ssub.s32 %s18, 1
      %s24 = ssub.s32 %s18, 2
      %s25 = sadd.s32 %s18, 1
      %s26 = ssub.s32 %s18, %s25
      %p27 = scmp.eq.s32.totalorder %s26, 0
      %s29 = sadd.s32 %s28, 1
      %s30 = scalar_select %p27, %s28, %s29
      %p33 = pneg %p27
      %p34 = scmp.eq.s32.totalorder %s18, 3
      %p35 = por %p33, %p34
      %p36 = scmp.ne.s32.totalorder %s28, %s31
      %p37 = scmp.eq.s32.totalorder %s18, 0
      %p38 = por %p36, %p37
      %p39 = scmp.ne.s32.totalorder %s28, %s31
      %p40 = scmp.eq.s32.totalorder %s23, 3
      %p41 = por %p39, %p40
      %p42 = scmp.ne.s32.totalorder %s31, %s32
      %p43 = scmp.eq.s32.totalorder %s23, 0
      %p44 = por %p42, %p43
      %p45 = scmp.ne.s32.totalorder %s31, %s32
      %p46 = scmp.eq.s32.totalorder %s24, 3
      %p47 = por %p45, %p46
      %p49 = scmp.ne.s32.totalorder %s32, %s48
      %p50 = scmp.eq.s32.totalorder %s24, 0
      %p51 = por %p49, %p50
      %s53 = sadd.s32 %s52, 1
      %p56 = scmp.eq.s32.totalorder %s18, 3
      %p57 = scmp.ne.s32.totalorder %s52, %s54
      %p58 = scmp.eq.s32.totalorder %s18, 0
      %p59 = por %p57, %p58
      %p60 = scmp.ne.s32.totalorder %s52, %s54
      %p61 = scmp.eq.s32.totalorder %s23, 3
      %p62 = por %p60, %p61
      %p63 = scmp.ne.s32.totalorder %s54, %s55
      %p64 = scmp.eq.s32.totalorder %s23, 0
      %p65 = por %p63, %p64
      %p66 = scmp.ne.s32.totalorder %s54, %s55
      %p67 = scmp.eq.s32.totalorder %s24, 3
      %p68 = por %p66, %p67
      %p70 = scmp.ne.s32.totalorder %s55, %s69
      %p71 = scmp.eq.s32.totalorder %s24, 0
      %p72 = por %p70, %p71
      %s74 = sadd.s32 %s73, 1
      %p77 = scmp.eq.s32.totalorder %s18, 3
      %p78 = scmp.ne.s32.totalorder %s73, %s75
      %p79 = scmp.eq.s32.totalorder %s18, 0
      %p80 = por %p78, %p79
      %p81 = scmp.ne.s32.totalorder %s73, %s75
      %p82 = scmp.eq.s32.totalorder %s23, 3
      %p83 = por %p81, %p82
      %p84 = scmp.ne.s32.totalorder %s75, %s76
      %p85 = scmp.eq.s32.totalorder %s23, 0
      %p86 = por %p84, %p85
      %p87 = scmp.ne.s32.totalorder %s75, %s76
      %p88 = scmp.eq.s32.totalorder %s24, 3
      %p89 = por %p87, %p88
      %p91 = scmp.ne.s32.totalorder %s76, %s90
      %p92 = scmp.eq.s32.totalorder %s24, 0
      %p93 = por %p91, %p92
      %s95 = sadd.s32 %s94, 1
      %p98 = scmp.eq.s32.totalorder %s18, 3
      %p99 = scmp.ne.s32.totalorder %s94, %s96
      %p100 = scmp.eq.s32.totalorder %s18, 0
      %p101 = por %p99, %p100
      %p102 = scmp.ne.s32.totalorder %s94, %s96
      %p103 = scmp.eq.s32.totalorder %s23, 3
      %p104 = por %p102, %p103
      %p105 = scmp.ne.s32.totalorder %s96, %s97
      %p106 = scmp.eq.s32.totalorder %s23, 0
      %p107 = por %p105, %p106
      %p108 = scmp.ne.s32.totalorder %s96, %s97
      %p109 = scmp.eq.s32.totalorder %s24, 3
      %p110 = por %p108, %p109
      %p112 = scmp.ne.s32.totalorder %s97, %s111
      %p113 = scmp.eq.s32.totalorder %s24, 0
      %p114 = por %p112, %p113
      %s116 = sadd.s32 %s115, 1
      %p119 = scmp.eq.s32.totalorder %s18, 3
      %p120 = scmp.ne.s32.totalorder %s115, %s117
      %p121 = scmp.eq.s32.totalorder %s18, 0
      %p122 = por %p120, %p121
      %p123 = scmp.ne.s32.totalorder %s115, %s117
      %p124 = scmp.eq.s32.totalorder %s23, 3
      %p125 = por %p123, %p124
      %p126 = scmp.ne.s32.totalorder %s117, %s118
      %p127 = scmp.eq.s32.totalorder %s23, 0
      %p128 = por %p126, %p127
      %p129 = scmp.ne.s32.totalorder %s117, %s118
      %p130 = scmp.eq.s32.totalorder %s24, 3
      %p131 = por %p129, %p130
      %p133 = scmp.ne.s32.totalorder %s118, %s132
      %p134 = scmp.eq.s32.totalorder %s24, 0
      %p135 = por %p133, %p134
      %s136 = ssub.s32 %s18, %s25
      %p137 = scmp.eq.s32.totalorder %s136, 0
      %s139 = sadd.s32 %s138, 1
      %s140 = scalar_select %p137, %s138, %s139
      %p143 = pneg %p137
      %p144 = scmp.eq.s32.totalorder %s18, 3
      %p145 = por %p143, %p144
      %p146 = scmp.ne.s32.totalorder %s138, %s141
      %p147 = scmp.eq.s32.totalorder %s18, 0
      %p148 = por %p146, %p147
      %p149 = scmp.ne.s32.totalorder %s138, %s141
      %p150 = scmp.eq.s32.totalorder %s23, 3
      %p151 = por %p149, %p150
      %p152 = scmp.ne.s32.totalorder %s141, %s142
      %p153 = scmp.eq.s32.totalorder %s23, 0
      %p154 = por %p152, %p153
      %p155 = scmp.ne.s32.totalorder %s141, %s142
      %p156 = scmp.eq.s32.totalorder %s24, 3
      %p157 = por %p155, %p156
      %p159 = scmp.ne.s32.totalorder %s142, %s158
      %p160 = scmp.eq.s32.totalorder %s24, 0
      %p161 = por %p159, %p160
      %s162 = ssub.s32 %s18, %s25
      %p163 = scmp.eq.s32.totalorder %s162, 0
      %s165 = sadd.s32 %s164, 1
      %s166 = scalar_select %p163, %s164, %s165
      %p169 = pneg %p163
      %p170 = scmp.eq.s32.totalorder %s18, 3
      %p171 = por %p169, %p170
      %p172 = scmp.ne.s32.totalorder %s164, %s167
      %p173 = scmp.eq.s32.totalorder %s18, 0
      %p174 = por %p172, %p173
      %p175 = scmp.ne.s32.totalorder %s164, %s167
      %p176 = scmp.eq.s32.totalorder %s23, 3
      %p177 = por %p175, %p176
      %p178 = scmp.ne.s32.totalorder %s167, %s168
      %p179 = scmp.eq.s32.totalorder %s23, 0
      %p180 = por %p178, %p179
      %p181 = scmp.ne.s32.totalorder %s167, %s168
      %p182 = scmp.eq.s32.totalorder %s24, 3
      %p183 = por %p181, %p182
      %p185 = scmp.ne.s32.totalorder %s168, %s184
      %p186 = scmp.eq.s32.totalorder %s24, 0
      %p187 = por %p185, %p186
      %p188 = scmp.le.s32.totalorder 1, %s18
      %p189 = scmp.lt.s32.totalorder %s18, 5
      %p190 = pnand %p188, %p189
      %p191 = pneg %p190
      // Predicated region
      $region9: #{bottleneck_forward.7} parent=5 // pred_check
        _
      $region10: #{bottleneck_forward.7} parent=5 // pred_check_branch
        %193 = sbr.rel (%p190) target = $region12
      $region11: #{bottleneck_forward.7} parent=5 // pred_region
        %s194 = ssub.s32 %s18, 1
        // Predicated region
        $region13: #{bottleneck_forward.7} parent=11 // pred_check
          %p195 = pneg %p65
        $region14: #{bottleneck_forward.7} parent=11 // pred_check_branch
          %197 = sbr.rel (%p195) target = $region16
        $region15: #{bottleneck_forward.7} parent=11 // pred_region
          _
        $region16: #{bottleneck_forward.7} parent=11 // pred_fallthru
          _
        // Predicated region
        $region17: #{bottleneck_forward.7} parent=11 // pred_check
          %p198 = pneg %p86
        $region18: #{bottleneck_forward.7} parent=11 // pred_check_branch
          %200 = sbr.rel (%p198) target = $region20
        $region19: #{bottleneck_forward.7} parent=11 // pred_region
          _
        $region20: #{bottleneck_forward.7} parent=11 // pred_fallthru
          _
        // Predicated region
        $region21: #{bottleneck_forward.7} parent=11 // pred_check
          %p201 = pneg %p107
        $region22: #{bottleneck_forward.7} parent=11 // pred_check_branch
          %203 = sbr.rel (%p201) target = $region24
        $region23: #{bottleneck_forward.7} parent=11 // pred_region
          _
        $region24: #{bottleneck_forward.7} parent=11 // pred_fallthru
          _
        // Predicated region
        $region25: #{bottleneck_forward.7} parent=11 // pred_check
          %p204 = pneg %p128
        $region26: #{bottleneck_forward.7} parent=11 // pred_check_branch
          %206 = sbr.rel (%p204) target = $region28
        $region27: #{bottleneck_forward.7} parent=11 // pred_region
          _
        $region28: #{bottleneck_forward.7} parent=11 // pred_fallthru
          _
      $region12: #{bottleneck_forward.7} parent=5 // pred_fallthru
        _
      %p207 = scmp.lt.s32.totalorder %s18, 4
      // Predicated region
      $region29: #{bottleneck_forward.7} parent=5 // pred_check
        %p208 = pneg %p207
      $region30: #{bottleneck_forward.7} parent=5 // pred_check_branch
        %210 = sbr.rel (%p208) target = $region32
      $region31: #{bottleneck_forward.7} parent=5 // pred_region
        // Predicated region
        $region33: #{bottleneck_forward.7} parent=31 // pred_check
          %p211 = pneg %p38
        $region34: #{bottleneck_forward.7} parent=31 // pred_check_branch
          %213 = sbr.rel (%p211) target = $region36
        $region35: #{bottleneck_forward.7} parent=31 // pred_region
          %s214 = smul.u32 16, %s18
          %p215 = scmp.lt.s32.totalorder %s214, 63
          %s216 = scalar_select %p215, %s214, 63
          %s217 = smul.addr %s216, 8
          %s218 = scalar_lea.vmem %s0, %s217
          %s219 = smul.u32 16, %s18
        $region36: #{bottleneck_forward.7} parent=31 // pred_fallthru
          _
        // Predicated region
        $region37: #{bottleneck_forward.7} parent=31 // pred_check
          %p220 = pneg %p148
        $region38: #{bottleneck_forward.7} parent=31 // pred_check_branch
          %222 = sbr.rel (%p220) target = $region40
        $region39: #{bottleneck_forward.7} parent=31 // pred_region
          %s223 = sand.u32 %s138, 1
          %s224 = scalar_lea.sflag [#allocation3], %s223
          %s225 = sand.u32 %s138, 1
          %s226 = smul.addr %s225, 128
          %s227 = scalar_lea.vmem [#allocation2], %s226
          %s228 = smul.u32 16, %s18
          %230 = vsyncadd %s224, 0
          %s231 = smul.addr %s228, 8
          %s232 = scalar_lea.hbm %s5, %s231
          %s233 = sshll.u32 %s232, 4
          %s234 = int_to_ptr.hbm [resolvable:$true] %s233
          %s235 = sshll.u32 %s227, 4
          %s236 = int_to_ptr.vmem [resolvable:$true] %s235
          %241 = dma.hbm_to_vmem [thread:$0]  %s234, 2048, %s236, %s224, 128, 128, 8
        $region40: #{bottleneck_forward.7} parent=31 // pred_fallthru
          _
      $region32: #{bottleneck_forward.7} parent=5 // pred_fallthru
        _
      %p242 = scmp.le.s32.totalorder 1, %s18
      %p243 = scmp.lt.s32.totalorder %s18, 5
      %p244 = pnand %p242, %p243
      %p245 = pneg %p244
      // Predicated region
      $region41: #{bottleneck_forward.7} parent=5 // pred_check
        _
      $region42: #{bottleneck_forward.7} parent=5 // pred_check_branch
        %247 = sbr.rel (%p244) target = $region44
      $region43: #{bottleneck_forward.7} parent=5 // pred_region
        %s248 = ssub.s32 %s18, 1
        %s249 = sand.u32 %s141, 1
        %s250 = scalar_lea.sflag [#allocation3], %s249
        %s251 = sand.u32 %s141, 1
        %s252 = smul.addr %s251, 128
        %s253 = scalar_lea.vmem [#allocation2], %s252
        // Predicated region
        $region45: #{bottleneck_forward.7} parent=43 // pred_check
          %p254 = pneg %p154
        $region46: #{bottleneck_forward.7} parent=43 // pred_check_branch
          %256 = sbr.rel (%p254) target = $region48
        $region47: #{bottleneck_forward.7} parent=43 // pred_region
          %258 = dma.done %s250, 2048
        $region48: #{bottleneck_forward.7} parent=43 // pred_fallthru
          _
        %s259 = smul.u32 16, %s23
        %p260 = scmp.lt.s32.totalorder %s259, 63
        %s261 = scalar_select %p260, %s259, 63
        %s262 = smul.addr %s261, 8
        %s263 = scalar_lea.vmem %s0, %s262
        %p264 = pneg %p44
        %p265 = pneg %p41
        %p266 = pneg %p65
        %p267 = pneg %p62
        %p268 = pneg %p86
        %p269 = pneg %p83
        %p270 = pneg %p107
        %p271 = pneg %p104
        %p272 = pneg %p128
        %p273 = pneg %p125
        %s274 = sand.u32 %s141, 1
        %s275 = scalar_lea.sflag [#allocation3], %s274
        %s276 = sand.u32 %s141, 1
        %s277 = smul.addr %s276, 128
        %s278 = scalar_lea.vmem [#allocation2], %s277
        %p279 = pneg %p154
        %p280 = pneg %p151
        %p281 = pneg %p180
        %p282 = pneg %p177
        %s283 = sand.u32 %s167, 1
        %s284 = scalar_lea.sflag [#allocation4], %s283
        %s285 = sand.u32 %s167, 1
        %s286 = smul.addr %s285, 128
        %s287 = scalar_lea.vmem [#allocation5], %s286
        %s288 = smul.u32 16, %s23
        %p289 = scmp.lt.s32.totalorder %s288, 63
        %s290 = scalar_select %p289, %s288, 63
        %s291 = smul.addr %s290, 8
        %s292 = scalar_lea.vmem %s0, %s291
        %s293 = smul.u32 16, %s23
        %s294 = smul.u32 16, %s23
        %s295 = smul.u32 16, %s23
        %v296 = vld [vmem:[%s292] sm:$0xff]
        %v297 = vld [vmem:[%s292 + $0x8] sm:$0xff]
        %v298 = vld [vmem:[%s292 + $0x10] sm:$0xff]
        %v299 = vld [vmem:[%s292 + $0x18] sm:$0xff]
        %v300 = vld [vmem:[%s292 + $0x20] sm:$0xff]
        %v301 = vld [vmem:[%s292 + $0x28] sm:$0xff]
        %v302 = vld [vmem:[%s292 + $0x30] sm:$0xff]
        %v303 = vld [vmem:[%s292 + $0x38] sm:$0xff]
        %v304 = vld [vmem:[%s292 + $0x40] sm:$0xff]
        %v305 = vld [vmem:[%s292 + $0x48] sm:$0xff]
        %v306 = vld [vmem:[%s292 + $0x50] sm:$0xff]
        %v307 = vld [vmem:[%s292 + $0x58] sm:$0xff]
        %v308 = vld [vmem:[%s292 + $0x60] sm:$0xff]
        %v309 = vld [vmem:[%s292 + $0x68] sm:$0xff]
        %v310 = vld [vmem:[%s292 + $0x70] sm:$0xff]
        %v311 = vld [vmem:[%s292 + $0x78] sm:$0xff]
        %v312 = vld [vmem:[%s1] sm:$0x1]
        %v314 = vperm.slane %v312, 0
        %v316 = vmul.f32 %v296, %v314
        %v317 = vmul.f32 %v297, %v314
        %v318 = vmul.f32 %v298, %v314
        %v319 = vmul.f32 %v299, %v314
        %v320 = vmul.f32 %v300, %v314
        %v321 = vmul.f32 %v301, %v314
        %v322 = vmul.f32 %v302, %v314
        %v323 = vmul.f32 %v303, %v314
        %v324 = vmul.f32 %v304, %v314
        %v325 = vmul.f32 %v305, %v314
        %v326 = vmul.f32 %v306, %v314
        %v327 = vmul.f32 %v307, %v314
        %v328 = vmul.f32 %v308, %v314
        %v329 = vmul.f32 %v309, %v314
        %v330 = vmul.f32 %v310, %v314
        %v331 = vmul.f32 %v311, %v314
        %v332 = vld [vmem:[%s2] sm:$0x1]
        %v334 = vperm.slane %v332, 0
        %v336 = vadd.f32 %v316, %v334
        %v337 = vadd.f32 %v317, %v334
        %v338 = vadd.f32 %v318, %v334
        %v339 = vadd.f32 %v319, %v334
        %v340 = vadd.f32 %v320, %v334
        %v341 = vadd.f32 %v321, %v334
        %v342 = vadd.f32 %v322, %v334
        %v343 = vadd.f32 %v323, %v334
        %v344 = vadd.f32 %v324, %v334
        %v345 = vadd.f32 %v325, %v334
        %v346 = vadd.f32 %v326, %v334
        %v347 = vadd.f32 %v327, %v334
        %v348 = vadd.f32 %v328, %v334
        %v349 = vadd.f32 %v329, %v334
        %v350 = vadd.f32 %v330, %v334
        %v351 = vadd.f32 %v331, %v334
        %v352 = vmax.f32 %v336, 0.0
        %v353 = vmax.f32 %v337, 0.0
        %v354 = vmax.f32 %v338, 0.0
        %v355 = vmax.f32 %v339, 0.0
        %v356 = vmax.f32 %v340, 0.0
        %v357 = vmax.f32 %v341, 0.0
        %v358 = vmax.f32 %v342, 0.0
        %v359 = vmax.f32 %v343, 0.0
        %v360 = vmax.f32 %v344, 0.0
        %v361 = vmax.f32 %v345, 0.0
        %v362 = vmax.f32 %v346, 0.0
        %v363 = vmax.f32 %v347, 0.0
        %v364 = vmax.f32 %v348, 0.0
        %v365 = vmax.f32 %v349, 0.0
        %v366 = vmax.f32 %v350, 0.0
        %v367 = vmax.f32 %v351, 0.0
        %v368 = vld [vmem:[%s3] sm:$0xff]
        %v369 = vld [vmem:[%s4] sm:$0x1]
        %v371 = vperm.slane %v369, 0
        %vm373 = vcmask 64512
        %v375 = vsel %vm373, %v352, 0
        %v378 = vsel %vm373, %v353, 0
        %v381 = vsel %vm373, %v354, 0
        %v384 = vsel %vm373, %v355, 0
        %v387 = vsel %vm373, %v356, 0
        %v390 = vsel %vm373, %v357, 0
        %v393 = vsel %vm373, %v358, 0
        %v396 = vsel %vm373, %v359, 0
        %v399 = vsel %vm373, %v360, 0
        %v402 = vsel %vm373, %v361, 0
        %v405 = vsel %vm373, %v362, 0
        %v408 = vsel %vm373, %v363, 0
        %v411 = vsel %vm373, %v364, 0
        %v414 = vsel %vm373, %v365, 0
        %v417 = vsel %vm373, %v366, 0
        %v420 = vsel %vm373, %v367, 0
        %422 = vmatpush.msra.mxu0 0.0
        %423 = vmatpush.msra.mxu0 0.0
        %424 = vmatpush.msra.mxu0 0.0
        %425 = vmatpush.msra.mxu0 0.0
        %426 = vmatpush.msra.mxu0 0.0
        %427 = vmatpush.msra.mxu0 0.0
        %428 = vmatpush.msra.mxu0 0.0
        %429 = vmatpush.msra.mxu0 0.0
        %430 = vmatpush.msra.mxu0 0.0
        %431 = vmatpush.msra.mxu0 0.0
        %432 = vmatpush.msra.mxu0 0.0
        %433 = vmatpush.msra.mxu0 0.0
        %434 = vmatpush.msra.mxu0 0.0
        %435 = vmatpush.msra.mxu0 0.0
        %436 = vmatpush.msra.mxu0 0.0
        %437 = vmatpush.msra.mxu0 %v368
        %438 = vmatmul.f32.gmra.mxu0 %v375
        %v439 = vpop.f32.mrf.mxu0
        %v440 = vadd.f32 %v371, %v439
        %441 = vmatmul.f32.gmra.mxu0 %v378
        %v442 = vpop.f32.mrf.mxu0
        %v443 = vadd.f32 %v371, %v442
        %444 = vmatmul.f32.gmra.mxu0 %v381
        %v445 = vpop.f32.mrf.mxu0
        %v446 = vadd.f32 %v371, %v445
        %447 = vmatmul.f32.gmra.mxu0 %v384
        %v448 = vpop.f32.mrf.mxu0
        %v449 = vadd.f32 %v371, %v448
        %450 = vmatmul.f32.gmra.mxu0 %v387
        %v451 = vpop.f32.mrf.mxu0
        %v452 = vadd.f32 %v371, %v451
        %453 = vmatmul.f32.gmra.mxu0 %v390
        %v454 = vpop.f32.mrf.mxu0
        %v455 = vadd.f32 %v371, %v454
        %456 = vmatmul.f32.gmra.mxu0 %v393
        %v457 = vpop.f32.mrf.mxu0
        %v458 = vadd.f32 %v371, %v457
        %459 = vmatmul.f32.gmra.mxu0 %v396
        %v460 = vpop.f32.mrf.mxu0
        %v461 = vadd.f32 %v371, %v460
        %462 = vmatmul.f32.gmra.mxu0 %v399
        %v463 = vpop.f32.mrf.mxu0
        %v464 = vadd.f32 %v371, %v463
        %465 = vmatmul.f32.gmra.mxu0 %v402
        %v466 = vpop.f32.mrf.mxu0
        %v467 = vadd.f32 %v371, %v466
        %468 = vmatmul.f32.gmra.mxu0 %v405
        %v469 = vpop.f32.mrf.mxu0
        %v470 = vadd.f32 %v371, %v469
        %471 = vmatmul.f32.gmra.mxu0 %v408
        %v472 = vpop.f32.mrf.mxu0
        %v473 = vadd.f32 %v371, %v472
        %474 = vmatmul.f32.gmra.mxu0 %v411
        %v475 = vpop.f32.mrf.mxu0
        %v476 = vadd.f32 %v371, %v475
        %477 = vmatmul.f32.gmra.mxu0 %v414
        %v478 = vpop.f32.mrf.mxu0
        %v479 = vadd.f32 %v371, %v478
        %480 = vmatmul.f32.gmra.mxu0 %v417
        %v481 = vpop.f32.mrf.mxu0
        %v482 = vadd.f32 %v371, %v481
        %483 = vmatmul.f32.gmra.mxu0 %v420
        %v484 = vpop.f32.mrf.mxu0
        %v485 = vadd.f32 %v371, %v484
        %486 = vdwg.mxu0
        %v487 = vld [vmem:[%s253] sm:$0xff]
        %v488 = vld [vmem:[%s253 + $0x8] sm:$0xff]
        %v489 = vld [vmem:[%s253 + $0x10] sm:$0xff]
        %v490 = vld [vmem:[%s253 + $0x18] sm:$0xff]
        %v491 = vld [vmem:[%s253 + $0x20] sm:$0xff]
        %v492 = vld [vmem:[%s253 + $0x28] sm:$0xff]
        %v493 = vld [vmem:[%s253 + $0x30] sm:$0xff]
        %v494 = vld [vmem:[%s253 + $0x38] sm:$0xff]
        %v495 = vld [vmem:[%s253 + $0x40] sm:$0xff]
        %v496 = vld [vmem:[%s253 + $0x48] sm:$0xff]
        %v497 = vld [vmem:[%s253 + $0x50] sm:$0xff]
        %v498 = vld [vmem:[%s253 + $0x58] sm:$0xff]
        %v499 = vld [vmem:[%s253 + $0x60] sm:$0xff]
        %v500 = vld [vmem:[%s253 + $0x68] sm:$0xff]
        %v501 = vld [vmem:[%s253 + $0x70] sm:$0xff]
        %v502 = vld [vmem:[%s253 + $0x78] sm:$0xff]
        %v503 = vadd.f32 %v440, %v487
        %v504 = vadd.f32 %v443, %v488
        %v505 = vadd.f32 %v446, %v489
        %v506 = vadd.f32 %v449, %v490
        %v507 = vadd.f32 %v452, %v491
        %v508 = vadd.f32 %v455, %v492
        %v509 = vadd.f32 %v458, %v493
        %v510 = vadd.f32 %v461, %v494
        %v511 = vadd.f32 %v464, %v495
        %v512 = vadd.f32 %v467, %v496
        %v513 = vadd.f32 %v470, %v497
        %v514 = vadd.f32 %v473, %v498
        %v515 = vadd.f32 %v476, %v499
        %v516 = vadd.f32 %v479, %v500
        %v517 = vadd.f32 %v482, %v501
        %v518 = vadd.f32 %v485, %v502
        %vm519 = vcmask 261120
        %520 = vst.msk [vmem:[%s287] sm:$0xff] %vm519, %v503
        %521 = vst.msk [vmem:[%s287 + $0x8] sm:$0xff] %vm519, %v504
        %522 = vst.msk [vmem:[%s287 + $0x10] sm:$0xff] %vm519, %v505
        %523 = vst.msk [vmem:[%s287 + $0x18] sm:$0xff] %vm519, %v506
        %524 = vst.msk [vmem:[%s287 + $0x20] sm:$0xff] %vm519, %v507
        %525 = vst.msk [vmem:[%s287 + $0x28] sm:$0xff] %vm519, %v508
        %526 = vst.msk [vmem:[%s287 + $0x30] sm:$0xff] %vm519, %v509
        %527 = vst.msk [vmem:[%s287 + $0x38] sm:$0xff] %vm519, %v510
        %528 = vst.msk [vmem:[%s287 + $0x40] sm:$0xff] %vm519, %v511
        %529 = vst.msk [vmem:[%s287 + $0x48] sm:$0xff] %vm519, %v512
        %530 = vst.msk [vmem:[%s287 + $0x50] sm:$0xff] %vm519, %v513
        %531 = vst.msk [vmem:[%s287 + $0x58] sm:$0xff] %vm519, %v514
        %532 = vst.msk [vmem:[%s287 + $0x60] sm:$0xff] %vm519, %v515
        %533 = vst.msk [vmem:[%s287 + $0x68] sm:$0xff] %vm519, %v516
        %534 = vst.msk [vmem:[%s287 + $0x70] sm:$0xff] %vm519, %v517
        %535 = vst.msk [vmem:[%s287 + $0x78] sm:$0xff] %vm519, %v518
        %s536 = sand.u32 %s167, 1
        %s537 = scalar_lea.sflag [#allocation4], %s536
        %s538 = sand.u32 %s167, 1
        %s539 = smul.addr %s538, 128
        %s540 = scalar_lea.vmem [#allocation5], %s539
        // Predicated region
        $region49: #{bottleneck_forward.7} parent=43 // pred_check
          %p541 = pneg %p177
        $region50: #{bottleneck_forward.7} parent=43 // pred_check_branch
          %543 = sbr.rel (%p541) target = $region52
        $region51: #{bottleneck_forward.7} parent=43 // pred_region
          %s544 = smul.u32 16, %s23
          %546 = vsyncadd %s537, 0
          %s547 = smul.addr %s544, 8
          %s548 = scalar_lea.hbm %s6, %s547
          %s549 = sshll.u32 %s540, 4
          %s550 = int_to_ptr.vmem [resolvable:$true] %s549
          %s551 = sshll.u32 %s548, 4
          %s552 = int_to_ptr.hbm [resolvable:$true] %s551
          %557 = dma.vmem_to_hbm [thread:$0]  %s550, 2048, %s552, %s537, 128, 128, 8
        $region52: #{bottleneck_forward.7} parent=43 // pred_fallthru
          _
      $region44: #{bottleneck_forward.7} parent=5 // pred_fallthru
        _
      %p558 = scmp.le.s32.totalorder 2, %s18
      // Predicated region
      $region53: #{bottleneck_forward.7} parent=5 // pred_check
        %p559 = pneg %p558
      $region54: #{bottleneck_forward.7} parent=5 // pred_check_branch
        %561 = sbr.rel (%p559) target = $region56
      $region55: #{bottleneck_forward.7} parent=5 // pred_region
        %s562 = ssub.s32 %s18, 2
        // Predicated region
        $region57: #{bottleneck_forward.7} parent=55 // pred_check
          %p563 = pneg %p183
        $region58: #{bottleneck_forward.7} parent=55 // pred_check_branch
          %565 = sbr.rel (%p563) target = $region60
        $region59: #{bottleneck_forward.7} parent=55 // pred_region
          %s566 = sand.u32 %s168, 1
          %s567 = scalar_lea.sflag [#allocation4], %s566
          %s568 = sand.u32 %s168, 1
          %s569 = smul.addr %s568, 128
          %s570 = scalar_lea.vmem [#allocation5], %s569
          %572 = dma.done %s567, 2048
        $region60: #{bottleneck_forward.7} parent=55 // pred_fallthru
          _
      $region56: #{bottleneck_forward.7} parent=5 // pred_fallthru
        _
    $region6: #{bottleneck_forward.7} parent=1 // loop_footer
      %s22 = sadd.s32 1, %s18
    $region7: #{bottleneck_forward.7} parent=1 // loop_footer_branch
      %17 = sbr.rel target = $region3
    $region8: #{bottleneck_forward.7} parent=1 // loop_exit
      _
    %573 = vsyncpa [#allocation3], 1
    %s574 = scalar_lea.sflag [#allocation3], 1
    %575 = vsyncpa %s574, 1
    %576 = vsyncpa [#allocation4], 1
    %s577 = scalar_lea.sflag [#allocation4], 1
    %578 = vsyncpa %s577, 1

// kernel: bottleneck_forward.6
$region0: #{bottleneck_forward.6}
  #allocation0 [shape = 'u32[]', space=smem, size = 0x4, offset = 0x4, fixed_abs, tag = 'smem constant byte address 0x4 - core index']
  #allocation1 [shape = 'u32[72,128]{1,0:T(1,128)}', space=vmem, size = 0x9000, scoped, tag = 'internal scratch']
  #allocation2 [shape = 'f32[10,24,8]{2,1,0:T(8,128)}', space=vmem, size = 0x1e000, scoped, tag = 'scratch operand']
  #allocation3 [shape = 'f32[128,8]{1,0:T(8,128)}', space=vmem, size = 0x10000, scoped, tag = 'scratch operand']
  %s0 = inlined_call_operand.vmem [shape: f32[2,16,16,8], index: 0, kind: input, shape index: {}, may-alias: {0,1,2}]
  %s1 = inlined_call_operand.vmem [shape: f32[2,16,16,8], index: 1, kind: input, shape index: {}, may-alias: {0,1,2}]
  %s2 = inlined_call_operand.vmem [shape: f32[2,16,16,8], index: 2, kind: input, shape index: {}, may-alias: {0,1,2}]
  %s3 = inlined_call_operand.vmem [shape: f32[1,8], index: 3, kind: input, shape index: {}]
  %s4 = inlined_call_operand.vmem [shape: f32[1,8], index: 4, kind: input, shape index: {}]
  %s5 = inlined_call_operand.vmem [shape: f32[3,3,8,8], index: 5, kind: input, shape index: {}]
  %s6 = inlined_call_operand.vmem [shape: f32[1,8], index: 6, kind: input, shape index: {}]
  %s7 = inlined_call_operand.vmem [shape: f32[2,16,16,8], index: 7, kind: output, shape index: {0}]
  %s8 = inlined_call_operand.vmem [shape: f32[2,2,1,8], index: 8, kind: output, shape index: {1}]
  %s9 = inlined_call_operand.vmem [shape: f32[2,2,1,8], index: 9, kind: output, shape index: {2}]
  %10 = xla_tuple %s7, %s8, %s9
  %s11 = sld [smem:[#allocation0]]
  $region77: #{bottleneck_forward.6} parent=0
    _
  %s13 = ssub.s32 1, %s11
  %s14 = scalar_select 0, %s13, %s11
  loop: start=0, step=1, limit=6
  $region2: #{bottleneck_forward.6} parent=0 // loop_pre_header
    _
  $region3: #{bottleneck_forward.6} parent=0 // loop_header
    %s16 = sphi 0, %s20
    %p17 = scmp.ge.s32.totalorder %s16, 6
    %s23 = sphi 0, %s35
    %s24 = sphi 0, %s31
    %s25 = sphi 0, %s23
    %s26 = sphi 0, %s24
    %s27 = sphi 0, %s25
    %s28 = sphi 0, %s26
    %s40 = sphi 0, %s42
    %s43 = sphi 0, %s40
    %s44 = sphi 0, %s43
    %s60 = sphi 0, %s44
    %s76 = sphi 0, %s78
    %s79 = sphi 0, %s76
    %s80 = sphi 0, %s79
    %s96 = sphi 0, %s80
    %s112 = sphi 0, %s114
    %s115 = sphi 0, %s112
    %s116 = sphi 0, %s115
    %s132 = sphi 0, %s116
    %s136 = sphi 0, %s136
    %s138 = sphi 0, %s136
    %s139 = sphi 0, %s138
    %s153 = sphi 0, %s139
    %s157 = sphi 0, %s157
    %s159 = sphi 0, %s157
    %s160 = sphi 0, %s159
    %s174 = sphi 0, %s160
    %s178 = sphi 0, %s178
    %s180 = sphi 0, %s178
    %s181 = sphi 0, %s180
    %s195 = sphi 0, %s181
    %s199 = sphi 0, %s199
    %s201 = sphi 0, %s199
    %s202 = sphi 0, %s201
    %s216 = sphi 0, %s202
    %s224 = sphi 0, %s226
    %s227 = sphi 0, %s224
    %s228 = sphi 0, %s227
    %s244 = sphi 0, %s228
    %s252 = sphi 0, %s254
    %s255 = sphi 0, %s252
    %s256 = sphi 0, %s255
    %s272 = sphi 0, %s256
    %s280 = sphi 0, %s282
    %s283 = sphi 0, %s280
    %s284 = sphi 0, %s283
    %s300 = sphi 0, %s284
  $region4: #{bottleneck_forward.6} parent=0 // loop_header_branch
    %19 = sbr.rel (%p17) target = $region8
  $region5: #{bottleneck_forward.6} parent=0 // loop_body
    %s21 = ssub.s32 %s16, 1
    %s22 = ssub.s32 %s16, 2
    %s29 = sadd.s32 1, %s24
    %p30 = scmp.ge.s32.totalorder %s29, 2
    %s31 = scalar_select %p30, 0, %s29
    %s32 = sadd.s32 1, %s23
    %s33 = scalar_select %p30, %s32, %s23
    %p34 = scmp.ge.s32.totalorder %s33, 2
    %s35 = scalar_select %p34, 0, %s33
    %s36 = ssub.s32 %s23, %s35
    %s37 = ssub.s32 %s24, %s31
    %s38 = sor.u32 %s36, %s37
    %p39 = scmp.eq.s32.totalorder %s38, 0
    %s41 = sadd.s32 %s40, 1
    %s42 = scalar_select %p39, %s40, %s41
    %p45 = pneg %p39
    %p46 = scmp.eq.s32.totalorder %s16, 3
    %p47 = por %p45, %p46
    %p48 = scmp.ne.s32.totalorder %s40, %s43
    %p49 = scmp.eq.s32.totalorder %s16, 0
    %p50 = por %p48, %p49
    %p51 = scmp.ne.s32.totalorder %s40, %s43
    %p52 = scmp.eq.s32.totalorder %s21, 3
    %p53 = por %p51, %p52
    %p54 = scmp.ne.s32.totalorder %s43, %s44
    %p55 = scmp.eq.s32.totalorder %s21, 0
    %p56 = por %p54, %p55
    %p57 = scmp.ne.s32.totalorder %s43, %s44
    %p58 = scmp.eq.s32.totalorder %s22, 3
    %p59 = por %p57, %p58
    %p61 = scmp.ne.s32.totalorder %s44, %s60
    %p62 = scmp.eq.s32.totalorder %s22, 0
    %p63 = por %p61, %p62
    %s64 = smul.u32 %s24, 8
    %s65 = ssub.s32 %s64, 1
    %p66 = scmp.gt.s32.totalorder %s65, 0
    %s67 = scalar_select %p66, %s65, 0
    %s68 = smul.u32 %s31, 8
    %s69 = ssub.s32 %s68, 1
    %p70 = scmp.gt.s32.totalorder %s69, 0
    %s71 = scalar_select %p70, %s69, 0
    %s72 = ssub.s32 %s23, %s35
    %s73 = ssub.s32 %s67, %s71
    %s74 = sor.u32 %s72, %s73
    %p75 = scmp.eq.s32.totalorder %s74, 0
    %s77 = sadd.s32 %s76, 1
    %s78 = scalar_select %p75, %s76, %s77
    %p81 = pneg %p75
    %p82 = scmp.eq.s32.totalorder %s16, 3
    %p83 = por %p81, %p82
    %p84 = scmp.ne.s32.totalorder %s76, %s79
    %p85 = scmp.eq.s32.totalorder %s16, 0
    %p86 = por %p84, %p85
    %p87 = scmp.ne.s32.totalorder %s76, %s79
    %p88 = scmp.eq.s32.totalorder %s21, 3
    %p89 = por %p87, %p88
    %p90 = scmp.ne.s32.totalorder %s79, %s80
    %p91 = scmp.eq.s32.totalorder %s21, 0
    %p92 = por %p90, %p91
    %p93 = scmp.ne.s32.totalorder %s79, %s80
    %p94 = scmp.eq.s32.totalorder %s22, 3
    %p95 = por %p93, %p94
    %p97 = scmp.ne.s32.totalorder %s80, %s96
    %p98 = scmp.eq.s32.totalorder %s22, 0
    %p99 = por %p97, %p98
    %s100 = smul.u32 %s24, 8
    %s101 = sadd.s32 %s100, 8
    %p102 = scmp.lt.s32.totalorder %s101, 15
    %s103 = scalar_select %p102, %s101, 15
    %s104 = smul.u32 %s31, 8
    %s105 = sadd.s32 %s104, 8
    %p106 = scmp.lt.s32.totalorder %s105, 15
    %s107 = scalar_select %p106, %s105, 15
    %s108 = ssub.s32 %s23, %s35
    %s109 = ssub.s32 %s103, %s107
    %s110 = sor.u32 %s108, %s109
    %p111 = scmp.eq.s32.totalorder %s110, 0
    %s113 = sadd.s32 %s112, 1
    %s114 = scalar_select %p111, %s112, %s113
    %p117 = pneg %p111
    %p118 = scmp.eq.s32.totalorder %s16, 3
    %p119 = por %p117, %p118
    %p120 = scmp.ne.s32.totalorder %s112, %s115
    %p121 = scmp.eq.s32.totalorder %s16, 0
    %p122 = por %p120, %p121
    %p123 = scmp.ne.s32.totalorder %s112, %s115
    %p124 = scmp.eq.s32.totalorder %s21, 3
    %p125 = por %p123, %p124
    %p126 = scmp.ne.s32.totalorder %s115, %s116
    %p127 = scmp.eq.s32.totalorder %s21, 0
    %p128 = por %p126, %p127
    %p129 = scmp.ne.s32.totalorder %s115, %s116
    %p130 = scmp.eq.s32.totalorder %s22, 3
    %p131 = por %p129, %p130
    %p133 = scmp.ne.s32.totalorder %s116, %s132
    %p134 = scmp.eq.s32.totalorder %s22, 0
    %p135 = por %p133, %p134
    %s137 = sadd.s32 %s136, 1
    %p140 = scmp.eq.s32.totalorder %s16, 3
    %p141 = scmp.ne.s32.totalorder %s136, %s138
    %p142 = scmp.eq.s32.totalorder %s16, 0
    %p143 = por %p141, %p142
    %p144 = scmp.ne.s32.totalorder %s136, %s138
    %p145 = scmp.eq.s32.totalorder %s21, 3
    %p146 = por %p144, %p145
    %p147 = scmp.ne.s32.totalorder %s138, %s139
    %p148 = scmp.eq.s32.totalorder %s21, 0
    %p149 = por %p147, %p148
    %p150 = scmp.ne.s32.totalorder %s138, %s139
    %p151 = scmp.eq.s32.totalorder %s22, 3
    %p152 = por %p150, %p151
    %p154 = scmp.ne.s32.totalorder %s139, %s153
    %p155 = scmp.eq.s32.totalorder %s22, 0
    %p156 = por %p154, %p155
    %s158 = sadd.s32 %s157, 1
    %p161 = scmp.eq.s32.totalorder %s16, 3
    %p162 = scmp.ne.s32.totalorder %s157, %s159
    %p163 = scmp.eq.s32.totalorder %s16, 0
    %p164 = por %p162, %p163
    %p165 = scmp.ne.s32.totalorder %s157, %s159
    %p166 = scmp.eq.s32.totalorder %s21, 3
    %p167 = por %p165, %p166
    %p168 = scmp.ne.s32.totalorder %s159, %s160
    %p169 = scmp.eq.s32.totalorder %s21, 0
    %p170 = por %p168, %p169
    %p171 = scmp.ne.s32.totalorder %s159, %s160
    %p172 = scmp.eq.s32.totalorder %s22, 3
    %p173 = por %p171, %p172
    %p175 = scmp.ne.s32.totalorder %s160, %s174
    %p176 = scmp.eq.s32.totalorder %s22, 0
    %p177 = por %p175, %p176
    %s179 = sadd.s32 %s178, 1
    %p182 = scmp.eq.s32.totalorder %s16, 3
    %p183 = scmp.ne.s32.totalorder %s178, %s180
    %p184 = scmp.eq.s32.totalorder %s16, 0
    %p185 = por %p183, %p184
    %p186 = scmp.ne.s32.totalorder %s178, %s180
    %p187 = scmp.eq.s32.totalorder %s21, 3
    %p188 = por %p186, %p187
    %p189 = scmp.ne.s32.totalorder %s180, %s181
    %p190 = scmp.eq.s32.totalorder %s21, 0
    %p191 = por %p189, %p190
    %p192 = scmp.ne.s32.totalorder %s180, %s181
    %p193 = scmp.eq.s32.totalorder %s22, 3
    %p194 = por %p192, %p193
    %p196 = scmp.ne.s32.totalorder %s181, %s195
    %p197 = scmp.eq.s32.totalorder %s22, 0
    %p198 = por %p196, %p197
    %s200 = sadd.s32 %s199, 1
    %p203 = scmp.eq.s32.totalorder %s16, 3
    %p204 = scmp.ne.s32.totalorder %s199, %s201
    %p205 = scmp.eq.s32.totalorder %s16, 0
    %p206 = por %p204, %p205
    %p207 = scmp.ne.s32.totalorder %s199, %s201
    %p208 = scmp.eq.s32.totalorder %s21, 3
    %p209 = por %p207, %p208
    %p210 = scmp.ne.s32.totalorder %s201, %s202
    %p211 = scmp.eq.s32.totalorder %s21, 0
    %p212 = por %p210, %p211
    %p213 = scmp.ne.s32.totalorder %s201, %s202
    %p214 = scmp.eq.s32.totalorder %s22, 3
    %p215 = por %p213, %p214
    %p217 = scmp.ne.s32.totalorder %s202, %s216
    %p218 = scmp.eq.s32.totalorder %s22, 0
    %p219 = por %p217, %p218
    %s220 = ssub.s32 %s23, %s35
    %s221 = ssub.s32 %s24, %s31
    %s222 = sor.u32 %s220, %s221
    %p223 = scmp.eq.s32.totalorder %s222, 0
    %s225 = sadd.s32 %s224, 1
    %s226 = scalar_select %p223, %s224, %s225
    %p229 = pneg %p223
    %p230 = scmp.eq.s32.totalorder %s16, 3
    %p231 = por %p229, %p230
    %p232 = scmp.ne.s32.totalorder %s224, %s227
    %p233 = scmp.eq.s32.totalorder %s16, 0
    %p234 = por %p232, %p233
    %p235 = scmp.ne.s32.totalorder %s224, %s227
    %p236 = scmp.eq.s32.totalorder %s21, 3
    %p237 = por %p235, %p236
    %p238 = scmp.ne.s32.totalorder %s227, %s228
    %p239 = scmp.eq.s32.totalorder %s21, 0
    %p240 = por %p238, %p239
    %p241 = scmp.ne.s32.totalorder %s227, %s228
    %p242 = scmp.eq.s32.totalorder %s22, 3
    %p243 = por %p241, %p242
    %p245 = scmp.ne.s32.totalorder %s228, %s244
    %p246 = scmp.eq.s32.totalorder %s22, 0
    %p247 = por %p245, %p246
    %s248 = ssub.s32 %s23, %s35
    %s249 = ssub.s32 %s24, %s31
    %s250 = sor.u32 %s248, %s249
    %p251 = scmp.eq.s32.totalorder %s250, 0
    %s253 = sadd.s32 %s252, 1
    %s254 = scalar_select %p251, %s252, %s253
    %p257 = pneg %p251
    %p258 = scmp.eq.s32.totalorder %s16, 3
    %p259 = por %p257, %p258
    %p260 = scmp.ne.s32.totalorder %s252, %s255
    %p261 = scmp.eq.s32.totalorder %s16, 0
    %p262 = por %p260, %p261
    %p263 = scmp.ne.s32.totalorder %s252, %s255
    %p264 = scmp.eq.s32.totalorder %s21, 3
    %p265 = por %p263, %p264
    %p266 = scmp.ne.s32.totalorder %s255, %s256
    %p267 = scmp.eq.s32.totalorder %s21, 0
    %p268 = por %p266, %p267
    %p269 = scmp.ne.s32.totalorder %s255, %s256
    %p270 = scmp.eq.s32.totalorder %s22, 3
    %p271 = por %p269, %p270
    %p273 = scmp.ne.s32.totalorder %s256, %s272
    %p274 = scmp.eq.s32.totalorder %s22, 0
    %p275 = por %p273, %p274
    %s276 = ssub.s32 %s23, %s35
    %s277 = ssub.s32 %s24, %s31
    %s278 = sor.u32 %s276, %s277
    %p279 = scmp.eq.s32.totalorder %s278, 0
    %s281 = sadd.s32 %s280, 1
    %s282 = scalar_select %p279, %s280, %s281
    %p285 = pneg %p279
    %p286 = scmp.eq.s32.totalorder %s16, 3
    %p287 = por %p285, %p286
    %p288 = scmp.ne.s32.totalorder %s280, %s283
    %p289 = scmp.eq.s32.totalorder %s16, 0
    %p290 = por %p288, %p289
    %p291 = scmp.ne.s32.totalorder %s280, %s283
    %p292 = scmp.eq.s32.totalorder %s21, 3
    %p293 = por %p291, %p292
    %p294 = scmp.ne.s32.totalorder %s283, %s284
    %p295 = scmp.eq.s32.totalorder %s21, 0
    %p296 = por %p294, %p295
    %p297 = scmp.ne.s32.totalorder %s283, %s284
    %p298 = scmp.eq.s32.totalorder %s22, 3
    %p299 = por %p297, %p298
    %p301 = scmp.ne.s32.totalorder %s284, %s300
    %p302 = scmp.eq.s32.totalorder %s22, 0
    %p303 = por %p301, %p302
    %p304 = scmp.le.s32.totalorder 1, %s16
    %p305 = scmp.lt.s32.totalorder %s16, 5
    %p306 = pnand %p304, %p305
    %p307 = pneg %p306
    // Predicated region
    $region9: #{bottleneck_forward.6} parent=5 // pred_check
      _
    $region10: #{bottleneck_forward.6} parent=5 // pred_check_branch
      %309 = sbr.rel (%p306) target = $region12
    $region11: #{bottleneck_forward.6} parent=5 // pred_region
      %s310 = ssub.s32 %s16, 1
      // Predicated region
      $region13: #{bottleneck_forward.6} parent=11 // pred_check
        %p311 = pneg %p149
      $region14: #{bottleneck_forward.6} parent=11 // pred_check_branch
        %313 = sbr.rel (%p311) target = $region16
      $region15: #{bottleneck_forward.6} parent=11 // pred_region
        _
      $region16: #{bottleneck_forward.6} parent=11 // pred_fallthru
        _
      // Predicated region
      $region17: #{bottleneck_forward.6} parent=11 // pred_check
        %p314 = pneg %p170
      $region18: #{bottleneck_forward.6} parent=11 // pred_check_branch
        %316 = sbr.rel (%p314) target = $region20
      $region19: #{bottleneck_forward.6} parent=11 // pred_region
        _
      $region20: #{bottleneck_forward.6} parent=11 // pred_fallthru
        _
      // Predicated region
      $region21: #{bottleneck_forward.6} parent=11 // pred_check
        %p317 = pneg %p191
      $region22: #{bottleneck_forward.6} parent=11 // pred_check_branch
        %319 = sbr.rel (%p317) target = $region24
      $region23: #{bottleneck_forward.6} parent=11 // pred_region
        _
      $region24: #{bottleneck_forward.6} parent=11 // pred_fallthru
        _
      // Predicated region
      $region25: #{bottleneck_forward.6} parent=11 // pred_check
        %p320 = pneg %p212
      $region26: #{bottleneck_forward.6} parent=11 // pred_check_branch
        %322 = sbr.rel (%p320) target = $region28
      $region27: #{bottleneck_forward.6} parent=11 // pred_region
        _
      $region28: #{bottleneck_forward.6} parent=11 // pred_fallthru
        _
    $region12: #{bottleneck_forward.6} parent=5 // pred_fallthru
      _
    %p323 = scmp.lt.s32.totalorder %s16, 4
    // Predicated region
    $region29: #{bottleneck_forward.6} parent=5 // pred_check
      %p324 = pneg %p323
    $region30: #{bottleneck_forward.6} parent=5 // pred_check_branch
      %326 = sbr.rel (%p324) target = $region32
    $region31: #{bottleneck_forward.6} parent=5 // pred_region
      // Predicated region
      $region33: #{bottleneck_forward.6} parent=31 // pred_check
        %p327 = pneg %p50
      $region34: #{bottleneck_forward.6} parent=31 // pred_check_branch
        %329 = sbr.rel (%p327) target = $region36
      $region35: #{bottleneck_forward.6} parent=31 // pred_region
        %s330 = smul.u32 8, %s24
        %p331 = scmp.lt.s32.totalorder %s23, 1
        %s332 = scalar_select %p331, %s23, 1
        %p333 = scmp.lt.s32.totalorder %s330, 15
        %s334 = scalar_select %p333, %s330, 15
        %s335 = smul.addr %s334, 2
        %s336 = smul.addr %s332, 32
        %s337 = sadd.s32 %s335, %s336
        %s338 = smul.addr %s337, 8
        %s339 = scalar_lea.vmem %s0, %s338
        %s340 = smul.u32 8, %s24
      $region36: #{bottleneck_forward.6} parent=31 // pred_fallthru
        _
      // Predicated region
      $region37: #{bottleneck_forward.6} parent=31 // pred_check
        %p341 = pneg %p86
      $region38: #{bottleneck_forward.6} parent=31 // pred_check_branch
        %343 = sbr.rel (%p341) target = $region40
      $region39: #{bottleneck_forward.6} parent=31 // pred_region
        %s344 = smul.u32 %s24, 8
        %s345 = ssub.s32 %s344, 1
        %p346 = scmp.gt.s32.totalorder %s345, 0
        %s347 = scalar_select %p346, %s345, 0
        %p348 = scmp.lt.s32.totalorder %s23, 1
        %s349 = scalar_select %p348, %s23, 1
        %p350 = scmp.lt.s32.totalorder %s347, 15
        %s351 = scalar_select %p350, %s347, 15
        %s352 = smul.addr %s351, 2
        %s353 = smul.addr %s349, 32
        %s354 = sadd.s32 %s352, %s353
        %s355 = smul.addr %s354, 8
        %s356 = scalar_lea.vmem %s1, %s355
        %s357 = smul.u32 %s24, 8
        %s358 = ssub.s32 %s357, 1
        %p359 = scmp.gt.s32.totalorder %s358, 0
        %s360 = scalar_select %p359, %s358, 0
      $region40: #{bottleneck_forward.6} parent=31 // pred_fallthru
        _
      // Predicated region
      $region41: #{bottleneck_forward.6} parent=31 // pred_check
        %p361 = pneg %p122
      $region42: #{bottleneck_forward.6} parent=31 // pred_check_branch
        %363 = sbr.rel (%p361) target = $region44
      $region43: #{bottleneck_forward.6} parent=31 // pred_region
        %s364 = smul.u32 %s24, 8
        %s365 = sadd.s32 %s364, 8
        %p366 = scmp.lt.s32.totalorder %s365, 15
        %s367 = scalar_select %p366, %s365, 15
        %p368 = scmp.lt.s32.totalorder %s23, 1
        %s369 = scalar_select %p368, %s23, 1
        %p370 = scmp.lt.s32.totalorder %s367, 15
        %s371 = scalar_select %p370, %s367, 15
        %s372 = smul.addr %s371, 2
        %s373 = smul.addr %s369, 32
        %s374 = sadd.s32 %s372, %s373
        %s375 = smul.addr %s374, 8
        %s376 = scalar_lea.vmem %s2, %s375
        %s377 = smul.u32 %s24, 8
        %s378 = sadd.s32 %s377, 8
        %p379 = scmp.lt.s32.totalorder %s378, 15
        %s380 = scalar_select %p379, %s378, 15
      $region44: #{bottleneck_forward.6} parent=31 // pred_fallthru
        _
    $region32: #{bottleneck_forward.6} parent=5 // pred_fallthru
      _
    %p381 = scmp.le.s32.totalorder 1, %s16
    %p382 = scmp.lt.s32.totalorder %s16, 5
    %p383 = pnand %p381, %p382
    %p384 = pneg %p383
    // Predicated region
    $region45: #{bottleneck_forward.6} parent=5 // pred_check
      _
    $region46: #{bottleneck_forward.6} parent=5 // pred_check_branch
      %386 = sbr.rel (%p383) target = $region48
    $region47: #{bottleneck_forward.6} parent=5 // pred_region
      %s387 = ssub.s32 %s16, 1
      %s388 = smul.u32 8, %s26
      %p389 = scmp.lt.s32.totalorder %s25, 1
      %s390 = scalar_select %p389, %s25, 1
      %p391 = scmp.lt.s32.totalorder %s388, 15
      %s392 = scalar_select %p391, %s388, 15
      %s393 = smul.addr %s392, 2
      %s394 = smul.addr %s390, 32
      %s395 = sadd.s32 %s393, %s394
      %s396 = smul.addr %s395, 8
      %s397 = scalar_lea.vmem %s0, %s396
      %p398 = pneg %p56
      %p399 = pneg %p53
      %s400 = smul.u32 %s26, 8
      %s401 = ssub.s32 %s400, 1
      %p402 = scmp.gt.s32.totalorder %s401, 0
      %s403 = scalar_select %p402, %s401, 0
      %p404 = scmp.lt.s32.totalorder %s25, 1
      %s405 = scalar_select %p404, %s25, 1
      %p406 = scmp.lt.s32.totalorder %s403, 15
      %s407 = scalar_select %p406, %s403, 15
      %s408 = smul.addr %s407, 2
      %s409 = smul.addr %s405, 32
      %s410 = sadd.s32 %s408, %s409
      %s411 = smul.addr %s410, 8
      %s412 = scalar_lea.vmem %s1, %s411
      %p413 = pneg %p92
      %p414 = pneg %p89
      %s415 = smul.u32 %s26, 8
      %s416 = sadd.s32 %s415, 8
      %p417 = scmp.lt.s32.totalorder %s416, 15
      %s418 = scalar_select %p417, %s416, 15
      %p419 = scmp.lt.s32.totalorder %s25, 1
      %s420 = scalar_select %p419, %s25, 1
      %p421 = scmp.lt.s32.totalorder %s418, 15
      %s422 = scalar_select %p421, %s418, 15
      %s423 = smul.addr %s422, 2
      %s424 = smul.addr %s420, 32
      %s425 = sadd.s32 %s423, %s424
      %s426 = smul.addr %s425, 8
      %s427 = scalar_lea.vmem %s2, %s426
      %p428 = pneg %p128
      %p429 = pneg %p125
      %p430 = pneg %p149
      %p431 = pneg %p146
      %p432 = pneg %p170
      %p433 = pneg %p167
      %p434 = pneg %p191
      %p435 = pneg %p188
      %p436 = pneg %p212
      %p437 = pneg %p209
      %p438 = pneg %p240
      %p439 = pneg %p237
      %s440 = smul.u32 8, %s26
      %p441 = scmp.lt.s32.totalorder %s25, 1
      %s442 = scalar_select %p441, %s25, 1
      %p443 = scmp.lt.s32.totalorder %s440, 15
      %s444 = scalar_select %p443, %s440, 15
      %s445 = smul.addr %s444, 2
      %s446 = smul.addr %s442, 32
      %s447 = sadd.s32 %s445, %s446
      %s448 = smul.addr %s447, 8
      %s449 = scalar_lea.vmem %s7, %s448
      %p450 = pneg %p268
      %p451 = pneg %p265
      %p452 = scmp.lt.s32.totalorder %s25, 1
      %s453 = scalar_select %p452, %s25, 1
      %p454 = scmp.lt.s32.totalorder %s26, 1
      %s455 = scalar_select %p454, %s26, 1
      %s456 = smul.addr %s453, 2
      %s457 = sadd.s32 %s455, %s456
      %s458 = scalar_lea.vmem %s8, %s457
      %p459 = pneg %p296
      %p460 = pneg %p293
      %p461 = scmp.lt.s32.totalorder %s25, 1
      %s462 = scalar_select %p461, %s25, 1
      %p463 = scmp.lt.s32.totalorder %s26, 1
      %s464 = scalar_select %p463, %s26, 1
      %s465 = smul.addr %s462, 2
      %s466 = sadd.s32 %s464, %s465
      %s467 = scalar_lea.vmem %s9, %s466
      %s468 = smul.u32 8, %s26
      %p469 = scmp.lt.s32.totalorder %s25, 1
      %s470 = scalar_select %p469, %s25, 1
      %p471 = scmp.lt.s32.totalorder %s468, 15
      %s472 = scalar_select %p471, %s468, 15
      %s473 = smul.addr %s472, 2
      %s474 = smul.addr %s470, 32
      %s475 = sadd.s32 %s473, %s474
      %s476 = smul.addr %s475, 8
      %s477 = scalar_lea.vmem %s0, %s476
      %s478 = smul.u32 8, %s26
      %s479 = smul.u32 %s26, 8
      %s480 = ssub.s32 %s479, 1
      %p481 = scmp.gt.s32.totalorder %s480, 0
      %s482 = scalar_select %p481, %s480, 0
      %p483 = scmp.lt.s32.totalorder %s25, 1
      %s484 = scalar_select %p483, %s25, 1
      %p485 = scmp.lt.s32.totalorder %s482, 15
      %s486 = scalar_select %p485, %s482, 15
      %s487 = smul.addr %s486, 2
      %s488 = smul.addr %s484, 32
      %s489 = sadd.s32 %s487, %s488
      %s490 = smul.addr %s489, 8
      %s491 = scalar_lea.vmem %s1, %s490
      %s492 = smul.u32 %s26, 8
      %s493 = ssub.s32 %s492, 1
      %p494 = scmp.gt.s32.totalorder %s493, 0
      %s495 = scalar_select %p494, %s493, 0
      %s496 = smul.u32 %s26, 8
      %s497 = sadd.s32 %s496, 8
      %p498 = scmp.lt.s32.totalorder %s497, 15
      %s499 = scalar_select %p498, %s497, 15
      %p500 = scmp.lt.s32.totalorder %s25, 1
      %s501 = scalar_select %p500, %s25, 1
      %p502 = scmp.lt.s32.totalorder %s499, 15
      %s503 = scalar_select %p502, %s499, 15
      %s504 = smul.addr %s503, 2
      %s505 = smul.addr %s501, 32
      %s506 = sadd.s32 %s504, %s505
      %s507 = smul.addr %s506, 8
      %s508 = scalar_lea.vmem %s2, %s507
      %s509 = smul.u32 %s26, 8
      %s510 = sadd.s32 %s509, 8
      %p511 = scmp.lt.s32.totalorder %s510, 15
      %s512 = scalar_select %p511, %s510, 15
      %s513 = smul.u32 8, %s26
      %p514 = scmp.lt.s32.totalorder %s25, 1
      %s515 = scalar_select %p514, %s25, 1
      %p516 = scmp.lt.s32.totalorder %s513, 15
      %s517 = scalar_select %p516, %s513, 15
      %s518 = smul.addr %s517, 2
      %s519 = smul.addr %s515, 32
      %s520 = sadd.s32 %s518, %s519
      %s521 = smul.addr %s520, 8
      %s522 = scalar_lea.vmem %s7, %s521
      %s523 = smul.u32 8, %s26
      %p524 = scmp.lt.s32.totalorder %s25, 1
      %s525 = scalar_select %p524, %s25, 1
      %p526 = scmp.lt.s32.totalorder %s26, 1
      %s527 = scalar_select %p526, %s26, 1
      %s528 = smul.addr %s525, 2
      %s529 = sadd.s32 %s527, %s528
      %s530 = scalar_lea.vmem %s8, %s529
      %p531 = scmp.lt.s32.totalorder %s25, 1
      %s532 = scalar_select %p531, %s25, 1
      %p533 = scmp.lt.s32.totalorder %s26, 1
      %s534 = scalar_select %p533, %s26, 1
      %s535 = smul.addr %s532, 2
      %s536 = sadd.s32 %s534, %s535
      %s537 = scalar_lea.vmem %s9, %s536
      %v538 = vld [vmem:[%s3] sm:$0x1]
      %v539 = vld [vmem:[%s4] sm:$0x1]
      %v540 = vld [vmem:[%s477] sm:$0xff]
      %v541 = vld [vmem:[%s477 + $0x8] sm:$0xff]
      %v542 = vld [vmem:[%s477 + $0x10] sm:$0xff]
      %v543 = vld [vmem:[%s477 + $0x18] sm:$0xff]
      %v544 = vld [vmem:[%s477 + $0x20] sm:$0xff]
      %v545 = vld [vmem:[%s477 + $0x28] sm:$0xff]
      %v546 = vld [vmem:[%s477 + $0x30] sm:$0xff]
      %v547 = vld [vmem:[%s477 + $0x38] sm:$0xff]
      %v548 = vld [vmem:[%s477 + $0x40] sm:$0xff]
      %v549 = vld [vmem:[%s477 + $0x48] sm:$0xff]
      %v550 = vld [vmem:[%s477 + $0x50] sm:$0xff]
      %v551 = vld [vmem:[%s477 + $0x58] sm:$0xff]
      %v552 = vld [vmem:[%s477 + $0x60] sm:$0xff]
      %v553 = vld [vmem:[%s477 + $0x68] sm:$0xff]
      %v554 = vld [vmem:[%s477 + $0x70] sm:$0xff]
      %v555 = vld [vmem:[%s477 + $0x78] sm:$0xff]
      %v557 = vperm.slane %v538, 0
      %v559 = vmul.f32 %v540, %v557
      %v560 = vmul.f32 %v541, %v557
      %v561 = vmul.f32 %v542, %v557
      %v562 = vmul.f32 %v543, %v557
      %v563 = vmul.f32 %v544, %v557
      %v564 = vmul.f32 %v545, %v557
      %v565 = vmul.f32 %v546, %v557
      %v566 = vmul.f32 %v547, %v557
      %v567 = vmul.f32 %v548, %v557
      %v568 = vmul.f32 %v549, %v557
      %v569 = vmul.f32 %v550, %v557
      %v570 = vmul.f32 %v551, %v557
      %v571 = vmul.f32 %v552, %v557
      %v572 = vmul.f32 %v553, %v557
      %v573 = vmul.f32 %v554, %v557
      %v574 = vmul.f32 %v555, %v557
      %v576 = vperm.slane %v539, 0
      %v578 = vadd.f32 %v559, %v576
      %v579 = vadd.f32 %v560, %v576
      %v580 = vadd.f32 %v561, %v576
      %v581 = vadd.f32 %v562, %v576
      %v582 = vadd.f32 %v563, %v576
      %v583 = vadd.f32 %v564, %v576
      %v584 = vadd.f32 %v565, %v576
      %v585 = vadd.f32 %v566, %v576
      %v586 = vadd.f32 %v567, %v576
      %v587 = vadd.f32 %v568, %v576
      %v588 = vadd.f32 %v569, %v576
      %v589 = vadd.f32 %v570, %v576
      %v590 = vadd.f32 %v571, %v576
      %v591 = vadd.f32 %v572, %v576
      %v592 = vadd.f32 %v573, %v576
      %v593 = vadd.f32 %v574, %v576
      %v594 = vmax.f32 %v578, 0.0
      %v595 = vmax.f32 %v579, 0.0
      %v596 = vmax.f32 %v580, 0.0
      %v597 = vmax.f32 %v581, 0.0
      %v598 = vmax.f32 %v582, 0.0
      %v599 = vmax.f32 %v583, 0.0
      %v600 = vmax.f32 %v584, 0.0
      %v601 = vmax.f32 %v585, 0.0
      %v602 = vmax.f32 %v586, 0.0
      %v603 = vmax.f32 %v587, 0.0
      %v604 = vmax.f32 %v588, 0.0
      %v605 = vmax.f32 %v589, 0.0
      %v606 = vmax.f32 %v590, 0.0
      %v607 = vmax.f32 %v591, 0.0
      %v608 = vmax.f32 %v592, 0.0
      %v609 = vmax.f32 %v593, 0.0
      %v610 = vld [vmem:[%s491] sm:$0xff]
      %v611 = vld [vmem:[%s491 + $0x8] sm:$0xff]
      %v612 = vmul.f32 %v610, %v557
      %v613 = vmul.f32 %v611, %v557
      %v614 = vadd.f32 %v612, %v576
      %v615 = vadd.f32 %v613, %v576
      %v616 = vmax.f32 %v614, 0.0
      %v617 = vmax.f32 %v615, 0.0
      %v618 = vld [vmem:[%s508] sm:$0xff]
      %v619 = vld [vmem:[%s508 + $0x8] sm:$0xff]
      %v620 = vmul.f32 %v618, %v557
      %v621 = vmul.f32 %v619, %v557
      %v622 = vadd.f32 %v620, %v576
      %v623 = vadd.f32 %v621, %v576
      %v624 = vmax.f32 %v622, 0.0
      %v625 = vmax.f32 %v623, 0.0
      %p626 = scmp.gt.s32.totalorder %s26, 0
      %s627 = scalar_select %p626, 1, 0
      %v628 = vstv %s627
      %vm629 = vcmp.eq.s32.totalorder %v628, 1
      %v630 = vsel %vm629, %v616, 0.0
      %v631 = vsel %vm629, %v617, 0.0
      %p632 = scmp.lt.s32.totalorder %s26, 1
      %s633 = scalar_select %p632, 1, 0
      %v634 = vstv %s633
      %vm635 = vcmp.eq.s32.totalorder %v634, 1
      %v636 = vsel %vm635, %v624, 0.0
      %v637 = vsel %vm635, %v625, 0.0
      %s638 = scalar_lea.vmem [#allocation2], 24
      %vm639 = vcmask 64512
      %640 = vst.msk [vmem:[%s638 + $0x1] sm:$0xff] %vm639, %v594
      %641 = vst.msk [vmem:[%s638 + $0x9] sm:$0xff] %vm639, %v595
      %642 = vst.msk [vmem:[%s638 + $0x19] sm:$0xff] %vm639, %v596
      %643 = vst.msk [vmem:[%s638 + $0x21] sm:$0xff] %vm639, %v597
      %644 = vst.msk [vmem:[%s638 + $0x31] sm:$0xff] %vm639, %v598
      %645 = vst.msk [vmem:[%s638 + $0x39] sm:$0xff] %vm639, %v599
      %646 = vst.msk [vmem:[%s638 + $0x49] sm:$0xff] %vm639, %v600
      %647 = vst.msk [vmem:[%s638 + $0x51] sm:$0xff] %vm639, %v601
      %648 = vst.msk [vmem:[%s638 + $0x61] sm:$0xff] %vm639, %v602
      %649 = vst.msk [vmem:[%s638 + $0x69] sm:$0xff] %vm639, %v603
      %650 = vst.msk [vmem:[%s638 + $0x79] sm:$0xff] %vm639, %v604
      %651 = vst.msk [vmem:[%s638 + $0x81] sm:$0xff] %vm639, %v605
      %652 = vst.msk [vmem:[%s638 + $0x91] sm:$0xff] %vm639, %v606
      %653 = vst.msk [vmem:[%s638 + $0x99] sm:$0xff] %vm639, %v607
      %654 = vst.msk [vmem:[%s638 + $0xa9] sm:$0xff] %vm639, %v608
      %655 = vst.msk [vmem:[%s638 + $0xb1] sm:$0xff] %vm639, %v609
      %656 = vst.msk [vmem:[#allocation2 + $0x1] sm:$0xff] %vm639, %v630
      %657 = vst.msk [vmem:[#allocation2 + $0x9] sm:$0xff] %vm639, %v631
      %s658 = scalar_lea.vmem [#allocation2], 216
      %659 = vst.msk [vmem:[%s658 + $0x1] sm:$0xff] %vm639, %v636
      %660 = vst.msk [vmem:[%s658 + $0x9] sm:$0xff] %vm639, %v637
      %vm661 = vcmask 57344
      %662 = vst.msk [vmem:[#allocation2] sm:$0x1] %vm661, 0.0
      %663 = vst.msk [vmem:[#allocation2 + $0x18] sm:$0x1] %vm661, 0.0
      %664 = vst.msk [vmem:[#allocation2 + $0x30] sm:$0x1] %vm661, 0.0
      %665 = vst.msk [vmem:[#allocation2 + $0x48] sm:$0x1] %vm661, 0.0
      %666 = vst.msk [vmem:[#allocation2 + $0x60] sm:$0x1] %vm661, 0.0
      %667 = vst.msk [vmem:[#allocation2 + $0x78] sm:$0x1] %vm661, 0.0
      %668 = vst.msk [vmem:[#allocation2 + $0x90] sm:$0x1] %vm661, 0.0
      %669 = vst.msk [vmem:[#allocation2 + $0xa8] sm:$0x1] %vm661, 0.0
      %670 = vst.msk [vmem:[#allocation2 + $0xc0] sm:$0x1] %vm661, 0.0
      %671 = vst.msk [vmem:[#allocation2 + $0xd8] sm:$0x1] %vm661, 0.0
      %vm672 = vcmask 63488
      %673 = vst.msk [vmem:[#allocation2 + $0x11] sm:$0x7f] %vm672, 0.0
      %674 = vst.msk [vmem:[#allocation2 + $0x29] sm:$0x7f] %vm672, 0.0
      %675 = vst.msk [vmem:[#allocation2 + $0x41] sm:$0x7f] %vm672, 0.0
      %676 = vst.msk [vmem:[#allocation2 + $0x59] sm:$0x7f] %vm672, 0.0
      %677 = vst.msk [vmem:[#allocation2 + $0x71] sm:$0x7f] %vm672, 0.0
      %678 = vst.msk [vmem:[#allocation2 + $0x89] sm:$0x7f] %vm672, 0.0
      %679 = vst.msk [vmem:[#allocation2 + $0xa1] sm:$0x7f] %vm672, 0.0
      %680 = vst.msk [vmem:[#allocation2 + $0xb9] sm:$0x7f] %vm672, 0.0
      %681 = vst.msk [vmem:[#allocation2 + $0xd1] sm:$0x7f] %vm672, 0.0
      %682 = vst.msk [vmem:[#allocation2 + $0xe9] sm:$0x7f] %vm672, 0.0
      %v683 = vld [vmem:[#allocation2] sm:$0xff]
      %v684 = vld [vmem:[#allocation2 + $0x8] sm:$0xff]
      %v685 = vld [vmem:[#allocation2 + $0x10] sm:$0xff]
      %v686 = vld [vmem:[#allocation2 + $0x18] sm:$0xff]
      %v687 = vld [vmem:[#allocation2 + $0x20] sm:$0xff]
      %v688 = vld [vmem:[#allocation2 + $0x28] sm:$0xff]
      %v689 = vld [vmem:[#allocation2 + $0x30] sm:$0xff]
      %v690 = vld [vmem:[#allocation2 + $0x38] sm:$0xff]
      %v691 = vld [vmem:[#allocation2 + $0x40] sm:$0xff]
      %v692 = vld [vmem:[#allocation2 + $0x48] sm:$0xff]
      %v693 = vld [vmem:[#allocation2 + $0x50] sm:$0xff]
      %v694 = vld [vmem:[#allocation2 + $0x58] sm:$0xff]
      %v695 = vld [vmem:[#allocation2 + $0x60] sm:$0xff]
      %v696 = vld [vmem:[#allocation2 + $0x68] sm:$0xff]
      %v697 = vld [vmem:[#allocation2 + $0x70] sm:$0xff]
      %v698 = vld [vmem:[#allocation2 + $0x78] sm:$0xff]
      %v699 = vld [vmem:[#allocation2 + $0x80] sm:$0xff]
      %v700 = vld [vmem:[#allocation2 + $0x88] sm:$0xff]
      %v701 = vld [vmem:[#allocation2 + $0x90] sm:$0xff]
      %v702 = vld [vmem:[#allocation2 + $0x98] sm:$0xff]
      %v703 = vld [vmem:[#allocation2 + $0xa0] sm:$0xff]
      %v704 = vld [vmem:[#allocation2 + $0xa8] sm:$0xff]
      %v705 = vld [vmem:[#allocation2 + $0xb0] sm:$0xff]
      %v706 = vld [vmem:[#allocation2 + $0xb8] sm:$0xff]
      %v707 = vld [vmem:[#allocation2 + $0xc0] sm:$0xff]
      %v708 = vld [vmem:[#allocation2 + $0xc8] sm:$0xff]
      %v709 = vld [vmem:[#allocation2 + $0xd0] sm:$0xff]
      %v710 = vld [vmem:[#allocation2 + $0xd8] sm:$0xff]
      %v711 = vld [vmem:[#allocation2 + $0xe0] sm:$0xff]
      %v712 = vld [vmem:[#allocation2 + $0xe8] sm:$0xff]
      %v713 = vld [vmem:[%s5] sm:$0xff]
      %v714 = vld [vmem:[%s5 + $0x8] sm:$0xff]
      %v715 = vld [vmem:[%s5 + $0x10] sm:$0xff]
      %v716 = vld [vmem:[%s5 + $0x18] sm:$0xff]
      %v717 = vld [vmem:[%s5 + $0x20] sm:$0xff]
      %v718 = vld [vmem:[%s5 + $0x28] sm:$0xff]
      %v719 = vld [vmem:[%s5 + $0x30] sm:$0xff]
      %v720 = vld [vmem:[%s5 + $0x38] sm:$0xff]
      %v721 = vld [vmem:[%s5 + $0x40] sm:$0xff]
      %v723 = vsel %vm639, %v683, 0
      %v726 = vsel %vm639, %v684, 0
      %v729 = vsel %vm639, %v686, 0
      %v732 = vsel %vm639, %v687, 0
      %v735 = vsel %vm639, %v689, 0
      %v738 = vsel %vm639, %v690, 0
      %v741 = vsel %vm639, %v692, 0
      %v744 = vsel %vm639, %v693, 0
      %v747 = vsel %vm639, %v695, 0
      %v750 = vsel %vm639, %v696, 0
      %v753 = vsel %vm639, %v698, 0
      %v756 = vsel %vm639, %v699, 0
      %v759 = vsel %vm639, %v701, 0
      %v762 = vsel %vm639, %v702, 0
      %v765 = vsel %vm639, %v704, 0
      %v768 = vsel %vm639, %v705, 0
      %770 = vmatpush.msra.mxu0 0.0
      %771 = vmatpush.msra.mxu0 0.0
      %772 = vmatpush.msra.mxu0 0.0
      %773 = vmatpush.msra.mxu0 0.0
      %774 = vmatpush.msra.mxu0 0.0
      %775 = vmatpush.msra.mxu0 0.0
      %776 = vmatpush.msra.mxu0 0.0
      %777 = vmatpush.msra.mxu0 0.0
      %778 = vmatpush.msra.mxu0 0.0
      %779 = vmatpush.msra.mxu0 0.0
      %780 = vmatpush.msra.mxu0 0.0
      %781 = vmatpush.msra.mxu0 0.0
      %782 = vmatpush.msra.mxu0 0.0
      %783 = vmatpush.msra.mxu0 0.0
      %784 = vmatpush.msra.mxu0 0.0
      %785 = vmatpush.msra.mxu0 %v713
      %786 = vmatmul.f32.gmra.mxu0 %v723
      %v787 = vpop.f32.mrf.mxu0
      %v788 = vadd.f32 0.0, %v787
      %789 = vmatmul.f32.gmra.mxu0 %v726
      %v790 = vpop.f32.mrf.mxu0
      %v791 = vadd.f32 0.0, %v790
      %792 = vmatmul.f32.gmra.mxu0 %v729
      %v793 = vpop.f32.mrf.mxu0
      %v794 = vadd.f32 0.0, %v793
      %795 = vmatmul.f32.gmra.mxu0 %v732
      %v796 = vpop.f32.mrf.mxu0
      %v797 = vadd.f32 0.0, %v796
      %798 = vmatmul.f32.gmra.mxu0 %v735
      %v799 = vpop.f32.mrf.mxu0
      %v800 = vadd.f32 0.0, %v799
      %801 = vmatmul.f32.gmra.mxu0 %v738
      %v802 = vpop.f32.mrf.mxu0
      %v803 = vadd.f32 0.0, %v802
      %804 = vmatmul.f32.gmra.mxu0 %v741
      %v805 = vpop.f32.mrf.mxu0
      %v806 = vadd.f32 0.0, %v805
      %807 = vmatmul.f32.gmra.mxu0 %v744
      %v808 = vpop.f32.mrf.mxu0
      %v809 = vadd.f32 0.0, %v808
      %810 = vmatmul.f32.gmra.mxu0 %v747
      %v811 = vpop.f32.mrf.mxu0
      %v812 = vadd.f32 0.0, %v811
      %813 = vmatmul.f32.gmra.mxu0 %v750
      %v814 = vpop.f32.mrf.mxu0
      %v815 = vadd.f32 0.0, %v814
      %816 = vmatmul.f32.gmra.mxu0 %v753
      %v817 = vpop.f32.mrf.mxu0
      %v818 = vadd.f32 0.0, %v817
      %819 = vmatmul.f32.gmra.mxu0 %v756
      %v820 = vpop.f32.mrf.mxu0
      %v821 = vadd.f32 0.0, %v820
      %822 = vmatmul.f32.gmra.mxu0 %v759
      %v823 = vpop.f32.mrf.mxu0
      %v824 = vadd.f32 0.0, %v823
      %825 = vmatmul.f32.gmra.mxu0 %v762
      %v826 = vpop.f32.mrf.mxu0
      %v827 = vadd.f32 0.0, %v826
      %828 = vmatmul.f32.gmra.mxu0 %v765
      %v829 = vpop.f32.mrf.mxu0
      %v830 = vadd.f32 0.0, %v829
      %831 = vmatmul.f32.gmra.mxu0 %v768
      %v832 = vpop.f32.mrf.mxu0
      %v833 = vadd.f32 0.0, %v832
      %834 = vdwg.mxu0
      %835 = vst.msk [vmem:[#allocation3] sm:$0xff] %vm639, %v788
      %836 = vst.msk [vmem:[#allocation3 + $0x8] sm:$0xff] %vm639, %v791
      %837 = vst.msk [vmem:[#allocation3 + $0x10] sm:$0xff] %vm639, %v794
      %838 = vst.msk [vmem:[#allocation3 + $0x18] sm:$0xff] %vm639, %v797
      %839 = vst.msk [vmem:[#allocation3 + $0x20] sm:$0xff] %vm639, %v800
      %840 = vst.msk [vmem:[#allocation3 + $0x28] sm:$0xff] %vm639, %v803
      %841 = vst.msk [vmem:[#allocation3 + $0x30] sm:$0xff] %vm639, %v806
      %842 = vst.msk [vmem:[#allocation3 + $0x38] sm:$0xff] %vm639, %v809
      %843 = vst.msk [vmem:[#allocation3 + $0x40] sm:$0xff] %vm639, %v812
      %844 = vst.msk [vmem:[#allocation3 + $0x48] sm:$0xff] %vm639, %v815
      %845 = vst.msk [vmem:[#allocation3 + $0x50] sm:$0xff] %vm639, %v818
      %846 = vst.msk [vmem:[#allocation3 + $0x58] sm:$0xff] %vm639, %v821
      %847 = vst.msk [vmem:[#allocation3 + $0x60] sm:$0xff] %vm639, %v824
      %848 = vst.msk [vmem:[#allocation3 + $0x68] sm:$0xff] %vm639, %v827
      %849 = vst.msk [vmem:[#allocation3 + $0x70] sm:$0xff] %vm639, %v830
      %850 = vst.msk [vmem:[#allocation3 + $0x78] sm:$0xff] %vm639, %v833
      %v852 = vsel %vm639, %v707, 0
      %v855 = vsel %vm639, %v708, 0
      %857 = vmatpush.msra.mxu0 0.0
      %858 = vmatpush.msra.mxu0 0.0
      %859 = vmatpush.msra.mxu0 0.0
      %860 = vmatpush.msra.mxu0 0.0
      %861 = vmatpush.msra.mxu0 0.0
      %862 = vmatpush.msra.mxu0 0.0
      %863 = vmatpush.msra.mxu0 0.0
      %864 = vmatpush.msra.mxu0 0.0
      %865 = vmatpush.msra.mxu0 0.0
      %866 = vmatpush.msra.mxu0 0.0
      %867 = vmatpush.msra.mxu0 0.0
      %868 = vmatpush.msra.mxu0 0.0
      %869 = vmatpush.msra.mxu0 0.0
      %870 = vmatpush.msra.mxu0 0.0
      %871 = vmatpush.msra.mxu0 0.0
      %872 = vmatpush.msra.mxu0 %v716
      %873 = vmatmul.f32.gmra.mxu0 %v729
      %v874 = vpop.f32.mrf.mxu0
      %v875 = vadd.f32 0.0, %v874
      %876 = vmatmul.f32.gmra.mxu0 %v732
      %v877 = vpop.f32.mrf.mxu0
      %v878 = vadd.f32 0.0, %v877
      %879 = vmatmul.f32.gmra.mxu0 %v735
      %v880 = vpop.f32.mrf.mxu0
      %v881 = vadd.f32 0.0, %v880
      %882 = vmatmul.f32.gmra.mxu0 %v738
      %v883 = vpop.f32.mrf.mxu0
      %v884 = vadd.f32 0.0, %v883
      %885 = vmatmul.f32.gmra.mxu0 %v741
      %v886 = vpop.f32.mrf.mxu0
      %v887 = vadd.f32 0.0, %v886
      %888 = vmatmul.f32.gmra.mxu0 %v744
      %v889 = vpop.f32.mrf.mxu0
      %v890 = vadd.f32 0.0, %v889
      %891 = vmatmul.f32.gmra.mxu0 %v747
      %v892 = vpop.f32.mrf.mxu0
      %v893 = vadd.f32 0.0, %v892
      %894 = vmatmul.f32.gmra.mxu0 %v750
      %v895 = vpop.f32.mrf.mxu0
      %v896 = vadd.f32 0.0, %v895
      %897 = vmatmul.f32.gmra.mxu0 %v753
      %v898 = vpop.f32.mrf.mxu0
      %v899 = vadd.f32 0.0, %v898
      %900 = vmatmul.f32.gmra.mxu0 %v756
      %v901 = vpop.f32.mrf.mxu0
      %v902 = vadd.f32 0.0, %v901
      %903 = vmatmul.f32.gmra.mxu0 %v759
      %v904 = vpop.f32.mrf.mxu0
      %v905 = vadd.f32 0.0, %v904
      %906 = vmatmul.f32.gmra.mxu0 %v762
      %v907 = vpop.f32.mrf.mxu0
      %v908 = vadd.f32 0.0, %v907
      %909 = vmatmul.f32.gmra.mxu0 %v765
      %v910 = vpop.f32.mrf.mxu0
      %v911 = vadd.f32 0.0, %v910
      %912 = vmatmul.f32.gmra.mxu0 %v768
      %v913 = vpop.f32.mrf.mxu0
      %v914 = vadd.f32 0.0, %v913
      %915 = vmatmul.f32.gmra.mxu0 %v852
      %v916 = vpop.f32.mrf.mxu0
      %v917 = vadd.f32 0.0, %v916
      %918 = vmatmul.f32.gmra.mxu0 %v855
      %v919 = vpop.f32.mrf.mxu0
      %v920 = vadd.f32 0.0, %v919
      %921 = vdwg.mxu0
      %v922 = vld [vmem:[#allocation3] sm:$0xff]
      %v923 = vld [vmem:[#allocation3 + $0x8] sm:$0xff]
      %v924 = vld [vmem:[#allocation3 + $0x10] sm:$0xff]
      %v925 = vld [vmem:[#allocation3 + $0x18] sm:$0xff]
      %v926 = vld [vmem:[#allocation3 + $0x20] sm:$0xff]
      %v927 = vld [vmem:[#allocation3 + $0x28] sm:$0xff]
      %v928 = vld [vmem:[#allocation3 + $0x30] sm:$0xff]
      %v929 = vld [vmem:[#allocation3 + $0x38] sm:$0xff]
      %v930 = vld [vmem:[#allocation3 + $0x40] sm:$0xff]
      %v931 = vld [vmem:[#allocation3 + $0x48] sm:$0xff]
      %v932 = vld [vmem:[#allocation3 + $0x50] sm:$0xff]
      %v933 = vld [vmem:[#allocation3 + $0x58] sm:$0xff]
      %v934 = vld [vmem:[#allocation3 + $0x60] sm:$0xff]
      %v935 = vld [vmem:[#allocation3 + $0x68] sm:$0xff]
      %v936 = vld [vmem:[#allocation3 + $0x70] sm:$0xff]
      %v937 = vld [vmem:[#allocation3 + $0x78] sm:$0xff]
      %v938 = vadd.f32 %v922, %v875
      %v939 = vadd.f32 %v923, %v878
      %v940 = vadd.f32 %v924, %v881
      %v941 = vadd.f32 %v925, %v884
      %v942 = vadd.f32 %v926, %v887
      %v943 = vadd.f32 %v927, %v890
      %v944 = vadd.f32 %v928, %v893
      %v945 = vadd.f32 %v929, %v896
      %v946 = vadd.f32 %v930, %v899
      %v947 = vadd.f32 %v931, %v902
      %v948 = vadd.f32 %v932, %v905
      %v949 = vadd.f32 %v933, %v908
      %v950 = vadd.f32 %v934, %v911
      %v951 = vadd.f32 %v935, %v914
      %v952 = vadd.f32 %v936, %v917
      %v953 = vadd.f32 %v937, %v920
      %954 = vst.msk [vmem:[#allocation3] sm:$0xff] %vm639, %v938
      %955 = vst.msk [vmem:[#allocation3 + $0x8] sm:$0xff] %vm639, %v939
      %956 = vst.msk [vmem:[#allocation3 + $0x10] sm:$0xff] %vm639, %v940
      %957 = vst.msk [vmem:[#allocation3 + $0x18] sm:$0xff] %vm639, %v941
      %958 = vst.msk [vmem:[#allocation3 + $0x20] sm:$0xff] %vm639, %v942
      %959 = vst.msk [vmem:[#allocation3 + $0x28] sm:$0xff] %vm639, %v943
      %960 = vst.msk [vmem:[#allocation3 + $0x30] sm:$0xff] %vm639, %v944
      %961 = vst.msk [vmem:[#allocation3 + $0x38] sm:$0xff] %vm639, %v945
      %962 = vst.msk [vmem:[#allocation3 + $0x40] sm:$0xff] %vm639, %v946
      %963 = vst.msk [vmem:[#allocation3 + $0x48] sm:$0xff] %vm639, %v947
      %964 = vst.msk [vmem:[#allocation3 + $0x50] sm:$0xff] %vm639, %v948
      %965 = vst.msk [vmem:[#allocation3 + $0x58] sm:$0xff] %vm639, %v949
      %966 = vst.msk [vmem:[#allocation3 + $0x60] sm:$0xff] %vm639, %v950
      %967 = vst.msk [vmem:[#allocation3 + $0x68] sm:$0xff] %vm639, %v951
      %968 = vst.msk [vmem:[#allocation3 + $0x70] sm:$0xff] %vm639, %v952
      %969 = vst.msk [vmem:[#allocation3 + $0x78] sm:$0xff] %vm639, %v953
      %v971 = vsel %vm639, %v710, 0
      %v974 = vsel %vm639, %v711, 0
      %976 = vmatpush.msra.mxu0 0.0
      %977 = vmatpush.msra.mxu0 0.0
      %978 = vmatpush.msra.mxu0 0.0
      %979 = vmatpush.msra.mxu0 0.0
      %980 = vmatpush.msra.mxu0 0.0
      %981 = vmatpush.msra.mxu0 0.0
      %982 = vmatpush.msra.mxu0 0.0
      %983 = vmatpush.msra.mxu0 0.0
      %984 = vmatpush.msra.mxu0 0.0
      %985 = vmatpush.msra.mxu0 0.0
      %986 = vmatpush.msra.mxu0 0.0
      %987 = vmatpush.msra.mxu0 0.0
      %988 = vmatpush.msra.mxu0 0.0
      %989 = vmatpush.msra.mxu0 0.0
      %990 = vmatpush.msra.mxu0 0.0
      %991 = vmatpush.msra.mxu0 %v719
      %992 = vmatmul.f32.gmra.mxu0 %v735
      %v993 = vpop.f32.mrf.mxu0
      %v994 = vadd.f32 0.0, %v993
      %995 = vmatmul.f32.gmra.mxu0 %v738
      %v996 = vpop.f32.mrf.mxu0
      %v997 = vadd.f32 0.0, %v996
      %998 = vmatmul.f32.gmra.mxu0 %v741
      %v999 = vpop.f32.mrf.mxu0
      %v1000 = vadd.f32 0.0, %v999
      %1001 = vmatmul.f32.gmra.mxu0 %v744
      %v1002 = vpop.f32.mrf.mxu0
      %v1003 = vadd.f32 0.0, %v1002
      %1004 = vmatmul.f32.gmra.mxu0 %v747
      %v1005 = vpop.f32.mrf.mxu0
      %v1006 = vadd.f32 0.0, %v1005
      %1007 = vmatmul.f32.gmra.mxu0 %v750
      %v1008 = vpop.f32.mrf.mxu0
      %v1009 = vadd.f32 0.0, %v1008
      %1010 = vmatmul.f32.gmra.mxu0 %v753
      %v1011 = vpop.f32.mrf.mxu0
      %v1012 = vadd.f32 0.0, %v1011
      %1013 = vmatmul.f32.gmra.mxu0 %v756
      %v1014 = vpop.f32.mrf.mxu0
      %v1015 = vadd.f32 0.0, %v1014
      %1016 = vmatmul.f32.gmra.mxu0 %v759
      %v1017 = vpop.f32.mrf.mxu0
      %v1018 = vadd.f32 0.0, %v1017
      %1019 = vmatmul.f32.gmra.mxu0 %v762
      %v1020 = vpop.f32.mrf.mxu0
      %v1021 = vadd.f32 0.0, %v1020
      %1022 = vmatmul.f32.gmra.mxu0 %v765
      %v1023 = vpop.f32.mrf.mxu0
      %v1024 = vadd.f32 0.0, %v1023
      %1025 = vmatmul.f32.gmra.mxu0 %v768
      %v1026 = vpop.f32.mrf.mxu0
      %v1027 = vadd.f32 0.0, %v1026
      %1028 = vmatmul.f32.gmra.mxu0 %v852
      %v1029 = vpop.f32.mrf.mxu0
      %v1030 = vadd.f32 0.0, %v1029
      %1031 = vmatmul.f32.gmra.mxu0 %v855
      %v1032 = vpop.f32.mrf.mxu0
      %v1033 = vadd.f32 0.0, %v1032
      %1034 = vmatmul.f32.gmra.mxu0 %v971
      %v1035 = vpop.f32.mrf.mxu0
      %v1036 = vadd.f32 0.0, %v1035
      %1037 = vmatmul.f32.gmra.mxu0 %v974
      %v1038 = vpop.f32.mrf.mxu0
      %v1039 = vadd.f32 0.0, %v1038
      %1040 = vdwg.mxu0
      %v1041 = vld [vmem:[#allocation3] sm:$0xff]
      %v1042 = vld [vmem:[#allocation3 + $0x8] sm:$0xff]
      %v1043 = vld [vmem:[#allocation3 + $0x10] sm:$0xff]
      %v1044 = vld [vmem:[#allocation3 + $0x18] sm:$0xff]
      %v1045 = vld [vmem:[#allocation3 + $0x20] sm:$0xff]
      %v1046 = vld [vmem:[#allocation3 + $0x28] sm:$0xff]
      %v1047 = vld [vmem:[#allocation3 + $0x30] sm:$0xff]
      %v1048 = vld [vmem:[#allocation3 + $0x38] sm:$0xff]
      %v1049 = vld [vmem:[#allocation3 + $0x40] sm:$0xff]
      %v1050 = vld [vmem:[#allocation3 + $0x48] sm:$0xff]
      %v1051 = vld [vmem:[#allocation3 + $0x50] sm:$0xff]
      %v1052 = vld [vmem:[#allocation3 + $0x58] sm:$0xff]
      %v1053 = vld [vmem:[#allocation3 + $0x60] sm:$0xff]
      %v1054 = vld [vmem:[#allocation3 + $0x68] sm:$0xff]
      %v1055 = vld [vmem:[#allocation3 + $0x70] sm:$0xff]
      %v1056 = vld [vmem:[#allocation3 + $0x78] sm:$0xff]
      %v1057 = vadd.f32 %v1041, %v994
      %v1058 = vadd.f32 %v1042, %v997
      %v1059 = vadd.f32 %v1043, %v1000
      %v1060 = vadd.f32 %v1044, %v1003
      %v1061 = vadd.f32 %v1045, %v1006
      %v1062 = vadd.f32 %v1046, %v1009
      %v1063 = vadd.f32 %v1047, %v1012
      %v1064 = vadd.f32 %v1048, %v1015
      %v1065 = vadd.f32 %v1049, %v1018
      %v1066 = vadd.f32 %v1050, %v1021
      %v1067 = vadd.f32 %v1051, %v1024
      %v1068 = vadd.f32 %v1052, %v1027
      %v1069 = vadd.f32 %v1053, %v1030
      %v1070 = vadd.f32 %v1054, %v1033
      %v1071 = vadd.f32 %v1055, %v1036
      %v1072 = vadd.f32 %v1056, %v1039
      %1073 = vst.msk [vmem:[#allocation3] sm:$0xff] %vm639, %v1057
      %1074 = vst.msk [vmem:[#allocation3 + $0x8] sm:$0xff] %vm639, %v1058
      %1075 = vst.msk [vmem:[#allocation3 + $0x10] sm:$0xff] %vm639, %v1059
      %1076 = vst.msk [vmem:[#allocation3 + $0x18] sm:$0xff] %vm639, %v1060
      %1077 = vst.msk [vmem:[#allocation3 + $0x20] sm:$0xff] %vm639, %v1061
      %1078 = vst.msk [vmem:[#allocation3 + $0x28] sm:$0xff] %vm639, %v1062
      %1079 = vst.msk [vmem:[#allocation3 + $0x30] sm:$0xff] %vm639, %v1063
      %1080 = vst.msk [vmem:[#allocation3 + $0x38] sm:$0xff] %vm639, %v1064
      %1081 = vst.msk [vmem:[#allocation3 + $0x40] sm:$0xff] %vm639, %v1065
      %1082 = vst.msk [vmem:[#allocation3 + $0x48] sm:$0xff] %vm639, %v1066
      %1083 = vst.msk [vmem:[#allocation3 + $0x50] sm:$0xff] %vm639, %v1067
      %1084 = vst.msk [vmem:[#allocation3 + $0x58] sm:$0xff] %vm639, %v1068
      %1085 = vst.msk [vmem:[#allocation3 + $0x60] sm:$0xff] %vm639, %v1069
      %1086 = vst.msk [vmem:[#allocation3 + $0x68] sm:$0xff] %vm639, %v1070
      %1087 = vst.msk [vmem:[#allocation3 + $0x70] sm:$0xff] %vm639, %v1071
      %1088 = vst.msk [vmem:[#allocation3 + $0x78] sm:$0xff] %vm639, %v1072
      %vm1097 = vcmask 1046528
      %v1098 = vrot.slane %v683, 1
      %v1099 = vrot.slane %v684, 1
      %v1100 = vsel %vm1097, %v1098, %v1099
      %v1101 = vrot.slane %v685, 1
      %v1102 = vsel %vm1097, %v1099, %v1101
      %v1103 = vrot.slane %v686, 1
      %v1104 = vrot.slane %v687, 1
      %v1105 = vsel %vm1097, %v1103, %v1104
      %v1106 = vrot.slane %v688, 1
      %v1107 = vsel %vm1097, %v1104, %v1106
      %v1108 = vrot.slane %v689, 1
      %v1109 = vrot.slane %v690, 1
      %v1110 = vsel %vm1097, %v1108, %v1109
      %v1111 = vrot.slane %v691, 1
      %v1112 = vsel %vm1097, %v1109, %v1111
      %v1113 = vrot.slane %v692, 1
      %v1114 = vrot.slane %v693, 1
      %v1115 = vsel %vm1097, %v1113, %v1114
      %v1116 = vrot.slane %v694, 1
      %v1117 = vsel %vm1097, %v1114, %v1116
      %v1118 = vrot.slane %v695, 1
      %v1119 = vrot.slane %v696, 1
      %v1120 = vsel %vm1097, %v1118, %v1119
      %v1121 = vrot.slane %v697, 1
      %v1122 = vsel %vm1097, %v1119, %v1121
      %v1123 = vrot.slane %v698, 1
      %v1124 = vrot.slane %v699, 1
      %v1125 = vsel %vm1097, %v1123, %v1124
      %v1126 = vrot.slane %v700, 1
      %v1127 = vsel %vm1097, %v1124, %v1126
      %v1128 = vrot.slane %v701, 1
      %v1129 = vrot.slane %v702, 1
      %v1130 = vsel %vm1097, %v1128, %v1129
      %v1131 = vrot.slane %v703, 1
      %v1132 = vsel %vm1097, %v1129, %v1131
      %v1133 = vrot.slane %v704, 1
      %v1134 = vrot.slane %v705, 1
      %v1135 = vsel %vm1097, %v1133, %v1134
      %v1136 = vrot.slane %v706, 1
      %v1137 = vsel %vm1097, %v1134, %v1136
      %v1138 = vsel %vm639, %v1100, 0
      %v1140 = vsel %vm639, %v1102, 0
      %v1142 = vsel %vm639, %v1105, 0
      %v1144 = vsel %vm639, %v1107, 0
      %v1146 = vsel %vm639, %v1110, 0
      %v1148 = vsel %vm639, %v1112, 0
      %v1150 = vsel %vm639, %v1115, 0
      %v1152 = vsel %vm639, %v1117, 0
      %v1154 = vsel %vm639, %v1120, 0
      %v1156 = vsel %vm639, %v1122, 0
      %v1158 = vsel %vm639, %v1125, 0
      %v1160 = vsel %vm639, %v1127, 0
      %v1162 = vsel %vm639, %v1130, 0
      %v1164 = vsel %vm639, %v1132, 0
      %v1166 = vsel %vm639, %v1135, 0
      %v1168 = vsel %vm639, %v1137, 0
      %1170 = vmatpush.msra.mxu0 0.0
      %1171 = vmatpush.msra.mxu0 0.0
      %1172 = vmatpush.msra.mxu0 0.0
      %1173 = vmatpush.msra.mxu0 0.0
      %1174 = vmatpush.msra.mxu0 0.0
      %1175 = vmatpush.msra.mxu0 0.0
      %1176 = vmatpush.msra.mxu0 0.0
      %1177 = vmatpush.msra.mxu0 0.0
      %1178 = vmatpush.msra.mxu0 0.0
      %1179 = vmatpush.msra.mxu0 0.0
      %1180 = vmatpush.msra.mxu0 0.0
      %1181 = vmatpush.msra.mxu0 0.0
      %1182 = vmatpush.msra.mxu0 0.0
      %1183 = vmatpush.msra.mxu0 0.0
      %1184 = vmatpush.msra.mxu0 0.0
      %1185 = vmatpush.msra.mxu0 %v714
      %1186 = vmatmul.f32.gmra.mxu0 %v1138
      %v1187 = vpop.f32.mrf.mxu0
      %v1188 = vadd.f32 0.0, %v1187
      %1189 = vmatmul.f32.gmra.mxu0 %v1140
      %v1190 = vpop.f32.mrf.mxu0
      %v1191 = vadd.f32 0.0, %v1190
      %1192 = vmatmul.f32.gmra.mxu0 %v1142
      %v1193 = vpop.f32.mrf.mxu0
      %v1194 = vadd.f32 0.0, %v1193
      %1195 = vmatmul.f32.gmra.mxu0 %v1144
      %v1196 = vpop.f32.mrf.mxu0
      %v1197 = vadd.f32 0.0, %v1196
      %1198 = vmatmul.f32.gmra.mxu0 %v1146
      %v1199 = vpop.f32.mrf.mxu0
      %v1200 = vadd.f32 0.0, %v1199
      %1201 = vmatmul.f32.gmra.mxu0 %v1148
      %v1202 = vpop.f32.mrf.mxu0
      %v1203 = vadd.f32 0.0, %v1202
      %1204 = vmatmul.f32.gmra.mxu0 %v1150
      %v1205 = vpop.f32.mrf.mxu0
      %v1206 = vadd.f32 0.0, %v1205
      %1207 = vmatmul.f32.gmra.mxu0 %v1152
      %v1208 = vpop.f32.mrf.mxu0
      %v1209 = vadd.f32 0.0, %v1208
      %1210 = vmatmul.f32.gmra.mxu0 %v1154
      %v1211 = vpop.f32.mrf.mxu0
      %v1212 = vadd.f32 0.0, %v1211
      %1213 = vmatmul.f32.gmra.mxu0 %v1156
      %v1214 = vpop.f32.mrf.mxu0
      %v1215 = vadd.f32 0.0, %v1214
      %1216 = vmatmul.f32.gmra.mxu0 %v1158
      %v1217 = vpop.f32.mrf.mxu0
      %v1218 = vadd.f32 0.0, %v1217
      %1219 = vmatmul.f32.gmra.mxu0 %v1160
      %v1220 = vpop.f32.mrf.mxu0
      %v1221 = vadd.f32 0.0, %v1220
      %1222 = vmatmul.f32.gmra.mxu0 %v1162
      %v1223 = vpop.f32.mrf.mxu0
      %v1224 = vadd.f32 0.0, %v1223
      %1225 = vmatmul.f32.gmra.mxu0 %v1164
      %v1226 = vpop.f32.mrf.mxu0
      %v1227 = vadd.f32 0.0, %v1226
      %1228 = vmatmul.f32.gmra.mxu0 %v1166
      %v1229 = vpop.f32.mrf.mxu0
      %v1230 = vadd.f32 0.0, %v1229
      %1231 = vmatmul.f32.gmra.mxu0 %v1168
      %v1232 = vpop.f32.mrf.mxu0
      %v1233 = vadd.f32 0.0, %v1232
      %1234 = vdwg.mxu0
      %v1235 = vld [vmem:[#allocation3] sm:$0xff]
      %v1236 = vld [vmem:[#allocation3 + $0x8] sm:$0xff]
      %v1237 = vld [vmem:[#allocation3 + $0x10] sm:$0xff]
      %v1238 = vld [vmem:[#allocation3 + $0x18] sm:$0xff]
      %v1239 = vld [vmem:[#allocation3 + $0x20] sm:$0xff]
      %v1240 = vld [vmem:[#allocation3 + $0x28] sm:$0xff]
      %v1241 = vld [vmem:[#allocation3 + $0x30] sm:$0xff]
      %v1242 = vld [vmem:[#allocation3 + $0x38] sm:$0xff]
      %v1243 = vld [vmem:[#allocation3 + $0x40] sm:$0xff]
      %v1244 = vld [vmem:[#allocation3 + $0x48] sm:$0xff]
      %v1245 = vld [vmem:[#allocation3 + $0x50] sm:$0xff]
      %v1246 = vld [vmem:[#allocation3 + $0x58] sm:$0xff]
      %v1247 = vld [vmem:[#allocation3 + $0x60] sm:$0xff]
      %v1248 = vld [vmem:[#allocation3 + $0x68] sm:$0xff]
      %v1249 = vld [vmem:[#allocation3 + $0x70] sm:$0xff]
      %v1250 = vld [vmem:[#allocation3 + $0x78] sm:$0xff]
      %v1251 = vadd.f32 %v1235, %v1188
      %v1252 = vadd.f32 %v1236, %v1191
      %v1253 = vadd.f32 %v1237, %v1194
      %v1254 = vadd.f32 %v1238, %v1197
      %v1255 = vadd.f32 %v1239, %v1200
      %v1256 = vadd.f32 %v1240, %v1203
      %v1257 = vadd.f32 %v1241, %v1206
      %v1258 = vadd.f32 %v1242, %v1209
      %v1259 = vadd.f32 %v1243, %v1212
      %v1260 = vadd.f32 %v1244, %v1215
      %v1261 = vadd.f32 %v1245, %v1218
      %v1262 = vadd.f32 %v1246, %v1221
      %v1263 = vadd.f32 %v1247, %v1224
      %v1264 = vadd.f32 %v1248, %v1227
      %v1265 = vadd.f32 %v1249, %v1230
      %v1266 = vadd.f32 %v1250, %v1233
      %1267 = vst.msk [vmem:[#allocation3] sm:$0xff] %vm639, %v1251
      %1268 = vst.msk [vmem:[#allocation3 + $0x8] sm:$0xff] %vm639, %v1252
      %1269 = vst.msk [vmem:[#allocation3 + $0x10] sm:$0xff] %vm639, %v1253
      %1270 = vst.msk [vmem:[#allocation3 + $0x18] sm:$0xff] %vm639, %v1254
      %1271 = vst.msk [vmem:[#allocation3 + $0x20] sm:$0xff] %vm639, %v1255
      %1272 = vst.msk [vmem:[#allocation3 + $0x28] sm:$0xff] %vm639, %v1256
      %1273 = vst.msk [vmem:[#allocation3 + $0x30] sm:$0xff] %vm639, %v1257
      %1274 = vst.msk [vmem:[#allocation3 + $0x38] sm:$0xff] %vm639, %v1258
      %1275 = vst.msk [vmem:[#allocation3 + $0x40] sm:$0xff] %vm639, %v1259
      %1276 = vst.msk [vmem:[#allocation3 + $0x48] sm:$0xff] %vm639, %v1260
      %1277 = vst.msk [vmem:[#allocation3 + $0x50] sm:$0xff] %vm639, %v1261
      %1278 = vst.msk [vmem:[#allocation3 + $0x58] sm:$0xff] %vm639, %v1262
      %1279 = vst.msk [vmem:[#allocation3 + $0x60] sm:$0xff] %vm639, %v1263
      %1280 = vst.msk [vmem:[#allocation3 + $0x68] sm:$0xff] %vm639, %v1264
      %1281 = vst.msk [vmem:[#allocation3 + $0x70] sm:$0xff] %vm639, %v1265
      %1282 = vst.msk [vmem:[#allocation3 + $0x78] sm:$0xff] %vm639, %v1266
      %v1284 = vrot.slane %v707, 1
      %v1285 = vrot.slane %v708, 1
      %v1286 = vsel %vm1097, %v1284, %v1285
      %v1287 = vrot.slane %v709, 1
      %v1288 = vsel %vm1097, %v1285, %v1287
      %v1289 = vsel %vm639, %v1286, 0
      %v1291 = vsel %vm639, %v1288, 0
      %1293 = vmatpush.msra.mxu0 0.0
      %1294 = vmatpush.msra.mxu0 0.0
      %1295 = vmatpush.msra.mxu0 0.0
      %1296 = vmatpush.msra.mxu0 0.0
      %1297 = vmatpush.msra.mxu0 0.0
      %1298 = vmatpush.msra.mxu0 0.0
      %1299 = vmatpush.msra.mxu0 0.0
      %1300 = vmatpush.msra.mxu0 0.0
      %1301 = vmatpush.msra.mxu0 0.0
      %1302 = vmatpush.msra.mxu0 0.0
      %1303 = vmatpush.msra.mxu0 0.0
      %1304 = vmatpush.msra.mxu0 0.0
      %1305 = vmatpush.msra.mxu0 0.0
      %1306 = vmatpush.msra.mxu0 0.0
      %1307 = vmatpush.msra.mxu0 0.0
      %1308 = vmatpush.msra.mxu0 %v717
      %1309 = vmatmul.f32.gmra.mxu0 %v1142
      %v1310 = vpop.f32.mrf.mxu0
      %v1311 = vadd.f32 0.0, %v1310
      %1312 = vmatmul.f32.gmra.mxu0 %v1144
      %v1313 = vpop.f32.mrf.mxu0
      %v1314 = vadd.f32 0.0, %v1313
      %1315 = vmatmul.f32.gmra.mxu0 %v1146
      %v1316 = vpop.f32.mrf.mxu0
      %v1317 = vadd.f32 0.0, %v1316
      %1318 = vmatmul.f32.gmra.mxu0 %v1148
      %v1319 = vpop.f32.mrf.mxu0
      %v1320 = vadd.f32 0.0, %v1319
      %1321 = vmatmul.f32.gmra.mxu0 %v1150
      %v1322 = vpop.f32.mrf.mxu0
      %v1323 = vadd.f32 0.0, %v1322
      %1324 = vmatmul.f32.gmra.mxu0 %v1152
      %v1325 = vpop.f32.mrf.mxu0
      %v1326 = vadd.f32 0.0, %v1325
      %1327 = vmatmul.f32.gmra.mxu0 %v1154
      %v1328 = vpop.f32.mrf.mxu0
      %v1329 = vadd.f32 0.0, %v1328
      %1330 = vmatmul.f32.gmra.mxu0 %v1156
      %v1331 = vpop.f32.mrf.mxu0
      %v1332 = vadd.f32 0.0, %v1331
      %1333 = vmatmul.f32.gmra.mxu0 %v1158
      %v1334 = vpop.f32.mrf.mxu0
      %v1335 = vadd.f32 0.0, %v1334
      %1336 = vmatmul.f32.gmra.mxu0 %v1160
      %v1337 = vpop.f32.mrf.mxu0
      %v1338 = vadd.f32 0.0, %v1337
      %1339 = vmatmul.f32.gmra.mxu0 %v1162
      %v1340 = vpop.f32.mrf.mxu0
      %v1341 = vadd.f32 0.0, %v1340
      %1342 = vmatmul.f32.gmra.mxu0 %v1164
      %v1343 = vpop.f32.mrf.mxu0
      %v1344 = vadd.f32 0.0, %v1343
      %1345 = vmatmul.f32.gmra.mxu0 %v1166
      %v1346 = vpop.f32.mrf.mxu0
      %v1347 = vadd.f32 0.0, %v1346
      %1348 = vmatmul.f32.gmra.mxu0 %v1168
      %v1349 = vpop.f32.mrf.mxu0
      %v1350 = vadd.f32 0.0, %v1349
      %1351 = vmatmul.f32.gmra.mxu0 %v1289
      %v1352 = vpop.f32.mrf.mxu0
      %v1353 = vadd.f32 0.0, %v1352
      %1354 = vmatmul.f32.gmra.mxu0 %v1291
      %v1355 = vpop.f32.mrf.mxu0
      %v1356 = vadd.f32 0.0, %v1355
      %1357 = vdwg.mxu0
      %v1358 = vld [vmem:[#allocation3] sm:$0xff]
      %v1359 = vld [vmem:[#allocation3 + $0x8] sm:$0xff]
      %v1360 = vld [vmem:[#allocation3 + $0x10] sm:$0xff]
      %v1361 = vld [vmem:[#allocation3 + $0x18] sm:$0xff]
      %v1362 = vld [vmem:[#allocation3 + $0x20] sm:$0xff]
      %v1363 = vld [vmem:[#allocation3 + $0x28] sm:$0xff]
      %v1364 = vld [vmem:[#allocation3 + $0x30] sm:$0xff]
      %v1365 = vld [vmem:[#allocation3 + $0x38] sm:$0xff]
      %v1366 = vld [vmem:[#allocation3 + $0x40] sm:$0xff]
      %v1367 = vld [vmem:[#allocation3 + $0x48] sm:$0xff]
      %v1368 = vld [vmem:[#allocation3 + $0x50] sm:$0xff]
      %v1369 = vld [vmem:[#allocation3 + $0x58] sm:$0xff]
      %v1370 = vld [vmem:[#allocation3 + $0x60] sm:$0xff]
      %v1371 = vld [vmem:[#allocation3 + $0x68] sm:$0xff]
      %v1372 = vld [vmem:[#allocation3 + $0x70] sm:$0xff]
      %v1373 = vld [vmem:[#allocation3 + $0x78] sm:$0xff]
      %v1374 = vadd.f32 %v1358, %v1311
      %v1375 = vadd.f32 %v1359, %v1314
      %v1376 = vadd.f32 %v1360, %v1317
      %v1377 = vadd.f32 %v1361, %v1320
      %v1378 = vadd.f32 %v1362, %v1323
      %v1379 = vadd.f32 %v1363, %v1326
      %v1380 = vadd.f32 %v1364, %v1329
      %v1381 = vadd.f32 %v1365, %v1332
      %v1382 = vadd.f32 %v1366, %v1335
      %v1383 = vadd.f32 %v1367, %v1338
      %v1384 = vadd.f32 %v1368, %v1341
      %v1385 = vadd.f32 %v1369, %v1344
      %v1386 = vadd.f32 %v1370, %v1347
      %v1387 = vadd.f32 %v1371, %v1350
      %v1388 = vadd.f32 %v1372, %v1353
      %v1389 = vadd.f32 %v1373, %v1356
      %1390 = vst.msk [vmem:[#allocation3] sm:$0xff] %vm639, %v1374
      %1391 = vst.msk [vmem:[#allocation3 + $0x8] sm:$0xff] %vm639, %v1375
      %1392 = vst.msk [vmem:[#allocation3 + $0x10] sm:$0xff] %vm639, %v1376
      %1393 = vst.msk [vmem:[#allocation3 + $0x18] sm:$0xff] %vm639, %v1377
      %1394 = vst.msk [vmem:[#allocation3 + $0x20] sm:$0xff] %vm639, %v1378
      %1395 = vst.msk [vmem:[#allocation3 + $0x28] sm:$0xff] %vm639, %v1379
      %1396 = vst.msk [vmem:[#allocation3 + $0x30] sm:$0xff] %vm639, %v1380
      %1397 = vst.msk [vmem:[#allocation3 + $0x38] sm:$0xff] %vm639, %v1381
      %1398 = vst.msk [vmem:[#allocation3 + $0x40] sm:$0xff] %vm639, %v1382
      %1399 = vst.msk [vmem:[#allocation3 + $0x48] sm:$0xff] %vm639, %v1383
      %1400 = vst.msk [vmem:[#allocation3 + $0x50] sm:$0xff] %vm639, %v1384
      %1401 = vst.msk [vmem:[#allocation3 + $0x58] sm:$0xff] %vm639, %v1385
      %1402 = vst.msk [vmem:[#allocation3 + $0x60] sm:$0xff] %vm639, %v1386
      %1403 = vst.msk [vmem:[#allocation3 + $0x68] sm:$0xff] %vm639, %v1387
      %1404 = vst.msk [vmem:[#allocation3 + $0x70] sm:$0xff] %vm639, %v1388
      %1405 = vst.msk [vmem:[#allocation3 + $0x78] sm:$0xff] %vm639, %v1389
      %v1407 = vrot.slane %v710, 1
      %v1408 = vrot.slane %v711, 1
      %v1409 = vsel %vm1097, %v1407, %v1408
      %v1410 = vrot.slane %v712, 1
      %v1411 = vsel %vm1097, %v1408, %v1410
      %v1412 = vsel %vm639, %v1409, 0
      %v1414 = vsel %vm639, %v1411, 0
      %1416 = vmatpush.msra.mxu0 0.0
      %1417 = vmatpush.msra.mxu0 0.0
      %1418 = vmatpush.msra.mxu0 0.0
      %1419 = vmatpush.msra.mxu0 0.0
      %1420 = vmatpush.msra.mxu0 0.0
      %1421 = vmatpush.msra.mxu0 0.0
      %1422 = vmatpush.msra.mxu0 0.0
      %1423 = vmatpush.msra.mxu0 0.0
      %1424 = vmatpush.msra.mxu0 0.0
      %1425 = vmatpush.msra.mxu0 0.0
      %1426 = vmatpush.msra.mxu0 0.0
      %1427 = vmatpush.msra.mxu0 0.0
      %1428 = vmatpush.msra.mxu0 0.0
      %1429 = vmatpush.msra.mxu0 0.0
      %1430 = vmatpush.msra.mxu0 0.0
      %1431 = vmatpush.msra.mxu0 %v720
      %1432 = vmatmul.f32.gmra.mxu0 %v1146
      %v1433 = vpop.f32.mrf.mxu0
      %v1434 = vadd.f32 0.0, %v1433
      %1435 = vmatmul.f32.gmra.mxu0 %v1148
      %v1436 = vpop.f32.mrf.mxu0
      %v1437 = vadd.f32 0.0, %v1436
      %1438 = vmatmul.f32.gmra.mxu0 %v1150
      %v1439 = vpop.f32.mrf.mxu0
      %v1440 = vadd.f32 0.0, %v1439
      %1441 = vmatmul.f32.gmra.mxu0 %v1152
      %v1442 = vpop.f32.mrf.mxu0
      %v1443 = vadd.f32 0.0, %v1442
      %1444 = vmatmul.f32.gmra.mxu0 %v1154
      %v1445 = vpop.f32.mrf.mxu0
      %v1446 = vadd.f32 0.0, %v1445
      %1447 = vmatmul.f32.gmra.mxu0 %v1156
      %v1448 = vpop.f32.mrf.mxu0
      %v1449 = vadd.f32 0.0, %v1448
      %1450 = vmatmul.f32.gmra.mxu0 %v1158
      %v1451 = vpop.f32.mrf.mxu0
      %v1452 = vadd.f32 0.0, %v1451
      %1453 = vmatmul.f32.gmra.mxu0 %v1160
      %v1454 = vpop.f32.mrf.mxu0
      %v1455 = vadd.f32 0.0, %v1454
      %1456 = vmatmul.f32.gmra.mxu0 %v1162
      %v1457 = vpop.f32.mrf.mxu0
      %v1458 = vadd.f32 0.0, %v1457
      %1459 = vmatmul.f32.gmra.mxu0 %v1164
      %v1460 = vpop.f32.mrf.mxu0
      %v1461 = vadd.f32 0.0, %v1460
      %1462 = vmatmul.f32.gmra.mxu0 %v1166
      %v1463 = vpop.f32.mrf.mxu0
      %v1464 = vadd.f32 0.0, %v1463
      %1465 = vmatmul.f32.gmra.mxu0 %v1168
      %v1466 = vpop.f32.mrf.mxu0
      %v1467 = vadd.f32 0.0, %v1466
      %1468 = vmatmul.f32.gmra.mxu0 %v1289
      %v1469 = vpop.f32.mrf.mxu0
      %v1470 = vadd.f32 0.0, %v1469
      %1471 = vmatmul.f32.gmra.mxu0 %v1291
      %v1472 = vpop.f32.mrf.mxu0
      %v1473 = vadd.f32 0.0, %v1472
      %1474 = vmatmul.f32.gmra.mxu0 %v1412
      %v1475 = vpop.f32.mrf.mxu0
      %v1476 = vadd.f32 0.0, %v1475
      %1477 = vmatmul.f32.gmra.mxu0 %v1414
      %v1478 = vpop.f32.mrf.mxu0
      %v1479 = vadd.f32 0.0, %v1478
      %1480 = vdwg.mxu0
      %v1481 = vld [vmem:[#allocation3] sm:$0xff]
      %v1482 = vld [vmem:[#allocation3 + $0x8] sm:$0xff]
      %v1483 = vld [vmem:[#allocation3 + $0x10] sm:$0xff]
      %v1484 = vld [vmem:[#allocation3 + $0x18] sm:$0xff]
      %v1485 = vld [vmem:[#allocation3 + $0x20] sm:$0xff]
      %v1486 = vld [vmem:[#allocation3 + $0x28] sm:$0xff]
      %v1487 = vld [vmem:[#allocation3 + $0x30] sm:$0xff]
      %v1488 = vld [vmem:[#allocation3 + $0x38] sm:$0xff]
      %v1489 = vld [vmem:[#allocation3 + $0x40] sm:$0xff]
      %v1490 = vld [vmem:[#allocation3 + $0x48] sm:$0xff]
      %v1491 = vld [vmem:[#allocation3 + $0x50] sm:$0xff]
      %v1492 = vld [vmem:[#allocation3 + $0x58] sm:$0xff]
      %v1493 = vld [vmem:[#allocation3 + $0x60] sm:$0xff]
      %v1494 = vld [vmem:[#allocation3 + $0x68] sm:$0xff]
      %v1495 = vld [vmem:[#allocation3 + $0x70] sm:$0xff]
      %v1496 = vld [vmem:[#allocation3 + $0x78] sm:$0xff]
      %v1497 = vadd.f32 %v1481, %v1434
      %v1498 = vadd.f32 %v1482, %v1437
      %v1499 = vadd.f32 %v1483, %v1440
      %v1500 = vadd.f32 %v1484, %v1443
      %v1501 = vadd.f32 %v1485, %v1446
      %v1502 = vadd.f32 %v1486, %v1449
      %v1503 = vadd.f32 %v1487, %v1452
      %v1504 = vadd.f32 %v1488, %v1455
      %v1505 = vadd.f32 %v1489, %v1458
      %v1506 = vadd.f32 %v1490, %v1461
      %v1507 = vadd.f32 %v1491, %v1464
      %v1508 = vadd.f32 %v1492, %v1467
      %v1509 = vadd.f32 %v1493, %v1470
      %v1510 = vadd.f32 %v1494, %v1473
      %v1511 = vadd.f32 %v1495, %v1476
      %v1512 = vadd.f32 %v1496, %v1479
      %1513 = vst.msk [vmem:[#allocation3] sm:$0xff] %vm639, %v1497
      %1514 = vst.msk [vmem:[#allocation3 + $0x8] sm:$0xff] %vm639, %v1498
      %1515 = vst.msk [vmem:[#allocation3 + $0x10] sm:$0xff] %vm639, %v1499
      %1516 = vst.msk [vmem:[#allocation3 + $0x18] sm:$0xff] %vm639, %v1500
      %1517 = vst.msk [vmem:[#allocation3 + $0x20] sm:$0xff] %vm639, %v1501
      %1518 = vst.msk [vmem:[#allocation3 + $0x28] sm:$0xff] %vm639, %v1502
      %1519 = vst.msk [vmem:[#allocation3 + $0x30] sm:$0xff] %vm639, %v1503
      %1520 = vst.msk [vmem:[#allocation3 + $0x38] sm:$0xff] %vm639, %v1504
      %1521 = vst.msk [vmem:[#allocation3 + $0x40] sm:$0xff] %vm639, %v1505
      %1522 = vst.msk [vmem:[#allocation3 + $0x48] sm:$0xff] %vm639, %v1506
      %1523 = vst.msk [vmem:[#allocation3 + $0x50] sm:$0xff] %vm639, %v1507
      %1524 = vst.msk [vmem:[#allocation3 + $0x58] sm:$0xff] %vm639, %v1508
      %1525 = vst.msk [vmem:[#allocation3 + $0x60] sm:$0xff] %vm639, %v1509
      %1526 = vst.msk [vmem:[#allocation3 + $0x68] sm:$0xff] %vm639, %v1510
      %1527 = vst.msk [vmem:[#allocation3 + $0x70] sm:$0xff] %vm639, %v1511
      %1528 = vst.msk [vmem:[#allocation3 + $0x78] sm:$0xff] %vm639, %v1512
      %vm1529 = vcmask 1045504
      %v1530 = vrot.slane %v683, 2
      %v1531 = vrot.slane %v684, 2
      %v1532 = vsel %vm1529, %v1530, %v1531
      %v1533 = vrot.slane %v685, 2
      %v1534 = vsel %vm1529, %v1531, %v1533
      %v1535 = vrot.slane %v686, 2
      %v1536 = vrot.slane %v687, 2
      %v1537 = vsel %vm1529, %v1535, %v1536
      %v1538 = vrot.slane %v688, 2
      %v1539 = vsel %vm1529, %v1536, %v1538
      %v1540 = vrot.slane %v689, 2
      %v1541 = vrot.slane %v690, 2
      %v1542 = vsel %vm1529, %v1540, %v1541
      %v1543 = vrot.slane %v691, 2
      %v1544 = vsel %vm1529, %v1541, %v1543
      %v1545 = vrot.slane %v692, 2
      %v1546 = vrot.slane %v693, 2
      %v1547 = vsel %vm1529, %v1545, %v1546
      %v1548 = vrot.slane %v694, 2
      %v1549 = vsel %vm1529, %v1546, %v1548
      %v1550 = vrot.slane %v695, 2
      %v1551 = vrot.slane %v696, 2
      %v1552 = vsel %vm1529, %v1550, %v1551
      %v1553 = vrot.slane %v697, 2
      %v1554 = vsel %vm1529, %v1551, %v1553
      %v1555 = vrot.slane %v698, 2
      %v1556 = vrot.slane %v699, 2
      %v1557 = vsel %vm1529, %v1555, %v1556
      %v1558 = vrot.slane %v700, 2
      %v1559 = vsel %vm1529, %v1556, %v1558
      %v1560 = vrot.slane %v701, 2
      %v1561 = vrot.slane %v702, 2
      %v1562 = vsel %vm1529, %v1560, %v1561
      %v1563 = vrot.slane %v703, 2
      %v1564 = vsel %vm1529, %v1561, %v1563
      %v1565 = vrot.slane %v704, 2
      %v1566 = vrot.slane %v705, 2
      %v1567 = vsel %vm1529, %v1565, %v1566
      %v1568 = vrot.slane %v706, 2
      %v1569 = vsel %vm1529, %v1566, %v1568
      %v1570 = vsel %vm639, %v1532, 0
      %v1572 = vsel %vm639, %v1534, 0
      %v1574 = vsel %vm639, %v1537, 0
      %v1576 = vsel %vm639, %v1539, 0
      %v1578 = vsel %vm639, %v1542, 0
      %v1580 = vsel %vm639, %v1544, 0
      %v1582 = vsel %vm639, %v1547, 0
      %v1584 = vsel %vm639, %v1549, 0
      %v1586 = vsel %vm639, %v1552, 0
      %v1588 = vsel %vm639, %v1554, 0
      %v1590 = vsel %vm639, %v1557, 0
      %v1592 = vsel %vm639, %v1559, 0
      %v1594 = vsel %vm639, %v1562, 0
      %v1596 = vsel %vm639, %v1564, 0
      %v1598 = vsel %vm639, %v1567, 0
      %v1600 = vsel %vm639, %v1569, 0
      %1602 = vmatpush.msra.mxu0 0.0
      %1603 = vmatpush.msra.mxu0 0.0
      %1604 = vmatpush.msra.mxu0 0.0
      %1605 = vmatpush.msra.mxu0 0.0
      %1606 = vmatpush.msra.mxu0 0.0
      %1607 = vmatpush.msra.mxu0 0.0
      %1608 = vmatpush.msra.mxu0 0.0
      %1609 = vmatpush.msra.mxu0 0.0
      %1610 = vmatpush.msra.mxu0 0.0
      %1611 = vmatpush.msra.mxu0 0.0
      %1612 = vmatpush.msra.mxu0 0.0
      %1613 = vmatpush.msra.mxu0 0.0
      %1614 = vmatpush.msra.mxu0 0.0
      %1615 = vmatpush.msra.mxu0 0.0
      %1616 = vmatpush.msra.mxu0 0.0
      %1617 = vmatpush.msra.mxu0 %v715
      %1618 = vmatmul.f32.gmra.mxu0 %v1570
      %v1619 = vpop.f32.mrf.mxu0
      %v1620 = vadd.f32 0.0, %v1619
      %1621 = vmatmul.f32.gmra.mxu0 %v1572
      %v1622 = vpop.f32.mrf.mxu0
      %v1623 = vadd.f32 0.0, %v1622
      %1624 = vmatmul.f32.gmra.mxu0 %v1574
      %v1625 = vpop.f32.mrf.mxu0
      %v1626 = vadd.f32 0.0, %v1625
      %1627 = vmatmul.f32.gmra.mxu0 %v1576
      %v1628 = vpop.f32.mrf.mxu0
      %v1629 = vadd.f32 0.0, %v1628
      %1630 = vmatmul.f32.gmra.mxu0 %v1578
      %v1631 = vpop.f32.mrf.mxu0
      %v1632 = vadd.f32 0.0, %v1631
      %1633 = vmatmul.f32.gmra.mxu0 %v1580
      %v1634 = vpop.f32.mrf.mxu0
      %v1635 = vadd.f32 0.0, %v1634
      %1636 = vmatmul.f32.gmra.mxu0 %v1582
      %v1637 = vpop.f32.mrf.mxu0
      %v1638 = vadd.f32 0.0, %v1637
      %1639 = vmatmul.f32.gmra.mxu0 %v1584
      %v1640 = vpop.f32.mrf.mxu0
      %v1641 = vadd.f32 0.0, %v1640
      %1642 = vmatmul.f32.gmra.mxu0 %v1586
      %v1643 = vpop.f32.mrf.mxu0
      %v1644 = vadd.f32 0.0, %v1643
      %1645 = vmatmul.f32.gmra.mxu0 %v1588
      %v1646 = vpop.f32.mrf.mxu0
      %v1647 = vadd.f32 0.0, %v1646
      %1648 = vmatmul.f32.gmra.mxu0 %v1590
      %v1649 = vpop.f32.mrf.mxu0
      %v1650 = vadd.f32 0.0, %v1649
      %1651 = vmatmul.f32.gmra.mxu0 %v1592
      %v1652 = vpop.f32.mrf.mxu0
      %v1653 = vadd.f32 0.0, %v1652
      %1654 = vmatmul.f32.gmra.mxu0 %v1594
      %v1655 = vpop.f32.mrf.mxu0
      %v1656 = vadd.f32 0.0, %v1655
      %1657 = vmatmul.f32.gmra.mxu0 %v1596
      %v1658 = vpop.f32.mrf.mxu0
      %v1659 = vadd.f32 0.0, %v1658
      %1660 = vmatmul.f32.gmra.mxu0 %v1598
      %v1661 = vpop.f32.mrf.mxu0
      %v1662 = vadd.f32 0.0, %v1661
      %1663 = vmatmul.f32.gmra.mxu0 %v1600
      %v1664 = vpop.f32.mrf.mxu0
      %v1665 = vadd.f32 0.0, %v1664
      %1666 = vdwg.mxu0
      %v1667 = vld [vmem:[#allocation3] sm:$0xff]
      %v1668 = vld [vmem:[#allocation3 + $0x8] sm:$0xff]
      %v1669 = vld [vmem:[#allocation3 + $0x10] sm:$0xff]
      %v1670 = vld [vmem:[#allocation3 + $0x18] sm:$0xff]
      %v1671 = vld [vmem:[#allocation3 + $0x20] sm:$0xff]
      %v1672 = vld [vmem:[#allocation3 + $0x28] sm:$0xff]
      %v1673 = vld [vmem:[#allocation3 + $0x30] sm:$0xff]
      %v1674 = vld [vmem:[#allocation3 + $0x38] sm:$0xff]
      %v1675 = vld [vmem:[#allocation3 + $0x40] sm:$0xff]
      %v1676 = vld [vmem:[#allocation3 + $0x48] sm:$0xff]
      %v1677 = vld [vmem:[#allocation3 + $0x50] sm:$0xff]
      %v1678 = vld [vmem:[#allocation3 + $0x58] sm:$0xff]
      %v1679 = vld [vmem:[#allocation3 + $0x60] sm:$0xff]
      %v1680 = vld [vmem:[#allocation3 + $0x68] sm:$0xff]
      %v1681 = vld [vmem:[#allocation3 + $0x70] sm:$0xff]
      %v1682 = vld [vmem:[#allocation3 + $0x78] sm:$0xff]
      %v1683 = vadd.f32 %v1667, %v1620
      %v1684 = vadd.f32 %v1668, %v1623
      %v1685 = vadd.f32 %v1669, %v1626
      %v1686 = vadd.f32 %v1670, %v1629
      %v1687 = vadd.f32 %v1671, %v1632
      %v1688 = vadd.f32 %v1672, %v1635
      %v1689 = vadd.f32 %v1673, %v1638
      %v1690 = vadd.f32 %v1674, %v1641
      %v1691 = vadd.f32 %v1675, %v1644
      %v1692 = vadd.f32 %v1676, %v1647
      %v1693 = vadd.f32 %v1677, %v1650
      %v1694 = vadd.f32 %v1678, %v1653
      %v1695 = vadd.f32 %v1679, %v1656
      %v1696 = vadd.f32 %v1680, %v1659
      %v1697 = vadd.f32 %v1681, %v1662
      %v1698 = vadd.f32 %v1682, %v1665
      %1699 = vst.msk [vmem:[#allocation3] sm:$0xff] %vm639, %v1683
      %1700 = vst.msk [vmem:[#allocation3 + $0x8] sm:$0xff] %vm639, %v1684
      %1701 = vst.msk [vmem:[#allocation3 + $0x10] sm:$0xff] %vm639, %v1685
      %1702 = vst.msk [vmem:[#allocation3 + $0x18] sm:$0xff] %vm639, %v1686
      %1703 = vst.msk [vmem:[#allocation3 + $0x20] sm:$0xff] %vm639, %v1687
      %1704 = vst.msk [vmem:[#allocation3 + $0x28] sm:$0xff] %vm639, %v1688
      %1705 = vst.msk [vmem:[#allocation3 + $0x30] sm:$0xff] %vm639, %v1689
      %1706 = vst.msk [vmem:[#allocation3 + $0x38] sm:$0xff] %vm639, %v1690
      %1707 = vst.msk [vmem:[#allocation3 + $0x40] sm:$0xff] %vm639, %v1691
      %1708 = vst.msk [vmem:[#allocation3 + $0x48] sm:$0xff] %vm639, %v1692
      %1709 = vst.msk [vmem:[#allocation3 + $0x50] sm:$0xff] %vm639, %v1693
      %1710 = vst.msk [vmem:[#allocation3 + $0x58] sm:$0xff] %vm639, %v1694
      %1711 = vst.msk [vmem:[#allocation3 + $0x60] sm:$0xff] %vm639, %v1695
      %1712 = vst.msk [vmem:[#allocation3 + $0x68] sm:$0xff] %vm639, %v1696
      %1713 = vst.msk [vmem:[#allocation3 + $0x70] sm:$0xff] %vm639, %v1697
      %1714 = vst.msk [vmem:[#allocation3 + $0x78] sm:$0xff] %vm639, %v1698
      %v1715 = vrot.slane %v707, 2
      %v1716 = vrot.slane %v708, 2
      %v1717 = vsel %vm1529, %v1715, %v1716
      %v1718 = vrot.slane %v709, 2
      %v1719 = vsel %vm1529, %v1716, %v1718
      %v1720 = vsel %vm639, %v1717, 0
      %v1722 = vsel %vm639, %v1719, 0
      %1724 = vmatpush.msra.mxu0 0.0
      %1725 = vmatpush.msra.mxu0 0.0
      %1726 = vmatpush.msra.mxu0 0.0
      %1727 = vmatpush.msra.mxu0 0.0
      %1728 = vmatpush.msra.mxu0 0.0
      %1729 = vmatpush.msra.mxu0 0.0
      %1730 = vmatpush.msra.mxu0 0.0
      %1731 = vmatpush.msra.mxu0 0.0
      %1732 = vmatpush.msra.mxu0 0.0
      %1733 = vmatpush.msra.mxu0 0.0
      %1734 = vmatpush.msra.mxu0 0.0
      %1735 = vmatpush.msra.mxu0 0.0
      %1736 = vmatpush.msra.mxu0 0.0
      %1737 = vmatpush.msra.mxu0 0.0
      %1738 = vmatpush.msra.mxu0 0.0
      %1739 = vmatpush.msra.mxu0 %v718
      %1740 = vmatmul.f32.gmra.mxu0 %v1574
      %v1741 = vpop.f32.mrf.mxu0
      %v1742 = vadd.f32 0.0, %v1741
      %1743 = vmatmul.f32.gmra.mxu0 %v1576
      %v1744 = vpop.f32.mrf.mxu0
      %v1745 = vadd.f32 0.0, %v1744
      %1746 = vmatmul.f32.gmra.mxu0 %v1578
      %v1747 = vpop.f32.mrf.mxu0
      %v1748 = vadd.f32 0.0, %v1747
      %1749 = vmatmul.f32.gmra.mxu0 %v1580
      %v1750 = vpop.f32.mrf.mxu0
      %v1751 = vadd.f32 0.0, %v1750
      %1752 = vmatmul.f32.gmra.mxu0 %v1582
      %v1753 = vpop.f32.mrf.mxu0
      %v1754 = vadd.f32 0.0, %v1753
      %1755 = vmatmul.f32.gmra.mxu0 %v1584
      %v1756 = vpop.f32.mrf.mxu0
      %v1757 = vadd.f32 0.0, %v1756
      %1758 = vmatmul.f32.gmra.mxu0 %v1586
      %v1759 = vpop.f32.mrf.mxu0
      %v1760 = vadd.f32 0.0, %v1759
      %1761 = vmatmul.f32.gmra.mxu0 %v1588
      %v1762 = vpop.f32.mrf.mxu0
      %v1763 = vadd.f32 0.0, %v1762
      %1764 = vmatmul.f32.gmra.mxu0 %v1590
      %v1765 = vpop.f32.mrf.mxu0
      %v1766 = vadd.f32 0.0, %v1765
      %1767 = vmatmul.f32.gmra.mxu0 %v1592
      %v1768 = vpop.f32.mrf.mxu0
      %v1769 = vadd.f32 0.0, %v1768
      %1770 = vmatmul.f32.gmra.mxu0 %v1594
      %v1771 = vpop.f32.mrf.mxu0
      %v1772 = vadd.f32 0.0, %v1771
      %1773 = vmatmul.f32.gmra.mxu0 %v1596
      %v1774 = vpop.f32.mrf.mxu0
      %v1775 = vadd.f32 0.0, %v1774
      %1776 = vmatmul.f32.gmra.mxu0 %v1598
      %v1777 = vpop.f32.mrf.mxu0
      %v1778 = vadd.f32 0.0, %v1777
      %1779 = vmatmul.f32.gmra.mxu0 %v1600
      %v1780 = vpop.f32.mrf.mxu0
      %v1781 = vadd.f32 0.0, %v1780
      %1782 = vmatmul.f32.gmra.mxu0 %v1720
      %v1783 = vpop.f32.mrf.mxu0
      %v1784 = vadd.f32 0.0, %v1783
      %1785 = vmatmul.f32.gmra.mxu0 %v1722
      %v1786 = vpop.f32.mrf.mxu0
      %v1787 = vadd.f32 0.0, %v1786
      %1788 = vdwg.mxu0
      %v1789 = vld [vmem:[#allocation3] sm:$0xff]
      %v1790 = vld [vmem:[#allocation3 + $0x8] sm:$0xff]
      %v1791 = vld [vmem:[#allocation3 + $0x10] sm:$0xff]
      %v1792 = vld [vmem:[#allocation3 + $0x18] sm:$0xff]
      %v1793 = vld [vmem:[#allocation3 + $0x20] sm:$0xff]
      %v1794 = vld [vmem:[#allocation3 + $0x28] sm:$0xff]
      %v1795 = vld [vmem:[#allocation3 + $0x30] sm:$0xff]
      %v1796 = vld [vmem:[#allocation3 + $0x38] sm:$0xff]
      %v1797 = vld [vmem:[#allocation3 + $0x40] sm:$0xff]
      %v1798 = vld [vmem:[#allocation3 + $0x48] sm:$0xff]
      %v1799 = vld [vmem:[#allocation3 + $0x50] sm:$0xff]
      %v1800 = vld [vmem:[#allocation3 + $0x58] sm:$0xff]
      %v1801 = vld [vmem:[#allocation3 + $0x60] sm:$0xff]
      %v1802 = vld [vmem:[#allocation3 + $0x68] sm:$0xff]
      %v1803 = vld [vmem:[#allocation3 + $0x70] sm:$0xff]
      %v1804 = vld [vmem:[#allocation3 + $0x78] sm:$0xff]
      %v1805 = vadd.f32 %v1789, %v1742
      %v1806 = vadd.f32 %v1790, %v1745
      %v1807 = vadd.f32 %v1791, %v1748
      %v1808 = vadd.f32 %v1792, %v1751
      %v1809 = vadd.f32 %v1793, %v1754
      %v1810 = vadd.f32 %v1794, %v1757
      %v1811 = vadd.f32 %v1795, %v1760
      %v1812 = vadd.f32 %v1796, %v1763
      %v1813 = vadd.f32 %v1797, %v1766
      %v1814 = vadd.f32 %v1798, %v1769
      %v1815 = vadd.f32 %v1799, %v1772
      %v1816 = vadd.f32 %v1800, %v1775
      %v1817 = vadd.f32 %v1801, %v1778
      %v1818 = vadd.f32 %v1802, %v1781
      %v1819 = vadd.f32 %v1803, %v1784
      %v1820 = vadd.f32 %v1804, %v1787
      %1821 = vst.msk [vmem:[#allocation3] sm:$0xff] %vm639, %v1805
      %1822 = vst.msk [vmem:[#allocation3 + $0x8] sm:$0xff] %vm639, %v1806
      %1823 = vst.msk [vmem:[#allocation3 + $0x10] sm:$0xff] %vm639, %v1807
      %1824 = vst.msk [vmem:[#allocation3 + $0x18] sm:$0xff] %vm639, %v1808
      %1825 = vst.msk [vmem:[#allocation3 + $0x20] sm:$0xff] %vm639, %v1809
      %1826 = vst.msk [vmem:[#allocation3 + $0x28] sm:$0xff] %vm639, %v1810
      %1827 = vst.msk [vmem:[#allocation3 + $0x30] sm:$0xff] %vm639, %v1811
      %1828 = vst.msk [vmem:[#allocation3 + $0x38] sm:$0xff] %vm639, %v1812
      %1829 = vst.msk [vmem:[#allocation3 + $0x40] sm:$0xff] %vm639, %v1813
      %1830 = vst.msk [vmem:[#allocation3 + $0x48] sm:$0xff] %vm639, %v1814
      %1831 = vst.msk [vmem:[#allocation3 + $0x50] sm:$0xff] %vm639, %v1815
      %1832 = vst.msk [vmem:[#allocation3 + $0x58] sm:$0xff] %vm639, %v1816
      %1833 = vst.msk [vmem:[#allocation3 + $0x60] sm:$0xff] %vm639, %v1817
      %1834 = vst.msk [vmem:[#allocation3 + $0x68] sm:$0xff] %vm639, %v1818
      %1835 = vst.msk [vmem:[#allocation3 + $0x70] sm:$0xff] %vm639, %v1819
      %1836 = vst.msk [vmem:[#allocation3 + $0x78] sm:$0xff] %vm639, %v1820
      %v1837 = vrot.slane %v710, 2
      %v1838 = vrot.slane %v711, 2
      %v1839 = vsel %vm1529, %v1837, %v1838
      %v1840 = vrot.slane %v712, 2
      %v1841 = vsel %vm1529, %v1838, %v1840
      %v1842 = vsel %vm639, %v1839, 0
      %v1844 = vsel %vm639, %v1841, 0
      %1846 = vmatpush.msra.mxu0 0.0
      %1847 = vmatpush.msra.mxu0 0.0
      %1848 = vmatpush.msra.mxu0 0.0
      %1849 = vmatpush.msra.mxu0 0.0
      %1850 = vmatpush.msra.mxu0 0.0
      %1851 = vmatpush.msra.mxu0 0.0
      %1852 = vmatpush.msra.mxu0 0.0
      %1853 = vmatpush.msra.mxu0 0.0
      %1854 = vmatpush.msra.mxu0 0.0
      %1855 = vmatpush.msra.mxu0 0.0
      %1856 = vmatpush.msra.mxu0 0.0
      %1857 = vmatpush.msra.mxu0 0.0
      %1858 = vmatpush.msra.mxu0 0.0
      %1859 = vmatpush.msra.mxu0 0.0
      %1860 = vmatpush.msra.mxu0 0.0
      %1861 = vmatpush.msra.mxu0 %v721
      %1862 = vmatmul.f32.gmra.mxu0 %v1578
      %v1863 = vpop.f32.mrf.mxu0
      %v1864 = vadd.f32 0.0, %v1863
      %1865 = vmatmul.f32.gmra.mxu0 %v1580
      %v1866 = vpop.f32.mrf.mxu0
      %v1867 = vadd.f32 0.0, %v1866
      %1868 = vmatmul.f32.gmra.mxu0 %v1582
      %v1869 = vpop.f32.mrf.mxu0
      %v1870 = vadd.f32 0.0, %v1869
      %1871 = vmatmul.f32.gmra.mxu0 %v1584
      %v1872 = vpop.f32.mrf.mxu0
      %v1873 = vadd.f32 0.0, %v1872
      %1874 = vmatmul.f32.gmra.mxu0 %v1586
      %v1875 = vpop.f32.mrf.mxu0
      %v1876 = vadd.f32 0.0, %v1875
      %1877 = vmatmul.f32.gmra.mxu0 %v1588
      %v1878 = vpop.f32.mrf.mxu0
      %v1879 = vadd.f32 0.0, %v1878
      %1880 = vmatmul.f32.gmra.mxu0 %v1590
      %v1881 = vpop.f32.mrf.mxu0
      %v1882 = vadd.f32 0.0, %v1881
      %1883 = vmatmul.f32.gmra.mxu0 %v1592
      %v1884 = vpop.f32.mrf.mxu0
      %v1885 = vadd.f32 0.0, %v1884
      %1886 = vmatmul.f32.gmra.mxu0 %v1594
      %v1887 = vpop.f32.mrf.mxu0
      %v1888 = vadd.f32 0.0, %v1887
      %1889 = vmatmul.f32.gmra.mxu0 %v1596
      %v1890 = vpop.f32.mrf.mxu0
      %v1891 = vadd.f32 0.0, %v1890
      %1892 = vmatmul.f32.gmra.mxu0 %v1598
      %v1893 = vpop.f32.mrf.mxu0
      %v1894 = vadd.f32 0.0, %v1893
      %1895 = vmatmul.f32.gmra.mxu0 %v1600
      %v1896 = vpop.f32.mrf.mxu0
      %v1897 = vadd.f32 0.0, %v1896
      %1898 = vmatmul.f32.gmra.mxu0 %v1720
      %v1899 = vpop.f32.mrf.mxu0
      %v1900 = vadd.f32 0.0, %v1899
      %1901 = vmatmul.f32.gmra.mxu0 %v1722
      %v1902 = vpop.f32.mrf.mxu0
      %v1903 = vadd.f32 0.0, %v1902
      %1904 = vmatmul.f32.gmra.mxu0 %v1842
      %v1905 = vpop.f32.mrf.mxu0
      %v1906 = vadd.f32 0.0, %v1905
      %1907 = vmatmul.f32.gmra.mxu0 %v1844
      %v1908 = vpop.f32.mrf.mxu0
      %v1909 = vadd.f32 0.0, %v1908
      %1910 = vdwg.mxu0
      %v1911 = vld [vmem:[#allocation3] sm:$0xff]
      %v1912 = vld [vmem:[#allocation3 + $0x8] sm:$0xff]
      %v1913 = vld [vmem:[#allocation3 + $0x10] sm:$0xff]
      %v1914 = vld [vmem:[#allocation3 + $0x18] sm:$0xff]
      %v1915 = vld [vmem:[#allocation3 + $0x20] sm:$0xff]
      %v1916 = vld [vmem:[#allocation3 + $0x28] sm:$0xff]
      %v1917 = vld [vmem:[#allocation3 + $0x30] sm:$0xff]
      %v1918 = vld [vmem:[#allocation3 + $0x38] sm:$0xff]
      %v1919 = vld [vmem:[#allocation3 + $0x40] sm:$0xff]
      %v1920 = vld [vmem:[#allocation3 + $0x48] sm:$0xff]
      %v1921 = vld [vmem:[#allocation3 + $0x50] sm:$0xff]
      %v1922 = vld [vmem:[#allocation3 + $0x58] sm:$0xff]
      %v1923 = vld [vmem:[#allocation3 + $0x60] sm:$0xff]
      %v1924 = vld [vmem:[#allocation3 + $0x68] sm:$0xff]
      %v1925 = vld [vmem:[#allocation3 + $0x70] sm:$0xff]
      %v1926 = vld [vmem:[#allocation3 + $0x78] sm:$0xff]
      %v1927 = vadd.f32 %v1911, %v1864
      %v1928 = vadd.f32 %v1912, %v1867
      %v1929 = vadd.f32 %v1913, %v1870
      %v1930 = vadd.f32 %v1914, %v1873
      %v1931 = vadd.f32 %v1915, %v1876
      %v1932 = vadd.f32 %v1916, %v1879
      %v1933 = vadd.f32 %v1917, %v1882
      %v1934 = vadd.f32 %v1918, %v1885
      %v1935 = vadd.f32 %v1919, %v1888
      %v1936 = vadd.f32 %v1920, %v1891
      %v1937 = vadd.f32 %v1921, %v1894
      %v1938 = vadd.f32 %v1922, %v1897
      %v1939 = vadd.f32 %v1923, %v1900
      %v1940 = vadd.f32 %v1924, %v1903
      %v1941 = vadd.f32 %v1925, %v1906
      %v1942 = vadd.f32 %v1926, %v1909
      %1943 = vst.msk [vmem:[#allocation3] sm:$0xff] %vm639, %v1927
      %1944 = vst.msk [vmem:[#allocation3 + $0x8] sm:$0xff] %vm639, %v1928
      %1945 = vst.msk [vmem:[#allocation3 + $0x10] sm:$0xff] %vm639, %v1929
      %1946 = vst.msk [vmem:[#allocation3 + $0x18] sm:$0xff] %vm639, %v1930
      %1947 = vst.msk [vmem:[#allocation3 + $0x20] sm:$0xff] %vm639, %v1931
      %1948 = vst.msk [vmem:[#allocation3 + $0x28] sm:$0xff] %vm639, %v1932
      %1949 = vst.msk [vmem:[#allocation3 + $0x30] sm:$0xff] %vm639, %v1933
      %1950 = vst.msk [vmem:[#allocation3 + $0x38] sm:$0xff] %vm639, %v1934
      %1951 = vst.msk [vmem:[#allocation3 + $0x40] sm:$0xff] %vm639, %v1935
      %1952 = vst.msk [vmem:[#allocation3 + $0x48] sm:$0xff] %vm639, %v1936
      %1953 = vst.msk [vmem:[#allocation3 + $0x50] sm:$0xff] %vm639, %v1937
      %1954 = vst.msk [vmem:[#allocation3 + $0x58] sm:$0xff] %vm639, %v1938
      %1955 = vst.msk [vmem:[#allocation3 + $0x60] sm:$0xff] %vm639, %v1939
      %1956 = vst.msk [vmem:[#allocation3 + $0x68] sm:$0xff] %vm639, %v1940
      %1957 = vst.msk [vmem:[#allocation3 + $0x70] sm:$0xff] %vm639, %v1941
      %1958 = vst.msk [vmem:[#allocation3 + $0x78] sm:$0xff] %vm639, %v1942
      %v1959 = vld [vmem:[#allocation3] sm:$0xff]
      %v1960 = vld [vmem:[#allocation3 + $0x8] sm:$0xff]
      %v1961 = vld [vmem:[#allocation3 + $0x10] sm:$0xff]
      %v1962 = vld [vmem:[#allocation3 + $0x18] sm:$0xff]
      %v1963 = vld [vmem:[#allocation3 + $0x20] sm:$0xff]
      %v1964 = vld [vmem:[#allocation3 + $0x28] sm:$0xff]
      %v1965 = vld [vmem:[#allocation3 + $0x30] sm:$0xff]
      %v1966 = vld [vmem:[#allocation3 + $0x38] sm:$0xff]
      %v1967 = vld [vmem:[#allocation3 + $0x40] sm:$0xff]
      %v1968 = vld [vmem:[#allocation3 + $0x48] sm:$0xff]
      %v1969 = vld [vmem:[#allocation3 + $0x50] sm:$0xff]
      %v1970 = vld [vmem:[#allocation3 + $0x58] sm:$0xff]
      %v1971 = vld [vmem:[#allocation3 + $0x60] sm:$0xff]
      %v1972 = vld [vmem:[#allocation3 + $0x68] sm:$0xff]
      %v1973 = vld [vmem:[#allocation3 + $0x70] sm:$0xff]
      %v1974 = vld [vmem:[#allocation3 + $0x78] sm:$0xff]
      %v1975 = vld [vmem:[%s6] sm:$0x1]
      %v1977 = vperm.slane %v1975, 0
      %v1979 = vadd.f32 %v1959, %v1977
      %v1980 = vadd.f32 %v1960, %v1977
      %v1981 = vadd.f32 %v1961, %v1977
      %v1982 = vadd.f32 %v1962, %v1977
      %v1983 = vadd.f32 %v1963, %v1977
      %v1984 = vadd.f32 %v1964, %v1977
      %v1985 = vadd.f32 %v1965, %v1977
      %v1986 = vadd.f32 %v1966, %v1977
      %v1987 = vadd.f32 %v1967, %v1977
      %v1988 = vadd.f32 %v1968, %v1977
      %v1989 = vadd.f32 %v1969, %v1977
      %v1990 = vadd.f32 %v1970, %v1977
      %v1991 = vadd.f32 %v1971, %v1977
      %v1992 = vadd.f32 %v1972, %v1977
      %v1993 = vadd.f32 %v1973, %v1977
      %v1994 = vadd.f32 %v1974, %v1977
      %1995 = vst.msk [vmem:[%s522] sm:$0xff] %vm639, %v1979
      %1996 = vst.msk [vmem:[%s522 + $0x8] sm:$0xff] %vm639, %v1980
      %1997 = vst.msk [vmem:[%s522 + $0x10] sm:$0xff] %vm639, %v1981
      %1998 = vst.msk [vmem:[%s522 + $0x18] sm:$0xff] %vm639, %v1982
      %1999 = vst.msk [vmem:[%s522 + $0x20] sm:$0xff] %vm639, %v1983
      %2000 = vst.msk [vmem:[%s522 + $0x28] sm:$0xff] %vm639, %v1984
      %2001 = vst.msk [vmem:[%s522 + $0x30] sm:$0xff] %vm639, %v1985
      %2002 = vst.msk [vmem:[%s522 + $0x38] sm:$0xff] %vm639, %v1986
      %2003 = vst.msk [vmem:[%s522 + $0x40] sm:$0xff] %vm639, %v1987
      %2004 = vst.msk [vmem:[%s522 + $0x48] sm:$0xff] %vm639, %v1988
      %2005 = vst.msk [vmem:[%s522 + $0x50] sm:$0xff] %vm639, %v1989
      %2006 = vst.msk [vmem:[%s522 + $0x58] sm:$0xff] %vm639, %v1990
      %2007 = vst.msk [vmem:[%s522 + $0x60] sm:$0xff] %vm639, %v1991
      %2008 = vst.msk [vmem:[%s522 + $0x68] sm:$0xff] %vm639, %v1992
      %2009 = vst.msk [vmem:[%s522 + $0x70] sm:$0xff] %vm639, %v1993
      %2010 = vst.msk [vmem:[%s522 + $0x78] sm:$0xff] %vm639, %v1994
      %v2011 = vsel %vm639, %v1979, 0.0
      %v2012 = vsel %vm639, %v1980, 0.0
      %v2013 = vadd.f32 %v2011, %v2012
      %v2014 = vsel %vm639, %v1981, 0.0
      %v2015 = vadd.f32 %v2013, %v2014
      %v2016 = vsel %vm639, %v1982, 0.0
      %v2017 = vadd.f32 %v2015, %v2016
      %v2018 = vsel %vm639, %v1983, 0.0
      %v2019 = vadd.f32 %v2017, %v2018
      %v2020 = vsel %vm639, %v1984, 0.0
      %v2021 = vadd.f32 %v2019, %v2020
      %v2022 = vsel %vm639, %v1985, 0.0
      %v2023 = vadd.f32 %v2021, %v2022
      %v2024 = vsel %vm639, %v1986, 0.0
      %v2025 = vadd.f32 %v2023, %v2024
      %v2026 = vsel %vm639, %v1987, 0.0
      %v2027 = vadd.f32 %v2025, %v2026
      %v2028 = vsel %vm639, %v1988, 0.0
      %v2029 = vadd.f32 %v2027, %v2028
      %v2030 = vsel %vm639, %v1989, 0.0
      %v2031 = vadd.f32 %v2029, %v2030
      %v2032 = vsel %vm639, %v1990, 0.0
      %v2033 = vadd.f32 %v2031, %v2032
      %v2034 = vsel %vm639, %v1991, 0.0
      %v2035 = vadd.f32 %v2033, %v2034
      %v2036 = vsel %vm639, %v1992, 0.0
      %v2037 = vadd.f32 %v2035, %v2036
      %v2038 = vsel %vm639, %v1993, 0.0
      %v2039 = vadd.f32 %v2037, %v2038
      %v2040 = vsel %vm639, %v1994, 0.0
      %v2041 = vadd.f32 %v2039, %v2040
      %v2042 = vrot.slane %v2041, 4
      %v2043 = vadd.f32 %v2041, %v2042
      %v2044 = vrot.slane %v2043, 2
      %v2045 = vadd.f32 %v2043, %v2044
      %v2046 = vrot.slane %v2045, 1
      %v2047 = vadd.f32 %v2045, %v2046
      %2048 = vst.msk [vmem:[%s530] sm:$0x1] %vm661, %v2047
      %v2049 = vmul.f32 %v1979, %v1979
      %v2050 = vmul.f32 %v1980, %v1980
      %v2051 = vmul.f32 %v1981, %v1981
      %v2052 = vmul.f32 %v1982, %v1982
      %v2053 = vmul.f32 %v1983, %v1983
      %v2054 = vmul.f32 %v1984, %v1984
      %v2055 = vmul.f32 %v1985, %v1985
      %v2056 = vmul.f32 %v1986, %v1986
      %v2057 = vmul.f32 %v1987, %v1987
      %v2058 = vmul.f32 %v1988, %v1988
      %v2059 = vmul.f32 %v1989, %v1989
      %v2060 = vmul.f32 %v1990, %v1990
      %v2061 = vmul.f32 %v1991, %v1991
      %v2062 = vmul.f32 %v1992, %v1992
      %v2063 = vmul.f32 %v1993, %v1993
      %v2064 = vmul.f32 %v1994, %v1994
      %v2065 = vsel %vm639, %v2049, 0.0
      %v2066 = vsel %vm639, %v2050, 0.0
      %v2067 = vadd.f32 %v2065, %v2066
      %v2068 = vsel %vm639, %v2051, 0.0
      %v2069 = vadd.f32 %v2067, %v2068
      %v2070 = vsel %vm639, %v2052, 0.0
      %v2071 = vadd.f32 %v2069, %v2070
      %v2072 = vsel %vm639, %v2053, 0.0
      %v2073 = vadd.f32 %v2071, %v2072
      %v2074 = vsel %vm639, %v2054, 0.0
      %v2075 = vadd.f32 %v2073, %v2074
      %v2076 = vsel %vm639, %v2055, 0.0
      %v2077 = vadd.f32 %v2075, %v2076
      %v2078 = vsel %vm639, %v2056, 0.0
      %v2079 = vadd.f32 %v2077, %v2078
      %v2080 = vsel %vm639, %v2057, 0.0
      %v2081 = vadd.f32 %v2079, %v2080
      %v2082 = vsel %vm639, %v2058, 0.0
      %v2083 = vadd.f32 %v2081, %v2082
      %v2084 = vsel %vm639, %v2059, 0.0
      %v2085 = vadd.f32 %v2083, %v2084
      %v2086 = vsel %vm639, %v2060, 0.0
      %v2087 = vadd.f32 %v2085, %v2086
      %v2088 = vsel %vm639, %v2061, 0.0
      %v2089 = vadd.f32 %v2087, %v2088
      %v2090 = vsel %vm639, %v2062, 0.0
      %v2091 = vadd.f32 %v2089, %v2090
      %v2092 = vsel %vm639, %v2063, 0.0
      %v2093 = vadd.f32 %v2091, %v2092
      %v2094 = vsel %vm639, %v2064, 0.0
      %v2095 = vadd.f32 %v2093, %v2094
      %v2096 = vrot.slane %v2095, 4
      %v2097 = vadd.f32 %v2095, %v2096
      %v2098 = vrot.slane %v2097, 2
      %v2099 = vadd.f32 %v2097, %v2098
      %v2100 = vrot.slane %v2099, 1
      %v2101 = vadd.f32 %v2099, %v2100
      %2102 = vst.msk [vmem:[%s537] sm:$0x1] %vm661, %v2101
      %s2103 = smul.u32 8, %s26
      %p2104 = scmp.lt.s32.totalorder %s25, 1
      %s2105 = scalar_select %p2104, %s25, 1
      %p2106 = scmp.lt.s32.totalorder %s2103, 15
      %s2107 = scalar_select %p2106, %s2103, 15
      %s2108 = smul.addr %s2107, 2
      %s2109 = smul.addr %s2105, 32
      %s2110 = sadd.s32 %s2108, %s2109
      %s2111 = smul.addr %s2110, 8
      %s2112 = scalar_lea.vmem %s7, %s2111
      %p2113 = scmp.lt.s32.totalorder %s25, 1
      %s2114 = scalar_select %p2113, %s25, 1
      %p2115 = scmp.lt.s32.totalorder %s26, 1
      %s2116 = scalar_select %p2115, %s26, 1
      %s2117 = smul.addr %s2114, 2
      %s2118 = sadd.s32 %s2116, %s2117
      %s2119 = scalar_lea.vmem %s8, %s2118
      %p2120 = scmp.lt.s32.totalorder %s25, 1
      %s2121 = scalar_select %p2120, %s25, 1
      %p2122 = scmp.lt.s32.totalorder %s26, 1
      %s2123 = scalar_select %p2122, %s26, 1
      %s2124 = smul.addr %s2121, 2
      %s2125 = sadd.s32 %s2123, %s2124
      %s2126 = scalar_lea.vmem %s9, %s2125
      // Predicated region
      $region49: #{bottleneck_forward.6} parent=47 // pred_check
        %p2127 = pneg %p237
      $region50: #{bottleneck_forward.6} parent=47 // pred_check_branch
        %2129 = sbr.rel (%p2127) target = $region52
      $region51: #{bottleneck_forward.6} parent=47 // pred_region
        %s2130 = smul.u32 8, %s26
      $region52: #{bottleneck_forward.6} parent=47 // pred_fallthru
        _
      // Predicated region
      $region53: #{bottleneck_forward.6} parent=47 // pred_check
        %p2131 = pneg %p265
      $region54: #{bottleneck_forward.6} parent=47 // pred_check_branch
        %2133 = sbr.rel (%p2131) target = $region56
      $region55: #{bottleneck_forward.6} parent=47 // pred_region
        _
      $region56: #{bottleneck_forward.6} parent=47 // pred_fallthru
        _
      // Predicated region
      $region57: #{bottleneck_forward.6} parent=47 // pred_check
        %p2134 = pneg %p293
      $region58: #{bottleneck_forward.6} parent=47 // pred_check_branch
        %2136 = sbr.rel (%p2134) target = $region60
      $region59: #{bottleneck_forward.6} parent=47 // pred_region
        _
      $region60: #{bottleneck_forward.6} parent=47 // pred_fallthru
        _
    $region48: #{bottleneck_forward.6} parent=5 // pred_fallthru
      _
    %p2137 = scmp.le.s32.totalorder 2, %s16
    // Predicated region
    $region61: #{bottleneck_forward.6} parent=5 // pred_check
      %p2138 = pneg %p2137
    $region62: #{bottleneck_forward.6} parent=5 // pred_check_branch
      %2140 = sbr.rel (%p2138) target = $region64
    $region63: #{bottleneck_forward.6} parent=5 // pred_region
      %s2141 = ssub.s32 %s16, 2
      // Predicated region
      $region65: #{bottleneck_forward.6} parent=63 // pred_check
        %p2142 = pneg %p243
      $region66: #{bottleneck_forward.6} parent=63 // pred_check_branch
        %2144 = sbr.rel (%p2142) target = $region68
      $region67: #{bottleneck_forward.6} parent=63 // pred_region
        %s2145 = smul.u32 8, %s28
        %p2146 = scmp.lt.s32.totalorder %s27, 1
        %s2147 = scalar_select %p2146, %s27, 1
        %p2148 = scmp.lt.s32.totalorder %s2145, 15
        %s2149 = scalar_select %p2148, %s2145, 15
        %s2150 = smul.addr %s2149, 2
        %s2151 = smul.addr %s2147, 32
        %s2152 = sadd.s32 %s2150, %s2151
        %s2153 = smul.addr %s2152, 8
        %s2154 = scalar_lea.vmem %s7, %s2153
      $region68: #{bottleneck_forward.6} parent=63 // pred_fallthru
        _
      // Predicated region
      $region69: #{bottleneck_forward.6} parent=63 // pred_check
        %p2155 = pneg %p271
      $region70: #{bottleneck_forward.6} parent=63 // pred_check_branch
        %2157 = sbr.rel (%p2155) target = $region72
      $region71: #{bottleneck_forward.6} parent=63 // pred_region
        %p2158 = scmp.lt.s32.totalorder %s27, 1
        %s2159 = scalar_select %p2158, %s27, 1
        %p2160 = scmp.lt.s32.totalorder %s28, 1
        %s2161 = scalar_select %p2160, %s28, 1
        %s2162 = smul.addr %s2159, 2
        %s2163 = sadd.s32 %s2161, %s2162
        %s2164 = scalar_lea.vmem %s8, %s2163
      $region72: #{bottleneck_forward.6} parent=63 // pred_fallthru
        _
      // Predicated region
      $region73: #{bottleneck_forward.6} parent=63 // pred_check
        %p2165 = pneg %p299
      $region74: #{bottleneck_forward.6} parent=63 // pred_check_branch
        %2167 = sbr.rel (%p2165) target = $region76
      $region75: #{bottleneck_forward.6} parent=63 // pred_region
        %p2168 = scmp.lt.s32.totalorder %s27, 1
        %s2169 = scalar_select %p2168, %s27, 1
        %p2170 = scmp.lt.s32.totalorder %s28, 1
        %s2171 = scalar_select %p2170, %s28, 1
        %s2172 = smul.addr %s2169, 2
        %s2173 = sadd.s32 %s2171, %s2172
        %s2174 = scalar_lea.vmem %s9, %s2173
      $region76: #{bottleneck_forward.6} parent=63 // pred_fallthru
        _
    $region64: #{bottleneck_forward.6} parent=5 // pred_fallthru
      _
  $region6: #{bottleneck_forward.6} parent=0 // loop_footer
    %s20 = sadd.s32 1, %s16
  $region7: #{bottleneck_forward.6} parent=0 // loop_footer_branch
    %15 = sbr.rel target = $region3
  $region8: #{bottleneck_forward.6} parent=0 // loop_exit
    _

</llo_original>
